<compile_context>
chip_gen: v7x
topology: tpu7x:2x2x1
jax: 0.10.0
libtpu: 0.0.40
codegen_flags: <defaults>
</compile_context>

<pallas_src>
import functools

import jax
import jax.numpy as jnp
from jax.experimental import pallas as pl
from jax.experimental.pallas import tpu as pltpu

B, C, H, W = 2, 16, 16, 16
RATIO = 8
CR = C // RATIO
K = 7
PAD = 3


# ------------------------------------------------------------------ kernel
def _cbam_kernel(x_ref, w1_ref, w2b_ref, b1_ref, wc_ref, bc_ref, out_ref,
                 shift_ref, *, h, w, k, pad):
    """One batch per grid step.  x_ref block: (1, C, H*W), lane-dense."""
    cr = w1_ref.shape[1]
    xb = x_ref[0]                                            # (C, HW)

    # ---- channel attention: spatial avg/max pools (lane reduces) ----------
    avg = jnp.mean(xb, axis=1, keepdims=True)                # (C, 1)
    mx = jnp.max(xb, axis=1, keepdims=True)                  # (C, 1)
    pools = jnp.concatenate([avg, mx], axis=1)               # (C, 2)

    # Shared 2-layer MLP on the VPU; avg & max columns processed together.
    hs = []
    for j in range(cr):                                      # layer 1: C -> C/r
        hj = jnp.sum(pools * w1_ref[:, j:j + 1], axis=0, keepdims=True) + b1_ref[j]
        hs.append(jnp.maximum(hj, 0.0))                      # (1, 2)
    fc = w2b_ref[:, cr:cr + 1] + hs[0] * w2b_ref[:, 0:1]     # layer 2 (+ bias col)
    for j in range(1, cr):
        fc = fc + hs[j] * w2b_ref[:, j:j + 1]                # (C, 2)
    ca = jax.nn.sigmoid(fc[:, 0:1] + fc[:, 1:2])             # (C, 1) channel gate

    xca = xb * ca                                            # (C, HW) gated input

    # ---- spatial attention -------------------------------------------------
    sp_avg = jnp.mean(xca, axis=0, keepdims=True)            # (1, HW)
    sp_max = jnp.max(xca, axis=0, keepdims=True)             # (1, HW)

    def to2d(row):                                           # (1, HW) -> (H, W)
        return jnp.concatenate(
            [row[:, i * w:(i + 1) * w] for i in range(h)], axis=0)

    def reflect_pad(m):                                      # (H, W) -> (H+2p, W+2p)
        left = jnp.concatenate([m[:, p:p + 1] for p in range(pad, 0, -1)], axis=1)
        right = jnp.concatenate([m[:, w - 2 - j:w - 1 - j] for j in range(pad)], axis=1)
        mwide = jnp.concatenate([left, m, right], axis=1)    # (H, W+2p)
        top = jnp.concatenate([mwide[p:p + 1, :] for p in range(pad, 0, -1)], axis=0)
        bot = jnp.concatenate([mwide[h - 2 - j:h - 1 - j, :] for j in range(pad)], axis=0)
        return jnp.concatenate([top, mwide, bot], axis=0)    # (H+2p, W+2p)

    maps = (reflect_pad(to2d(sp_avg)), reflect_pad(to2d(sp_max)))

    # Hoist the lane (dw) shifts out of the MAC loop: 2*K lane shifts total.
    for ci in range(2):
        for dw in range(k):
            shift_ref[ci, dw] = maps[ci][:, dw:dw + w]       # (H+2p, W)

    # 7x7x2 conv: 98 scalar(SMEM) * vector MACs using sublane-offset loads only.
    acc = jnp.full((h, w), bc_ref[0], jnp.float32)
    for ci in range(2):
        for dh in range(k):
            for dw in range(k):
                wv = wc_ref[ci * k * k + dh * k + dw]
                acc = acc + wv * shift_ref[ci, dw, dh:dh + h, :]
    att = jax.nn.sigmoid(acc)                                # (H, W)

    # Back to the lane-dense flat layout; one dense (C, HW) store.
    att_flat = jnp.concatenate([att[i:i + 1, :] for i in range(h)], axis=1)  # (1, HW)
    out_ref[0] = xca * att_flat


# ------------------------------------------------------------------ wrapper
def cbam_forward(x, params):
    """params in PyTorch layouts: w1 (C/r, C), b1 (C/r,), w2 (C, C/r), b2 (C,),
    wc (2*K*K,) flattened OIHW conv weight, bc (1,)."""
    w1, b1, w2, b2, wc, bc = params
    Bn, Cn, Hn, Wn = x.shape
    cr = w1.shape[0]
    hw = Hn * Wn

    x_flat = x.reshape(Bn, Cn, hw)                          # free, lane-dense view
    w1col = w1.T                                            # (C, C/r)
    w2b = jnp.concatenate([w2, b2[:, None]], axis=1)        # (C, C/r + 1), bias folded

    kernel = functools.partial(_cbam_kernel, h=Hn, w=Wn, k=K, pad=PAD)

    out_flat = pl.pallas_call(
        kernel,
        out_shape=jax.ShapeDtypeStruct((Bn, Cn, hw), jnp.float32),
        grid=(Bn,),
        in_specs=[
            pl.BlockSpec((1, Cn, hw), lambda b: (b, 0, 0)),
            pl.BlockSpec((Cn, cr), lambda b: (0, 0)),
            pl.BlockSpec((Cn, cr + 1), lambda b: (0, 0)),
            pl.BlockSpec(memory_space=pltpu.MemorySpace.SMEM),   # b1
            pl.BlockSpec(memory_space=pltpu.MemorySpace.SMEM),   # conv weights
            pl.BlockSpec(memory_space=pltpu.MemorySpace.SMEM),   # conv bias
        ],
        out_specs=pl.BlockSpec((1, Cn, hw), lambda b: (b, 0, 0)),
        scratch_shapes=[pltpu.VMEM((2, K, Hn + 2 * PAD, Wn), jnp.float32)],
        compiler_params=pltpu.CompilerParams(
            dimension_semantics=("parallel",)),
    )(x_flat, w1col, w2b, b1, wc, bc)
    return out_flat.reshape(Bn, Cn, Hn, Wn)


# ------------------------------------------------------------------ reference
def cbam_reference(x, params):
    w1, b1, w2, b2, wc, bc = params
    avg = jnp.mean(x, axis=(2, 3))
    mx = jnp.max(x, axis=(2, 3))

    def mlp(v):
        return jax.nn.relu(v @ w1.T + b1) @ w2.T + b2

    ca = jax.nn.sigmoid(mlp(avg) + mlp(mx))[:, :, None, None]
    xca = x * ca
    sp = jnp.concatenate([jnp.mean(xca, axis=1, keepdims=True),
                          jnp.max(xca, axis=1, keepdims=True)], axis=1)
    sp_p = jnp.pad(sp, ((0, 0), (0, 0), (PAD, PAD), (PAD, PAD)), mode="reflect")
    conv = jax.lax.conv_general_dilated(
        sp_p, wc.reshape(1, 2, K, K), (1, 1), "VALID",
        dimension_numbers=("NCHW", "OIHW", "NCHW")) + bc[0]
    return xca * jax.nn.sigmoid(conv)


if __name__ == "__main__":
    key = jax.random.PRNGKey(0)
    ks = jax.random.split(key, 7)
    x = jax.random.normal(ks[0], (B, C, H, W), jnp.float32)

    # Deterministic synthetic parameters (PyTorch layouts).
    w1 = 0.3 * jax.random.normal(ks[1], (CR, C), jnp.float32)       # shared_dense_one.weight
    b1 = 0.1 * jax.random.normal(ks[2], (CR,), jnp.float32)         # shared_dense_one.bias
    w2 = 0.3 * jax.random.normal(ks[3], (C, CR), jnp.float32)       # shared_dense_two.weight
    b2 = 0.1 * jax.random.normal(ks[4], (C,), jnp.float32)          # shared_dense_two.bias
    wc = 0.1 * jax.random.normal(ks[5], (2 * K * K,), jnp.float32)  # conv.weight (1,2,7,7) flat
    bc = 0.1 * jax.random.normal(ks[6], (1,), jnp.float32)          # conv.bias
    params = (w1, b1, w2, b2, wc, bc)

    out = jax.block_until_ready(cbam_forward(x, params))
    ref = jax.block_until_ready(cbam_reference(x, params))

    assert out.shape == (B, C, H, W)
    assert jnp.allclose(out, ref, atol=1e-3, rtol=1e-3), "mismatch vs JAX reference"
    print("KERNEL_OK")
</pallas_src>

<mosaic_0001>
module attributes {stable_mosaic.version = 11 : i64} {
  func.func @_cbam_kernel(%arg0: i32, %arg1: memref<1x16x256xf32, #tpu.memory_space<vmem>>, %arg2: memref<16x2xf32, #tpu.memory_space<vmem>>, %arg3: memref<16x3xf32, #tpu.memory_space<vmem>>, %arg4: memref<2xf32, #tpu.memory_space<smem>>, %arg5: memref<98xf32, #tpu.memory_space<smem>>, %arg6: memref<1xf32, #tpu.memory_space<smem>>, %arg7: memref<1x16x256xf32, #tpu.memory_space<vmem>>, %arg8: memref<2x7x22x16xf32, #tpu.memory_space<vmem>>) attributes {dimension_semantics = [#tpu.dimension_semantics<parallel>], iteration_bounds = array<i64: 2>, scalar_prefetch = 0 : i64, scratch_operands = 1 : i64, tpu.core_type = #tpu.core_type<tc>, window_params = [{transform_indices = @transform_0, window_bounds = array<i64: 1, 16, 256>}, {pipeline_mode = #tpu.pipeline_mode<synchronous>, transform_indices = @transform_1, window_bounds = array<i64: 16, 2>}, {pipeline_mode = #tpu.pipeline_mode<synchronous>, transform_indices = @transform_2, window_bounds = array<i64: 16, 3>}, {transform_indices = @transform_3, window_bounds = array<i64: 2>}, {transform_indices = @transform_4, window_bounds = array<i64: 98>}, {transform_indices = @transform_5, window_bounds = array<i64: 1>}, {transform_indices = @transform_6, window_bounds = array<i64: 1, 16, 256>}]} {
    %c0 = arith.constant 0 : index
    %c0_0 = arith.constant 0 : index
    %c0_1 = arith.constant 0 : index
    %0 = vector.load %arg1[%c0, %c0_0, %c0_1] : memref<1x16x256xf32, #tpu.memory_space<vmem>>, vector<1x16x256xf32>
    %1 = vector.shape_cast %0 : vector<1x16x256xf32> to vector<16x256xf32>
    %cst = arith.constant dense<0.000000e+00> : vector<16xf32>
    %2 = vector.multi_reduction <add>, %1, %cst [1] : vector<16x256xf32> to vector<16xf32>
    %3 = vector.shape_cast %2 : vector<16xf32> to vector<16x1xf32>
    %cst_2 = arith.constant 2.560000e+02 : f32
    %4 = vector.broadcast %cst_2 : f32 to vector<16x1xf32>
    %5 = arith.divf %3, %4 : vector<16x1xf32>
    %cst_3 = arith.constant dense<0xFF800000> : vector<16xf32>
    %6 = vector.multi_reduction <maximumf>, %1, %cst_3 [1] : vector<16x256xf32> to vector<16xf32>
    %7 = vector.shape_cast %6 : vector<16xf32> to vector<16x1xf32>
    %8 = tpu.concatenate %5, %7 in 1 : vector<16x1xf32>, vector<16x1xf32> -> vector<16x2xf32>
    %c0_4 = arith.constant 0 : index
    %c0_5 = arith.constant 0 : index
    %9 = vector.load %arg2[%c0_4, %c0_5] : memref<16x2xf32, #tpu.memory_space<vmem>>, vector<16x1xf32>
    %10 = vector.broadcast %9 : vector<16x1xf32> to vector<16x2xf32>
    %11 = arith.mulf %8, %10 : vector<16x2xf32>
    %cst_6 = arith.constant dense<0.000000e+00> : vector<2xf32>
    %12 = vector.multi_reduction <add>, %11, %cst_6 [0] : vector<16x2xf32> to vector<2xf32>
    %13 = vector.shape_cast %12 : vector<2xf32> to vector<1x2xf32>
    %c0_7 = arith.constant 0 : index
    %14 = memref.load %arg4[%c0_7] : memref<2xf32, #tpu.memory_space<smem>>
    %15 = vector.broadcast %14 : f32 to vector<1x2xf32>
    %16 = arith.addf %13, %15 : vector<1x2xf32>
    %cst_8 = arith.constant 0.000000e+00 : f32
    %17 = vector.broadcast %cst_8 : f32 to vector<1x2xf32>
    %18 = arith.maximumf %16, %17 : vector<1x2xf32>
    %c0_9 = arith.constant 0 : index
    %c1 = arith.constant 1 : index
    %19 = vector.load %arg2[%c0_9, %c1] : memref<16x2xf32, #tpu.memory_space<vmem>>, vector<16x1xf32>
    %20 = vector.broadcast %19 : vector<16x1xf32> to vector<16x2xf32>
    %21 = arith.mulf %8, %20 : vector<16x2xf32>
    %cst_10 = arith.constant dense<0.000000e+00> : vector<2xf32>
    %22 = vector.multi_reduction <add>, %21, %cst_10 [0] : vector<16x2xf32> to vector<2xf32>
    %23 = vector.shape_cast %22 : vector<2xf32> to vector<1x2xf32>
    %c1_11 = arith.constant 1 : index
    %24 = memref.load %arg4[%c1_11] : memref<2xf32, #tpu.memory_space<smem>>
    %25 = vector.broadcast %24 : f32 to vector<1x2xf32>
    %26 = arith.addf %23, %25 : vector<1x2xf32>
    %cst_12 = arith.constant 0.000000e+00 : f32
    %27 = vector.broadcast %cst_12 : f32 to vector<1x2xf32>
    %28 = arith.maximumf %26, %27 : vector<1x2xf32>
    %c0_13 = arith.constant 0 : index
    %c2 = arith.constant 2 : index
    %29 = vector.load %arg3[%c0_13, %c2] : memref<16x3xf32, #tpu.memory_space<vmem>>, vector<16x1xf32>
    %c0_14 = arith.constant 0 : index
    %c0_15 = arith.constant 0 : index
    %30 = vector.load %arg3[%c0_14, %c0_15] : memref<16x3xf32, #tpu.memory_space<vmem>>, vector<16x1xf32>
    %31 = vector.broadcast %18 : vector<1x2xf32> to vector<16x2xf32>
    %32 = vector.broadcast %30 : vector<16x1xf32> to vector<16x2xf32>
    %33 = arith.mulf %31, %32 : vector<16x2xf32>
    %34 = vector.broadcast %29 : vector<16x1xf32> to vector<16x2xf32>
    %35 = arith.addf %34, %33 : vector<16x2xf32>
    %c0_16 = arith.constant 0 : index
    %c1_17 = arith.constant 1 : index
    %36 = vector.load %arg3[%c0_16, %c1_17] : memref<16x3xf32, #tpu.memory_space<vmem>>, vector<16x1xf32>
    %37 = vector.broadcast %28 : vector<1x2xf32> to vector<16x2xf32>
    %38 = vector.broadcast %36 : vector<16x1xf32> to vector<16x2xf32>
    %39 = arith.mulf %37, %38 : vector<16x2xf32>
    %40 = arith.addf %35, %39 : vector<16x2xf32>
    %41 = vector.extract_strided_slice %40 {offsets = [0, 0], sizes = [16, 1], strides = [1, 1]} : vector<16x2xf32> to vector<16x1xf32>
    %42 = vector.extract_strided_slice %40 {offsets = [0, 1], sizes = [16, 1], strides = [1, 1]} : vector<16x2xf32> to vector<16x1xf32>
    %43 = arith.addf %41, %42 : vector<16x1xf32>
    %44 = arith.negf %43 : vector<16x1xf32>
    %45 = math.exp %44 : vector<16x1xf32>
    %cst_18 = arith.constant 1.000000e+00 : f32
    %46 = vector.broadcast %cst_18 : f32 to vector<16x1xf32>
    %47 = arith.addf %46, %45 : vector<16x1xf32>
    %48 = arith.divf %46, %47 : vector<16x1xf32>
    %49 = vector.broadcast %48 : vector<16x1xf32> to vector<16x256xf32>
    %50 = arith.mulf %1, %49 : vector<16x256xf32>
    %cst_19 = arith.constant dense<0.000000e+00> : vector<256xf32>
    %51 = vector.multi_reduction <add>, %50, %cst_19 [0] : vector<16x256xf32> to vector<256xf32>
    %52 = vector.shape_cast %51 : vector<256xf32> to vector<1x256xf32>
    %cst_20 = arith.constant 1.600000e+01 : f32
    %53 = vector.broadcast %cst_20 : f32 to vector<1x256xf32>
    %54 = arith.divf %52, %53 : vector<1x256xf32>
    %cst_21 = arith.constant dense<0xFF800000> : vector<256xf32>
    %55 = vector.multi_reduction <maximumf>, %50, %cst_21 [0] : vector<16x256xf32> to vector<256xf32>
    %56 = vector.shape_cast %55 : vector<256xf32> to vector<1x256xf32>
    %57 = vector.extract_strided_slice %54 {offsets = [0, 0], sizes = [1, 16], strides = [1, 1]} : vector<1x256xf32> to vector<1x16xf32>
    %58 = vector.extract_strided_slice %54 {offsets = [0, 16], sizes = [1, 16], strides = [1, 1]} : vector<1x256xf32> to vector<1x16xf32>
    %59 = vector.extract_strided_slice %54 {offsets = [0, 32], sizes = [1, 16], strides = [1, 1]} : vector<1x256xf32> to vector<1x16xf32>
    %60 = vector.extract_strided_slice %54 {offsets = [0, 48], sizes = [1, 16], strides = [1, 1]} : vector<1x256xf32> to vector<1x16xf32>
    %61 = vector.extract_strided_slice %54 {offsets = [0, 64], sizes = [1, 16], strides = [1, 1]} : vector<1x256xf32> to vector<1x16xf32>
    %62 = vector.extract_strided_slice %54 {offsets = [0, 80], sizes = [1, 16], strides = [1, 1]} : vector<1x256xf32> to vector<1x16xf32>
    %63 = vector.extract_strided_slice %54 {offsets = [0, 96], sizes = [1, 16], strides = [1, 1]} : vector<1x256xf32> to vector<1x16xf32>
    %64 = vector.extract_strided_slice %54 {offsets = [0, 112], sizes = [1, 16], strides = [1, 1]} : vector<1x256xf32> to vector<1x16xf32>
    %65 = vector.extract_strided_slice %54 {offsets = [0, 128], sizes = [1, 16], strides = [1, 1]} : vector<1x256xf32> to vector<1x16xf32>
    %66 = vector.extract_strided_slice %54 {offsets = [0, 144], sizes = [1, 16], strides = [1, 1]} : vector<1x256xf32> to vector<1x16xf32>
    %67 = vector.extract_strided_slice %54 {offsets = [0, 160], sizes = [1, 16], strides = [1, 1]} : vector<1x256xf32> to vector<1x16xf32>
    %68 = vector.extract_strided_slice %54 {offsets = [0, 176], sizes = [1, 16], strides = [1, 1]} : vector<1x256xf32> to vector<1x16xf32>
    %69 = vector.extract_strided_slice %54 {offsets = [0, 192], sizes = [1, 16], strides = [1, 1]} : vector<1x256xf32> to vector<1x16xf32>
    %70 = vector.extract_strided_slice %54 {offsets = [0, 208], sizes = [1, 16], strides = [1, 1]} : vector<1x256xf32> to vector<1x16xf32>
    %71 = vector.extract_strided_slice %54 {offsets = [0, 224], sizes = [1, 16], strides = [1, 1]} : vector<1x256xf32> to vector<1x16xf32>
    %72 = vector.extract_strided_slice %54 {offsets = [0, 240], sizes = [1, 16], strides = [1, 1]} : vector<1x256xf32> to vector<1x16xf32>
    %73 = tpu.concatenate %57, %58, %59, %60, %61, %62, %63, %64, %65, %66, %67, %68, %69, %70, %71, %72 in 0 : vector<1x16xf32>, vector<1x16xf32>, vector<1x16xf32>, vector<1x16xf32>, vector<1x16xf32>, vector<1x16xf32>, vector<1x16xf32>, vector<1x16xf32>, vector<1x16xf32>, vector<1x16xf32>, vector<1x16xf32>, vector<1x16xf32>, vector<1x16xf32>, vector<1x16xf32>, vector<1x16xf32>, vector<1x16xf32> -> vector<16x16xf32>
    %74 = vector.extract_strided_slice %73 {offsets = [0, 3], sizes = [16, 1], strides = [1, 1]} : vector<16x16xf32> to vector<16x1xf32>
    %75 = vector.extract_strided_slice %73 {offsets = [0, 2], sizes = [16, 1], strides = [1, 1]} : vector<16x16xf32> to vector<16x1xf32>
    %76 = vector.extract_strided_slice %73 {offsets = [0, 1], sizes = [16, 1], strides = [1, 1]} : vector<16x16xf32> to vector<16x1xf32>
    %77 = tpu.concatenate %74, %75, %76 in 1 : vector<16x1xf32>, vector<16x1xf32>, vector<16x1xf32> -> vector<16x3xf32>
    %78 = vector.extract_strided_slice %73 {offsets = [0, 14], sizes = [16, 1], strides = [1, 1]} : vector<16x16xf32> to vector<16x1xf32>
    %79 = vector.extract_strided_slice %73 {offsets = [0, 13], sizes = [16, 1], strides = [1, 1]} : vector<16x16xf32> to vector<16x1xf32>
    %80 = vector.extract_strided_slice %73 {offsets = [0, 12], sizes = [16, 1], strides = [1, 1]} : vector<16x16xf32> to vector<16x1xf32>
    %81 = tpu.concatenate %78, %79, %80 in 1 : vector<16x1xf32>, vector<16x1xf32>, vector<16x1xf32> -> vector<16x3xf32>
    %82 = tpu.concatenate %77, %73, %81 in 1 : vector<16x3xf32>, vector<16x16xf32>, vector<16x3xf32> -> vector<16x22xf32>
    %83 = vector.extract_strided_slice %82 {offsets = [3, 0], sizes = [1, 22], strides = [1, 1]} : vector<16x22xf32> to vector<1x22xf32>
    %84 = vector.extract_strided_slice %82 {offsets = [2, 0], sizes = [1, 22], strides = [1, 1]} : vector<16x22xf32> to vector<1x22xf32>
    %85 = vector.extract_strided_slice %82 {offsets = [1, 0], sizes = [1, 22], strides = [1, 1]} : vector<16x22xf32> to vector<1x22xf32>
    %86 = tpu.concatenate %83, %84, %85 in 0 : vector<1x22xf32>, vector<1x22xf32>, vector<1x22xf32> -> vector<3x22xf32>
    %87 = vector.extract_strided_slice %82 {offsets = [14, 0], sizes = [1, 22], strides = [1, 1]} : vector<16x22xf32> to vector<1x22xf32>
    %88 = vector.extract_strided_slice %82 {offsets = [13, 0], sizes = [1, 22], strides = [1, 1]} : vector<16x22xf32> to vector<1x22xf32>
    %89 = vector.extract_strided_slice %82 {offsets = [12, 0], sizes = [1, 22], strides = [1, 1]} : vector<16x22xf32> to vector<1x22xf32>
    %90 = tpu.concatenate %87, %88, %89 in 0 : vector<1x22xf32>, vector<1x22xf32>, vector<1x22xf32> -> vector<3x22xf32>
    %91 = tpu.concatenate %86, %82, %90 in 0 : vector<3x22xf32>, vector<16x22xf32>, vector<3x22xf32> -> vector<22x22xf32>
    %92 = vector.extract_strided_slice %56 {offsets = [0, 0], sizes = [1, 16], strides = [1, 1]} : vector<1x256xf32> to vector<1x16xf32>
    %93 = vector.extract_strided_slice %56 {offsets = [0, 16], sizes = [1, 16], strides = [1, 1]} : vector<1x256xf32> to vector<1x16xf32>
    %94 = vector.extract_strided_slice %56 {offsets = [0, 32], sizes = [1, 16], strides = [1, 1]} : vector<1x256xf32> to vector<1x16xf32>
    %95 = vector.extract_strided_slice %56 {offsets = [0, 48], sizes = [1, 16], strides = [1, 1]} : vector<1x256xf32> to vector<1x16xf32>
    %96 = vector.extract_strided_slice %56 {offsets = [0, 64], sizes = [1, 16], strides = [1, 1]} : vector<1x256xf32> to vector<1x16xf32>
    %97 = vector.extract_strided_slice %56 {offsets = [0, 80], sizes = [1, 16], strides = [1, 1]} : vector<1x256xf32> to vector<1x16xf32>
    %98 = vector.extract_strided_slice %56 {offsets = [0, 96], sizes = [1, 16], strides = [1, 1]} : vector<1x256xf32> to vector<1x16xf32>
    %99 = vector.extract_strided_slice %56 {offsets = [0, 112], sizes = [1, 16], strides = [1, 1]} : vector<1x256xf32> to vector<1x16xf32>
    %100 = vector.extract_strided_slice %56 {offsets = [0, 128], sizes = [1, 16], strides = [1, 1]} : vector<1x256xf32> to vector<1x16xf32>
    %101 = vector.extract_strided_slice %56 {offsets = [0, 144], sizes = [1, 16], strides = [1, 1]} : vector<1x256xf32> to vector<1x16xf32>
    %102 = vector.extract_strided_slice %56 {offsets = [0, 160], sizes = [1, 16], strides = [1, 1]} : vector<1x256xf32> to vector<1x16xf32>
    %103 = vector.extract_strided_slice %56 {offsets = [0, 176], sizes = [1, 16], strides = [1, 1]} : vector<1x256xf32> to vector<1x16xf32>
    %104 = vector.extract_strided_slice %56 {offsets = [0, 192], sizes = [1, 16], strides = [1, 1]} : vector<1x256xf32> to vector<1x16xf32>
    %105 = vector.extract_strided_slice %56 {offsets = [0, 208], sizes = [1, 16], strides = [1, 1]} : vector<1x256xf32> to vector<1x16xf32>
    %106 = vector.extract_strided_slice %56 {offsets = [0, 224], sizes = [1, 16], strides = [1, 1]} : vector<1x256xf32> to vector<1x16xf32>
    %107 = vector.extract_strided_slice %56 {offsets = [0, 240], sizes = [1, 16], strides = [1, 1]} : vector<1x256xf32> to vector<1x16xf32>
    %108 = tpu.concatenate %92, %93, %94, %95, %96, %97, %98, %99, %100, %101, %102, %103, %104, %105, %106, %107 in 0 : vector<1x16xf32>, vector<1x16xf32>, vector<1x16xf32>, vector<1x16xf32>, vector<1x16xf32>, vector<1x16xf32>, vector<1x16xf32>, vector<1x16xf32>, vector<1x16xf32>, vector<1x16xf32>, vector<1x16xf32>, vector<1x16xf32>, vector<1x16xf32>, vector<1x16xf32>, vector<1x16xf32>, vector<1x16xf32> -> vector<16x16xf32>
    %109 = vector.extract_strided_slice %108 {offsets = [0, 3], sizes = [16, 1], strides = [1, 1]} : vector<16x16xf32> to vector<16x1xf32>
    %110 = vector.extract_strided_slice %108 {offsets = [0, 2], sizes = [16, 1], strides = [1, 1]} : vector<16x16xf32> to vector<16x1xf32>
    %111 = vector.extract_strided_slice %108 {offsets = [0, 1], sizes = [16, 1], strides = [1, 1]} : vector<16x16xf32> to vector<16x1xf32>
    %112 = tpu.concatenate %109, %110, %111 in 1 : vector<16x1xf32>, vector<16x1xf32>, vector<16x1xf32> -> vector<16x3xf32>
    %113 = vector.extract_strided_slice %108 {offsets = [0, 14], sizes = [16, 1], strides = [1, 1]} : vector<16x16xf32> to vector<16x1xf32>
    %114 = vector.extract_strided_slice %108 {offsets = [0, 13], sizes = [16, 1], strides = [1, 1]} : vector<16x16xf32> to vector<16x1xf32>
    %115 = vector.extract_strided_slice %108 {offsets = [0, 12], sizes = [16, 1], strides = [1, 1]} : vector<16x16xf32> to vector<16x1xf32>
    %116 = tpu.concatenate %113, %114, %115 in 1 : vector<16x1xf32>, vector<16x1xf32>, vector<16x1xf32> -> vector<16x3xf32>
    %117 = tpu.concatenate %112, %108, %116 in 1 : vector<16x3xf32>, vector<16x16xf32>, vector<16x3xf32> -> vector<16x22xf32>
    %118 = vector.extract_strided_slice %117 {offsets = [3, 0], sizes = [1, 22], strides = [1, 1]} : vector<16x22xf32> to vector<1x22xf32>
    %119 = vector.extract_strided_slice %117 {offsets = [2, 0], sizes = [1, 22], strides = [1, 1]} : vector<16x22xf32> to vector<1x22xf32>
    %120 = vector.extract_strided_slice %117 {offsets = [1, 0], sizes = [1, 22], strides = [1, 1]} : vector<16x22xf32> to vector<1x22xf32>
    %121 = tpu.concatenate %118, %119, %120 in 0 : vector<1x22xf32>, vector<1x22xf32>, vector<1x22xf32> -> vector<3x22xf32>
    %122 = vector.extract_strided_slice %117 {offsets = [14, 0], sizes = [1, 22], strides = [1, 1]} : vector<16x22xf32> to vector<1x22xf32>
    %123 = vector.extract_strided_slice %117 {offsets = [13, 0], sizes = [1, 22], strides = [1, 1]} : vector<16x22xf32> to vector<1x22xf32>
    %124 = vector.extract_strided_slice %117 {offsets = [12, 0], sizes = [1, 22], strides = [1, 1]} : vector<16x22xf32> to vector<1x22xf32>
    %125 = tpu.concatenate %122, %123, %124 in 0 : vector<1x22xf32>, vector<1x22xf32>, vector<1x22xf32> -> vector<3x22xf32>
    %126 = tpu.concatenate %121, %117, %125 in 0 : vector<3x22xf32>, vector<16x22xf32>, vector<3x22xf32> -> vector<22x22xf32>
    %127 = vector.extract_strided_slice %91 {offsets = [0, 0], sizes = [22, 16], strides = [1, 1]} : vector<22x22xf32> to vector<22x16xf32>
    %c0_22 = arith.constant 0 : index
    %c0_23 = arith.constant 0 : index
    %c0_24 = arith.constant 0 : index
    %c0_25 = arith.constant 0 : index
    %128 = vector.load %arg8[%c0_22, %c0_23, %c0_24, %c0_25] : memref<2x7x22x16xf32, #tpu.memory_space<vmem>>, vector<1x1x22x16xf32>
    %129 = vector.shape_cast %128 : vector<1x1x22x16xf32> to vector<22x16xf32>
    %130 = vector.shape_cast %127 : vector<22x16xf32> to vector<1x1x22x16xf32>
    tpu.vector_store %arg8[%c0_22, %c0_23, %c0_24, %c0_25], %130 {strides = array<i32>} : memref<2x7x22x16xf32, #tpu.memory_space<vmem>>, vector<1x1x22x16xf32>,
    %131 = vector.extract_strided_slice %91 {offsets = [0, 1], sizes = [22, 16], strides = [1, 1]} : vector<22x22xf32> to vector<22x16xf32>
    %c0_26 = arith.constant 0 : index
    %c1_27 = arith.constant 1 : index
    %c0_28 = arith.constant 0 : index
    %c0_29 = arith.constant 0 : index
    %132 = vector.load %arg8[%c0_26, %c1_27, %c0_28, %c0_29] : memref<2x7x22x16xf32, #tpu.memory_space<vmem>>, vector<1x1x22x16xf32>
    %133 = vector.shape_cast %132 : vector<1x1x22x16xf32> to vector<22x16xf32>
    %134 = vector.shape_cast %131 : vector<22x16xf32> to vector<1x1x22x16xf32>
    tpu.vector_store %arg8[%c0_26, %c1_27, %c0_28, %c0_29], %134 {strides = array<i32>} : memref<2x7x22x16xf32, #tpu.memory_space<vmem>>, vector<1x1x22x16xf32>,
    %135 = vector.extract_strided_slice %91 {offsets = [0, 2], sizes = [22, 16], strides = [1, 1]} : vector<22x22xf32> to vector<22x16xf32>
    %c0_30 = arith.constant 0 : index
    %c2_31 = arith.constant 2 : index
    %c0_32 = arith.constant 0 : index
    %c0_33 = arith.constant 0 : index
    %136 = vector.load %arg8[%c0_30, %c2_31, %c0_32, %c0_33] : memref<2x7x22x16xf32, #tpu.memory_space<vmem>>, vector<1x1x22x16xf32>
    %137 = vector.shape_cast %136 : vector<1x1x22x16xf32> to vector<22x16xf32>
    %138 = vector.shape_cast %135 : vector<22x16xf32> to vector<1x1x22x16xf32>
    tpu.vector_store %arg8[%c0_30, %c2_31, %c0_32, %c0_33], %138 {strides = array<i32>} : memref<2x7x22x16xf32, #tpu.memory_space<vmem>>, vector<1x1x22x16xf32>,
    %139 = vector.extract_strided_slice %91 {offsets = [0, 3], sizes = [22, 16], strides = [1, 1]} : vector<22x22xf32> to vector<22x16xf32>
    %c0_34 = arith.constant 0 : index
    %c3 = arith.constant 3 : index
    %c0_35 = arith.constant 0 : index
    %c0_36 = arith.constant 0 : index
    %140 = vector.load %arg8[%c0_34, %c3, %c0_35, %c0_36] : memref<2x7x22x16xf32, #tpu.memory_space<vmem>>, vector<1x1x22x16xf32>
    %141 = vector.shape_cast %140 : vector<1x1x22x16xf32> to vector<22x16xf32>
    %142 = vector.shape_cast %139 : vector<22x16xf32> to vector<1x1x22x16xf32>
    tpu.vector_store %arg8[%c0_34, %c3, %c0_35, %c0_36], %142 {strides = array<i32>} : memref<2x7x22x16xf32, #tpu.memory_space<vmem>>, vector<1x1x22x16xf32>,
    %143 = vector.extract_strided_slice %91 {offsets = [0, 4], sizes = [22, 16], strides = [1, 1]} : vector<22x22xf32> to vector<22x16xf32>
    %c0_37 = arith.constant 0 : index
    %c4 = arith.constant 4 : index
    %c0_38 = arith.constant 0 : index
    %c0_39 = arith.constant 0 : index
    %144 = vector.load %arg8[%c0_37, %c4, %c0_38, %c0_39] : memref<2x7x22x16xf32, #tpu.memory_space<vmem>>, vector<1x1x22x16xf32>
    %145 = vector.shape_cast %144 : vector<1x1x22x16xf32> to vector<22x16xf32>
    %146 = vector.shape_cast %143 : vector<22x16xf32> to vector<1x1x22x16xf32>
    tpu.vector_store %arg8[%c0_37, %c4, %c0_38, %c0_39], %146 {strides = array<i32>} : memref<2x7x22x16xf32, #tpu.memory_space<vmem>>, vector<1x1x22x16xf32>,
    %147 = vector.extract_strided_slice %91 {offsets = [0, 5], sizes = [22, 16], strides = [1, 1]} : vector<22x22xf32> to vector<22x16xf32>
    %c0_40 = arith.constant 0 : index
    %c5 = arith.constant 5 : index
    %c0_41 = arith.constant 0 : index
    %c0_42 = arith.constant 0 : index
    %148 = vector.load %arg8[%c0_40, %c5, %c0_41, %c0_42] : memref<2x7x22x16xf32, #tpu.memory_space<vmem>>, vector<1x1x22x16xf32>
    %149 = vector.shape_cast %148 : vector<1x1x22x16xf32> to vector<22x16xf32>
    %150 = vector.shape_cast %147 : vector<22x16xf32> to vector<1x1x22x16xf32>
    tpu.vector_store %arg8[%c0_40, %c5, %c0_41, %c0_42], %150 {strides = array<i32>} : memref<2x7x22x16xf32, #tpu.memory_space<vmem>>, vector<1x1x22x16xf32>,
    %151 = vector.extract_strided_slice %91 {offsets = [0, 6], sizes = [22, 16], strides = [1, 1]} : vector<22x22xf32> to vector<22x16xf32>
    %c0_43 = arith.constant 0 : index
    %c6 = arith.constant 6 : index
    %c0_44 = arith.constant 0 : index
    %c0_45 = arith.constant 0 : index
    %152 = vector.load %arg8[%c0_43, %c6, %c0_44, %c0_45] : memref<2x7x22x16xf32, #tpu.memory_space<vmem>>, vector<1x1x22x16xf32>
    %153 = vector.shape_cast %152 : vector<1x1x22x16xf32> to vector<22x16xf32>
    %154 = vector.shape_cast %151 : vector<22x16xf32> to vector<1x1x22x16xf32>
    tpu.vector_store %arg8[%c0_43, %c6, %c0_44, %c0_45], %154 {strides = array<i32>} : memref<2x7x22x16xf32, #tpu.memory_space<vmem>>, vector<1x1x22x16xf32>,
    %155 = vector.extract_strided_slice %126 {offsets = [0, 0], sizes = [22, 16], strides = [1, 1]} : vector<22x22xf32> to vector<22x16xf32>
    %c1_46 = arith.constant 1 : index
    %c0_47 = arith.constant 0 : index
    %c0_48 = arith.constant 0 : index
    %c0_49 = arith.constant 0 : index
    %156 = vector.load %arg8[%c1_46, %c0_47, %c0_48, %c0_49] : memref<2x7x22x16xf32, #tpu.memory_space<vmem>>, vector<1x1x22x16xf32>
    %157 = vector.shape_cast %156 : vector<1x1x22x16xf32> to vector<22x16xf32>
    %158 = vector.shape_cast %155 : vector<22x16xf32> to vector<1x1x22x16xf32>
    tpu.vector_store %arg8[%c1_46, %c0_47, %c0_48, %c0_49], %158 {strides = array<i32>} : memref<2x7x22x16xf32, #tpu.memory_space<vmem>>, vector<1x1x22x16xf32>,
    %159 = vector.extract_strided_slice %126 {offsets = [0, 1], sizes = [22, 16], strides = [1, 1]} : vector<22x22xf32> to vector<22x16xf32>
    %c1_50 = arith.constant 1 : index
    %c1_51 = arith.constant 1 : index
    %c0_52 = arith.constant 0 : index
    %c0_53 = arith.constant 0 : index
    %160 = vector.load %arg8[%c1_50, %c1_51, %c0_52, %c0_53] : memref<2x7x22x16xf32, #tpu.memory_space<vmem>>, vector<1x1x22x16xf32>
    %161 = vector.shape_cast %160 : vector<1x1x22x16xf32> to vector<22x16xf32>
    %162 = vector.shape_cast %159 : vector<22x16xf32> to vector<1x1x22x16xf32>
    tpu.vector_store %arg8[%c1_50, %c1_51, %c0_52, %c0_53], %162 {strides = array<i32>} : memref<2x7x22x16xf32, #tpu.memory_space<vmem>>, vector<1x1x22x16xf32>,
    %163 = vector.extract_strided_slice %126 {offsets = [0, 2], sizes = [22, 16], strides = [1, 1]} : vector<22x22xf32> to vector<22x16xf32>
    %c1_54 = arith.constant 1 : index
    %c2_55 = arith.constant 2 : index
    %c0_56 = arith.constant 0 : index
    %c0_57 = arith.constant 0 : index
    %164 = vector.load %arg8[%c1_54, %c2_55, %c0_56, %c0_57] : memref<2x7x22x16xf32, #tpu.memory_space<vmem>>, vector<1x1x22x16xf32>
    %165 = vector.shape_cast %164 : vector<1x1x22x16xf32> to vector<22x16xf32>
    %166 = vector.shape_cast %163 : vector<22x16xf32> to vector<1x1x22x16xf32>
    tpu.vector_store %arg8[%c1_54, %c2_55, %c0_56, %c0_57], %166 {strides = array<i32>} : memref<2x7x22x16xf32, #tpu.memory_space<vmem>>, vector<1x1x22x16xf32>,
    %167 = vector.extract_strided_slice %126 {offsets = [0, 3], sizes = [22, 16], strides = [1, 1]} : vector<22x22xf32> to vector<22x16xf32>
    %c1_58 = arith.constant 1 : index
    %c3_59 = arith.constant 3 : index
    %c0_60 = arith.constant 0 : index
    %c0_61 = arith.constant 0 : index
    %168 = vector.load %arg8[%c1_58, %c3_59, %c0_60, %c0_61] : memref<2x7x22x16xf32, #tpu.memory_space<vmem>>, vector<1x1x22x16xf32>
    %169 = vector.shape_cast %168 : vector<1x1x22x16xf32> to vector<22x16xf32>
    %170 = vector.shape_cast %167 : vector<22x16xf32> to vector<1x1x22x16xf32>
    tpu.vector_store %arg8[%c1_58, %c3_59, %c0_60, %c0_61], %170 {strides = array<i32>} : memref<2x7x22x16xf32, #tpu.memory_space<vmem>>, vector<1x1x22x16xf32>,
    %171 = vector.extract_strided_slice %126 {offsets = [0, 4], sizes = [22, 16], strides = [1, 1]} : vector<22x22xf32> to vector<22x16xf32>
    %c1_62 = arith.constant 1 : index
    %c4_63 = arith.constant 4 : index
    %c0_64 = arith.constant 0 : index
    %c0_65 = arith.constant 0 : index
    %172 = vector.load %arg8[%c1_62, %c4_63, %c0_64, %c0_65] : memref<2x7x22x16xf32, #tpu.memory_space<vmem>>, vector<1x1x22x16xf32>
    %173 = vector.shape_cast %172 : vector<1x1x22x16xf32> to vector<22x16xf32>
    %174 = vector.shape_cast %171 : vector<22x16xf32> to vector<1x1x22x16xf32>
    tpu.vector_store %arg8[%c1_62, %c4_63, %c0_64, %c0_65], %174 {strides = array<i32>} : memref<2x7x22x16xf32, #tpu.memory_space<vmem>>, vector<1x1x22x16xf32>,
    %175 = vector.extract_strided_slice %126 {offsets = [0, 5], sizes = [22, 16], strides = [1, 1]} : vector<22x22xf32> to vector<22x16xf32>
    %c1_66 = arith.constant 1 : index
    %c5_67 = arith.constant 5 : index
    %c0_68 = arith.constant 0 : index
    %c0_69 = arith.constant 0 : index
    %176 = vector.load %arg8[%c1_66, %c5_67, %c0_68, %c0_69] : memref<2x7x22x16xf32, #tpu.memory_space<vmem>>, vector<1x1x22x16xf32>
    %177 = vector.shape_cast %176 : vector<1x1x22x16xf32> to vector<22x16xf32>
    %178 = vector.shape_cast %175 : vector<22x16xf32> to vector<1x1x22x16xf32>
    tpu.vector_store %arg8[%c1_66, %c5_67, %c0_68, %c0_69], %178 {strides = array<i32>} : memref<2x7x22x16xf32, #tpu.memory_space<vmem>>, vector<1x1x22x16xf32>,
    %179 = vector.extract_strided_slice %126 {offsets = [0, 6], sizes = [22, 16], strides = [1, 1]} : vector<22x22xf32> to vector<22x16xf32>
    %c1_70 = arith.constant 1 : index
    %c6_71 = arith.constant 6 : index
    %c0_72 = arith.constant 0 : index
    %c0_73 = arith.constant 0 : index
    %180 = vector.load %arg8[%c1_70, %c6_71, %c0_72, %c0_73] : memref<2x7x22x16xf32, #tpu.memory_space<vmem>>, vector<1x1x22x16xf32>
    %181 = vector.shape_cast %180 : vector<1x1x22x16xf32> to vector<22x16xf32>
    %182 = vector.shape_cast %179 : vector<22x16xf32> to vector<1x1x22x16xf32>
    tpu.vector_store %arg8[%c1_70, %c6_71, %c0_72, %c0_73], %182 {strides = array<i32>} : memref<2x7x22x16xf32, #tpu.memory_space<vmem>>, vector<1x1x22x16xf32>,
    %c0_74 = arith.constant 0 : index
    %183 = memref.load %arg6[%c0_74] : memref<1xf32, #tpu.memory_space<smem>>
    %184 = vector.broadcast %183 : f32 to vector<16x16xf32>
    %c0_75 = arith.constant 0 : index
    %185 = memref.load %arg5[%c0_75] : memref<98xf32, #tpu.memory_space<smem>>
    %c0_76 = arith.constant 0 : index
    %c0_77 = arith.constant 0 : index
    %c0_78 = arith.constant 0 : index
    %c0_79 = arith.constant 0 : index
    %186 = vector.load %arg8[%c0_76, %c0_77, %c0_78, %c0_79] : memref<2x7x22x16xf32, #tpu.memory_space<vmem>>, vector<1x1x16x16xf32>
    %187 = vector.shape_cast %186 : vector<1x1x16x16xf32> to vector<16x16xf32>
    %188 = vector.broadcast %185 : f32 to vector<16x16xf32>
    %189 = arith.mulf %188, %187 : vector<16x16xf32>
    %190 = arith.addf %184, %189 : vector<16x16xf32>
    %c1_80 = arith.constant 1 : index
    %191 = memref.load %arg5[%c1_80] : memref<98xf32, #tpu.memory_space<smem>>
    %c0_81 = arith.constant 0 : index
    %c1_82 = arith.constant 1 : index
    %c0_83 = arith.constant 0 : index
    %c0_84 = arith.constant 0 : index
    %192 = vector.load %arg8[%c0_81, %c1_82, %c0_83, %c0_84] : memref<2x7x22x16xf32, #tpu.memory_space<vmem>>, vector<1x1x16x16xf32>
    %193 = vector.shape_cast %192 : vector<1x1x16x16xf32> to vector<16x16xf32>
    %194 = vector.broadcast %191 : f32 to vector<16x16xf32>
    %195 = arith.mulf %194, %193 : vector<16x16xf32>
    %196 = arith.addf %190, %195 : vector<16x16xf32>
    %c2_85 = arith.constant 2 : index
    %197 = memref.load %arg5[%c2_85] : memref<98xf32, #tpu.memory_space<smem>>
    %c0_86 = arith.constant 0 : index
    %c2_87 = arith.constant 2 : index
    %c0_88 = arith.constant 0 : index
    %c0_89 = arith.constant 0 : index
    %198 = vector.load %arg8[%c0_86, %c2_87, %c0_88, %c0_89] : memref<2x7x22x16xf32, #tpu.memory_space<vmem>>, vector<1x1x16x16xf32>
    %199 = vector.shape_cast %198 : vector<1x1x16x16xf32> to vector<16x16xf32>
    %200 = vector.broadcast %197 : f32 to vector<16x16xf32>
    %201 = arith.mulf %200, %199 : vector<16x16xf32>
    %202 = arith.addf %196, %201 : vector<16x16xf32>
    %c3_90 = arith.constant 3 : index
    %203 = memref.load %arg5[%c3_90] : memref<98xf32, #tpu.memory_space<smem>>
    %c0_91 = arith.constant 0 : index
    %c3_92 = arith.constant 3 : index
    %c0_93 = arith.constant 0 : index
    %c0_94 = arith.constant 0 : index
    %204 = vector.load %arg8[%c0_91, %c3_92, %c0_93, %c0_94] : memref<2x7x22x16xf32, #tpu.memory_space<vmem>>, vector<1x1x16x16xf32>
    %205 = vector.shape_cast %204 : vector<1x1x16x16xf32> to vector<16x16xf32>
    %206 = vector.broadcast %203 : f32 to vector<16x16xf32>
    %207 = arith.mulf %206, %205 : vector<16x16xf32>
    %208 = arith.addf %202, %207 : vector<16x16xf32>
    %c4_95 = arith.constant 4 : index
    %209 = memref.load %arg5[%c4_95] : memref<98xf32, #tpu.memory_space<smem>>
    %c0_96 = arith.constant 0 : index
    %c4_97 = arith.constant 4 : index
    %c0_98 = arith.constant 0 : index
    %c0_99 = arith.constant 0 : index
    %210 = vector.load %arg8[%c0_96, %c4_97, %c0_98, %c0_99] : memref<2x7x22x16xf32, #tpu.memory_space<vmem>>, vector<1x1x16x16xf32>
    %211 = vector.shape_cast %210 : vector<1x1x16x16xf32> to vector<16x16xf32>
    %212 = vector.broadcast %209 : f32 to vector<16x16xf32>
    %213 = arith.mulf %212, %211 : vector<16x16xf32>
    %214 = arith.addf %208, %213 : vector<16x16xf32>
    %c5_100 = arith.constant 5 : index
    %215 = memref.load %arg5[%c5_100] : memref<98xf32, #tpu.memory_space<smem>>
    %c0_101 = arith.constant 0 : index
    %c5_102 = arith.constant 5 : index
    %c0_103 = arith.constant 0 : index
    %c0_104 = arith.constant 0 : index
    %216 = vector.load %arg8[%c0_101, %c5_102, %c0_103, %c0_104] : memref<2x7x22x16xf32, #tpu.memory_space<vmem>>, vector<1x1x16x16xf32>
    %217 = vector.shape_cast %216 : vector<1x1x16x16xf32> to vector<16x16xf32>
    %218 = vector.broadcast %215 : f32 to vector<16x16xf32>
    %219 = arith.mulf %218, %217 : vector<16x16xf32>
    %220 = arith.addf %214, %219 : vector<16x16xf32>
    %c6_105 = arith.constant 6 : index
    %221 = memref.load %arg5[%c6_105] : memref<98xf32, #tpu.memory_space<smem>>
    %c0_106 = arith.constant 0 : index
    %c6_107 = arith.constant 6 : index
    %c0_108 = arith.constant 0 : index
    %c0_109 = arith.constant 0 : index
    %222 = vector.load %arg8[%c0_106, %c6_107, %c0_108, %c0_109] : memref<2x7x22x16xf32, #tpu.memory_space<vmem>>, vector<1x1x16x16xf32>
    %223 = vector.shape_cast %222 : vector<1x1x16x16xf32> to vector<16x16xf32>
    %224 = vector.broadcast %221 : f32 to vector<16x16xf32>
    %225 = arith.mulf %224, %223 : vector<16x16xf32>
    %226 = arith.addf %220, %225 : vector<16x16xf32>
    %c7 = arith.constant 7 : index
    %227 = memref.load %arg5[%c7] : memref<98xf32, #tpu.memory_space<smem>>
    %c0_110 = arith.constant 0 : index
    %c0_111 = arith.constant 0 : index
    %c1_112 = arith.constant 1 : index
    %c0_113 = arith.constant 0 : index
    %228 = vector.load %arg8[%c0_110, %c0_111, %c1_112, %c0_113] : memref<2x7x22x16xf32, #tpu.memory_space<vmem>>, vector<1x1x16x16xf32>
    %229 = vector.shape_cast %228 : vector<1x1x16x16xf32> to vector<16x16xf32>
    %230 = vector.broadcast %227 : f32 to vector<16x16xf32>
    %231 = arith.mulf %230, %229 : vector<16x16xf32>
    %232 = arith.addf %226, %231 : vector<16x16xf32>
    %c8 = arith.constant 8 : index
    %233 = memref.load %arg5[%c8] : memref<98xf32, #tpu.memory_space<smem>>
    %c0_114 = arith.constant 0 : index
    %c1_115 = arith.constant 1 : index
    %c1_116 = arith.constant 1 : index
    %c0_117 = arith.constant 0 : index
    %234 = vector.load %arg8[%c0_114, %c1_115, %c1_116, %c0_117] : memref<2x7x22x16xf32, #tpu.memory_space<vmem>>, vector<1x1x16x16xf32>
    %235 = vector.shape_cast %234 : vector<1x1x16x16xf32> to vector<16x16xf32>
    %236 = vector.broadcast %233 : f32 to vector<16x16xf32>
    %237 = arith.mulf %236, %235 : vector<16x16xf32>
    %238 = arith.addf %232, %237 : vector<16x16xf32>
    %c9 = arith.constant 9 : index
    %239 = memref.load %arg5[%c9] : memref<98xf32, #tpu.memory_space<smem>>
    %c0_118 = arith.constant 0 : index
    %c2_119 = arith.constant 2 : index
    %c1_120 = arith.constant 1 : index
    %c0_121 = arith.constant 0 : index
    %240 = vector.load %arg8[%c0_118, %c2_119, %c1_120, %c0_121] : memref<2x7x22x16xf32, #tpu.memory_space<vmem>>, vector<1x1x16x16xf32>
    %241 = vector.shape_cast %240 : vector<1x1x16x16xf32> to vector<16x16xf32>
    %242 = vector.broadcast %239 : f32 to vector<16x16xf32>
    %243 = arith.mulf %242, %241 : vector<16x16xf32>
    %244 = arith.addf %238, %243 : vector<16x16xf32>
    %c10 = arith.constant 10 : index
    %245 = memref.load %arg5[%c10] : memref<98xf32, #tpu.memory_space<smem>>
    %c0_122 = arith.constant 0 : index
    %c3_123 = arith.constant 3 : index
    %c1_124 = arith.constant 1 : index
    %c0_125 = arith.constant 0 : index
    %246 = vector.load %arg8[%c0_122, %c3_123, %c1_124, %c0_125] : memref<2x7x22x16xf32, #tpu.memory_space<vmem>>, vector<1x1x16x16xf32>
    %247 = vector.shape_cast %246 : vector<1x1x16x16xf32> to vector<16x16xf32>
    %248 = vector.broadcast %245 : f32 to vector<16x16xf32>
    %249 = arith.mulf %248, %247 : vector<16x16xf32>
    %250 = arith.addf %244, %249 : vector<16x16xf32>
    %c11 = arith.constant 11 : index
    %251 = memref.load %arg5[%c11] : memref<98xf32, #tpu.memory_space<smem>>
    %c0_126 = arith.constant 0 : index
    %c4_127 = arith.constant 4 : index
    %c1_128 = arith.constant 1 : index
    %c0_129 = arith.constant 0 : index
    %252 = vector.load %arg8[%c0_126, %c4_127, %c1_128, %c0_129] : memref<2x7x22x16xf32, #tpu.memory_space<vmem>>, vector<1x1x16x16xf32>
    %253 = vector.shape_cast %252 : vector<1x1x16x16xf32> to vector<16x16xf32>
    %254 = vector.broadcast %251 : f32 to vector<16x16xf32>
    %255 = arith.mulf %254, %253 : vector<16x16xf32>
    %256 = arith.addf %250, %255 : vector<16x16xf32>
    %c12 = arith.constant 12 : index
    %257 = memref.load %arg5[%c12] : memref<98xf32, #tpu.memory_space<smem>>
    %c0_130 = arith.constant 0 : index
    %c5_131 = arith.constant 5 : index
    %c1_132 = arith.constant 1 : index
    %c0_133 = arith.constant 0 : index
    %258 = vector.load %arg8[%c0_130, %c5_131, %c1_132, %c0_133] : memref<2x7x22x16xf32, #tpu.memory_space<vmem>>, vector<1x1x16x16xf32>
    %259 = vector.shape_cast %258 : vector<1x1x16x16xf32> to vector<16x16xf32>
    %260 = vector.broadcast %257 : f32 to vector<16x16xf32>
    %261 = arith.mulf %260, %259 : vector<16x16xf32>
    %262 = arith.addf %256, %261 : vector<16x16xf32>
    %c13 = arith.constant 13 : index
    %263 = memref.load %arg5[%c13] : memref<98xf32, #tpu.memory_space<smem>>
    %c0_134 = arith.constant 0 : index
    %c6_135 = arith.constant 6 : index
    %c1_136 = arith.constant 1 : index
    %c0_137 = arith.constant 0 : index
    %264 = vector.load %arg8[%c0_134, %c6_135, %c1_136, %c0_137] : memref<2x7x22x16xf32, #tpu.memory_space<vmem>>, vector<1x1x16x16xf32>
    %265 = vector.shape_cast %264 : vector<1x1x16x16xf32> to vector<16x16xf32>
    %266 = vector.broadcast %263 : f32 to vector<16x16xf32>
    %267 = arith.mulf %266, %265 : vector<16x16xf32>
    %268 = arith.addf %262, %267 : vector<16x16xf32>
    %c14 = arith.constant 14 : index
    %269 = memref.load %arg5[%c14] : memref<98xf32, #tpu.memory_space<smem>>
    %c0_138 = arith.constant 0 : index
    %c0_139 = arith.constant 0 : index
    %c2_140 = arith.constant 2 : index
    %c0_141 = arith.constant 0 : index
    %270 = vector.load %arg8[%c0_138, %c0_139, %c2_140, %c0_141] : memref<2x7x22x16xf32, #tpu.memory_space<vmem>>, vector<1x1x16x16xf32>
    %271 = vector.shape_cast %270 : vector<1x1x16x16xf32> to vector<16x16xf32>
    %272 = vector.broadcast %269 : f32 to vector<16x16xf32>
    %273 = arith.mulf %272, %271 : vector<16x16xf32>
    %274 = arith.addf %268, %273 : vector<16x16xf32>
    %c15 = arith.constant 15 : index
    %275 = memref.load %arg5[%c15] : memref<98xf32, #tpu.memory_space<smem>>
    %c0_142 = arith.constant 0 : index
    %c1_143 = arith.constant 1 : index
    %c2_144 = arith.constant 2 : index
    %c0_145 = arith.constant 0 : index
    %276 = vector.load %arg8[%c0_142, %c1_143, %c2_144, %c0_145] : memref<2x7x22x16xf32, #tpu.memory_space<vmem>>, vector<1x1x16x16xf32>
    %277 = vector.shape_cast %276 : vector<1x1x16x16xf32> to vector<16x16xf32>
    %278 = vector.broadcast %275 : f32 to vector<16x16xf32>
    %279 = arith.mulf %278, %277 : vector<16x16xf32>
    %280 = arith.addf %274, %279 : vector<16x16xf32>
    %c16 = arith.constant 16 : index
    %281 = memref.load %arg5[%c16] : memref<98xf32, #tpu.memory_space<smem>>
    %c0_146 = arith.constant 0 : index
    %c2_147 = arith.constant 2 : index
    %c2_148 = arith.constant 2 : index
    %c0_149 = arith.constant 0 : index
    %282 = vector.load %arg8[%c0_146, %c2_147, %c2_148, %c0_149] : memref<2x7x22x16xf32, #tpu.memory_space<vmem>>, vector<1x1x16x16xf32>
    %283 = vector.shape_cast %282 : vector<1x1x16x16xf32> to vector<16x16xf32>
    %284 = vector.broadcast %281 : f32 to vector<16x16xf32>
    %285 = arith.mulf %284, %283 : vector<16x16xf32>
    %286 = arith.addf %280, %285 : vector<16x16xf32>
    %c17 = arith.constant 17 : index
    %287 = memref.load %arg5[%c17] : memref<98xf32, #tpu.memory_space<smem>>
    %c0_150 = arith.constant 0 : index
    %c3_151 = arith.constant 3 : index
    %c2_152 = arith.constant 2 : index
    %c0_153 = arith.constant 0 : index
    %288 = vector.load %arg8[%c0_150, %c3_151, %c2_152, %c0_153] : memref<2x7x22x16xf32, #tpu.memory_space<vmem>>, vector<1x1x16x16xf32>
    %289 = vector.shape_cast %288 : vector<1x1x16x16xf32> to vector<16x16xf32>
    %290 = vector.broadcast %287 : f32 to vector<16x16xf32>
    %291 = arith.mulf %290, %289 : vector<16x16xf32>
    %292 = arith.addf %286, %291 : vector<16x16xf32>
    %c18 = arith.constant 18 : index
    %293 = memref.load %arg5[%c18] : memref<98xf32, #tpu.memory_space<smem>>
    %c0_154 = arith.constant 0 : index
    %c4_155 = arith.constant 4 : index
    %c2_156 = arith.constant 2 : index
    %c0_157 = arith.constant 0 : index
    %294 = vector.load %arg8[%c0_154, %c4_155, %c2_156, %c0_157] : memref<2x7x22x16xf32, #tpu.memory_space<vmem>>, vector<1x1x16x16xf32>
    %295 = vector.shape_cast %294 : vector<1x1x16x16xf32> to vector<16x16xf32>
    %296 = vector.broadcast %293 : f32 to vector<16x16xf32>
    %297 = arith.mulf %296, %295 : vector<16x16xf32>
    %298 = arith.addf %292, %297 : vector<16x16xf32>
    %c19 = arith.constant 19 : index
    %299 = memref.load %arg5[%c19] : memref<98xf32, #tpu.memory_space<smem>>
    %c0_158 = arith.constant 0 : index
    %c5_159 = arith.constant 5 : index
    %c2_160 = arith.constant 2 : index
    %c0_161 = arith.constant 0 : index
    %300 = vector.load %arg8[%c0_158, %c5_159, %c2_160, %c0_161] : memref<2x7x22x16xf32, #tpu.memory_space<vmem>>, vector<1x1x16x16xf32>
    %301 = vector.shape_cast %300 : vector<1x1x16x16xf32> to vector<16x16xf32>
    %302 = vector.broadcast %299 : f32 to vector<16x16xf32>
    %303 = arith.mulf %302, %301 : vector<16x16xf32>
    %304 = arith.addf %298, %303 : vector<16x16xf32>
    %c20 = arith.constant 20 : index
    %305 = memref.load %arg5[%c20] : memref<98xf32, #tpu.memory_space<smem>>
    %c0_162 = arith.constant 0 : index
    %c6_163 = arith.constant 6 : index
    %c2_164 = arith.constant 2 : index
    %c0_165 = arith.constant 0 : index
    %306 = vector.load %arg8[%c0_162, %c6_163, %c2_164, %c0_165] : memref<2x7x22x16xf32, #tpu.memory_space<vmem>>, vector<1x1x16x16xf32>
    %307 = vector.shape_cast %306 : vector<1x1x16x16xf32> to vector<16x16xf32>
    %308 = vector.broadcast %305 : f32 to vector<16x16xf32>
    %309 = arith.mulf %308, %307 : vector<16x16xf32>
    %310 = arith.addf %304, %309 : vector<16x16xf32>
    %c21 = arith.constant 21 : index
    %311 = memref.load %arg5[%c21] : memref<98xf32, #tpu.memory_space<smem>>
    %c0_166 = arith.constant 0 : index
    %c0_167 = arith.constant 0 : index
    %c3_168 = arith.constant 3 : index
    %c0_169 = arith.constant 0 : index
    %312 = vector.load %arg8[%c0_166, %c0_167, %c3_168, %c0_169] : memref<2x7x22x16xf32, #tpu.memory_space<vmem>>, vector<1x1x16x16xf32>
    %313 = vector.shape_cast %312 : vector<1x1x16x16xf32> to vector<16x16xf32>
    %314 = vector.broadcast %311 : f32 to vector<16x16xf32>
    %315 = arith.mulf %314, %313 : vector<16x16xf32>
    %316 = arith.addf %310, %315 : vector<16x16xf32>
    %c22 = arith.constant 22 : index
    %317 = memref.load %arg5[%c22] : memref<98xf32, #tpu.memory_space<smem>>
    %c0_170 = arith.constant 0 : index
    %c1_171 = arith.constant 1 : index
    %c3_172 = arith.constant 3 : index
    %c0_173 = arith.constant 0 : index
    %318 = vector.load %arg8[%c0_170, %c1_171, %c3_172, %c0_173] : memref<2x7x22x16xf32, #tpu.memory_space<vmem>>, vector<1x1x16x16xf32>
    %319 = vector.shape_cast %318 : vector<1x1x16x16xf32> to vector<16x16xf32>
    %320 = vector.broadcast %317 : f32 to vector<16x16xf32>
    %321 = arith.mulf %320, %319 : vector<16x16xf32>
    %322 = arith.addf %316, %321 : vector<16x16xf32>
    %c23 = arith.constant 23 : index
    %323 = memref.load %arg5[%c23] : memref<98xf32, #tpu.memory_space<smem>>
    %c0_174 = arith.constant 0 : index
    %c2_175 = arith.constant 2 : index
    %c3_176 = arith.constant 3 : index
    %c0_177 = arith.constant 0 : index
    %324 = vector.load %arg8[%c0_174, %c2_175, %c3_176, %c0_177] : memref<2x7x22x16xf32, #tpu.memory_space<vmem>>, vector<1x1x16x16xf32>
    %325 = vector.shape_cast %324 : vector<1x1x16x16xf32> to vector<16x16xf32>
    %326 = vector.broadcast %323 : f32 to vector<16x16xf32>
    %327 = arith.mulf %326, %325 : vector<16x16xf32>
    %328 = arith.addf %322, %327 : vector<16x16xf32>
    %c24 = arith.constant 24 : index
    %329 = memref.load %arg5[%c24] : memref<98xf32, #tpu.memory_space<smem>>
    %c0_178 = arith.constant 0 : index
    %c3_179 = arith.constant 3 : index
    %c3_180 = arith.constant 3 : index
    %c0_181 = arith.constant 0 : index
    %330 = vector.load %arg8[%c0_178, %c3_179, %c3_180, %c0_181] : memref<2x7x22x16xf32, #tpu.memory_space<vmem>>, vector<1x1x16x16xf32>
    %331 = vector.shape_cast %330 : vector<1x1x16x16xf32> to vector<16x16xf32>
    %332 = vector.broadcast %329 : f32 to vector<16x16xf32>
    %333 = arith.mulf %332, %331 : vector<16x16xf32>
    %334 = arith.addf %328, %333 : vector<16x16xf32>
    %c25 = arith.constant 25 : index
    %335 = memref.load %arg5[%c25] : memref<98xf32, #tpu.memory_space<smem>>
    %c0_182 = arith.constant 0 : index
    %c4_183 = arith.constant 4 : index
    %c3_184 = arith.constant 3 : index
    %c0_185 = arith.constant 0 : index
    %336 = vector.load %arg8[%c0_182, %c4_183, %c3_184, %c0_185] : memref<2x7x22x16xf32, #tpu.memory_space<vmem>>, vector<1x1x16x16xf32>
    %337 = vector.shape_cast %336 : vector<1x1x16x16xf32> to vector<16x16xf32>
    %338 = vector.broadcast %335 : f32 to vector<16x16xf32>
    %339 = arith.mulf %338, %337 : vector<16x16xf32>
    %340 = arith.addf %334, %339 : vector<16x16xf32>
    %c26 = arith.constant 26 : index
    %341 = memref.load %arg5[%c26] : memref<98xf32, #tpu.memory_space<smem>>
    %c0_186 = arith.constant 0 : index
    %c5_187 = arith.constant 5 : index
    %c3_188 = arith.constant 3 : index
    %c0_189 = arith.constant 0 : index
    %342 = vector.load %arg8[%c0_186, %c5_187, %c3_188, %c0_189] : memref<2x7x22x16xf32, #tpu.memory_space<vmem>>, vector<1x1x16x16xf32>
    %343 = vector.shape_cast %342 : vector<1x1x16x16xf32> to vector<16x16xf32>
    %344 = vector.broadcast %341 : f32 to vector<16x16xf32>
    %345 = arith.mulf %344, %343 : vector<16x16xf32>
    %346 = arith.addf %340, %345 : vector<16x16xf32>
    %c27 = arith.constant 27 : index
    %347 = memref.load %arg5[%c27] : memref<98xf32, #tpu.memory_space<smem>>
    %c0_190 = arith.constant 0 : index
    %c6_191 = arith.constant 6 : index
    %c3_192 = arith.constant 3 : index
    %c0_193 = arith.constant 0 : index
    %348 = vector.load %arg8[%c0_190, %c6_191, %c3_192, %c0_193] : memref<2x7x22x16xf32, #tpu.memory_space<vmem>>, vector<1x1x16x16xf32>
    %349 = vector.shape_cast %348 : vector<1x1x16x16xf32> to vector<16x16xf32>
    %350 = vector.broadcast %347 : f32 to vector<16x16xf32>
    %351 = arith.mulf %350, %349 : vector<16x16xf32>
    %352 = arith.addf %346, %351 : vector<16x16xf32>
    %c28 = arith.constant 28 : index
    %353 = memref.load %arg5[%c28] : memref<98xf32, #tpu.memory_space<smem>>
    %c0_194 = arith.constant 0 : index
    %c0_195 = arith.constant 0 : index
    %c4_196 = arith.constant 4 : index
    %c0_197 = arith.constant 0 : index
    %354 = vector.load %arg8[%c0_194, %c0_195, %c4_196, %c0_197] : memref<2x7x22x16xf32, #tpu.memory_space<vmem>>, vector<1x1x16x16xf32>
    %355 = vector.shape_cast %354 : vector<1x1x16x16xf32> to vector<16x16xf32>
    %356 = vector.broadcast %353 : f32 to vector<16x16xf32>
    %357 = arith.mulf %356, %355 : vector<16x16xf32>
    %358 = arith.addf %352, %357 : vector<16x16xf32>
    %c29 = arith.constant 29 : index
    %359 = memref.load %arg5[%c29] : memref<98xf32, #tpu.memory_space<smem>>
    %c0_198 = arith.constant 0 : index
    %c1_199 = arith.constant 1 : index
    %c4_200 = arith.constant 4 : index
    %c0_201 = arith.constant 0 : index
    %360 = vector.load %arg8[%c0_198, %c1_199, %c4_200, %c0_201] : memref<2x7x22x16xf32, #tpu.memory_space<vmem>>, vector<1x1x16x16xf32>
    %361 = vector.shape_cast %360 : vector<1x1x16x16xf32> to vector<16x16xf32>
    %362 = vector.broadcast %359 : f32 to vector<16x16xf32>
    %363 = arith.mulf %362, %361 : vector<16x16xf32>
    %364 = arith.addf %358, %363 : vector<16x16xf32>
    %c30 = arith.constant 30 : index
    %365 = memref.load %arg5[%c30] : memref<98xf32, #tpu.memory_space<smem>>
    %c0_202 = arith.constant 0 : index
    %c2_203 = arith.constant 2 : index
    %c4_204 = arith.constant 4 : index
    %c0_205 = arith.constant 0 : index
    %366 = vector.load %arg8[%c0_202, %c2_203, %c4_204, %c0_205] : memref<2x7x22x16xf32, #tpu.memory_space<vmem>>, vector<1x1x16x16xf32>
    %367 = vector.shape_cast %366 : vector<1x1x16x16xf32> to vector<16x16xf32>
    %368 = vector.broadcast %365 : f32 to vector<16x16xf32>
    %369 = arith.mulf %368, %367 : vector<16x16xf32>
    %370 = arith.addf %364, %369 : vector<16x16xf32>
    %c31 = arith.constant 31 : index
    %371 = memref.load %arg5[%c31] : memref<98xf32, #tpu.memory_space<smem>>
    %c0_206 = arith.constant 0 : index
    %c3_207 = arith.constant 3 : index
    %c4_208 = arith.constant 4 : index
    %c0_209 = arith.constant 0 : index
    %372 = vector.load %arg8[%c0_206, %c3_207, %c4_208, %c0_209] : memref<2x7x22x16xf32, #tpu.memory_space<vmem>>, vector<1x1x16x16xf32>
    %373 = vector.shape_cast %372 : vector<1x1x16x16xf32> to vector<16x16xf32>
    %374 = vector.broadcast %371 : f32 to vector<16x16xf32>
    %375 = arith.mulf %374, %373 : vector<16x16xf32>
    %376 = arith.addf %370, %375 : vector<16x16xf32>
    %c32 = arith.constant 32 : index
    %377 = memref.load %arg5[%c32] : memref<98xf32, #tpu.memory_space<smem>>
    %c0_210 = arith.constant 0 : index
    %c4_211 = arith.constant 4 : index
    %c4_212 = arith.constant 4 : index
    %c0_213 = arith.constant 0 : index
    %378 = vector.load %arg8[%c0_210, %c4_211, %c4_212, %c0_213] : memref<2x7x22x16xf32, #tpu.memory_space<vmem>>, vector<1x1x16x16xf32>
    %379 = vector.shape_cast %378 : vector<1x1x16x16xf32> to vector<16x16xf32>
    %380 = vector.broadcast %377 : f32 to vector<16x16xf32>
    %381 = arith.mulf %380, %379 : vector<16x16xf32>
    %382 = arith.addf %376, %381 : vector<16x16xf32>
    %c33 = arith.constant 33 : index
    %383 = memref.load %arg5[%c33] : memref<98xf32, #tpu.memory_space<smem>>
    %c0_214 = arith.constant 0 : index
    %c5_215 = arith.constant 5 : index
    %c4_216 = arith.constant 4 : index
    %c0_217 = arith.constant 0 : index
    %384 = vector.load %arg8[%c0_214, %c5_215, %c4_216, %c0_217] : memref<2x7x22x16xf32, #tpu.memory_space<vmem>>, vector<1x1x16x16xf32>
    %385 = vector.shape_cast %384 : vector<1x1x16x16xf32> to vector<16x16xf32>
    %386 = vector.broadcast %383 : f32 to vector<16x16xf32>
    %387 = arith.mulf %386, %385 : vector<16x16xf32>
    %388 = arith.addf %382, %387 : vector<16x16xf32>
    %c34 = arith.constant 34 : index
    %389 = memref.load %arg5[%c34] : memref<98xf32, #tpu.memory_space<smem>>
    %c0_218 = arith.constant 0 : index
    %c6_219 = arith.constant 6 : index
    %c4_220 = arith.constant 4 : index
    %c0_221 = arith.constant 0 : index
    %390 = vector.load %arg8[%c0_218, %c6_219, %c4_220, %c0_221] : memref<2x7x22x16xf32, #tpu.memory_space<vmem>>, vector<1x1x16x16xf32>
    %391 = vector.shape_cast %390 : vector<1x1x16x16xf32> to vector<16x16xf32>
    %392 = vector.broadcast %389 : f32 to vector<16x16xf32>
    %393 = arith.mulf %392, %391 : vector<16x16xf32>
    %394 = arith.addf %388, %393 : vector<16x16xf32>
    %c35 = arith.constant 35 : index
    %395 = memref.load %arg5[%c35] : memref<98xf32, #tpu.memory_space<smem>>
    %c0_222 = arith.constant 0 : index
    %c0_223 = arith.constant 0 : index
    %c5_224 = arith.constant 5 : index
    %c0_225 = arith.constant 0 : index
    %396 = vector.load %arg8[%c0_222, %c0_223, %c5_224, %c0_225] : memref<2x7x22x16xf32, #tpu.memory_space<vmem>>, vector<1x1x16x16xf32>
    %397 = vector.shape_cast %396 : vector<1x1x16x16xf32> to vector<16x16xf32>
    %398 = vector.broadcast %395 : f32 to vector<16x16xf32>
    %399 = arith.mulf %398, %397 : vector<16x16xf32>
    %400 = arith.addf %394, %399 : vector<16x16xf32>
    %c36 = arith.constant 36 : index
    %401 = memref.load %arg5[%c36] : memref<98xf32, #tpu.memory_space<smem>>
    %c0_226 = arith.constant 0 : index
    %c1_227 = arith.constant 1 : index
    %c5_228 = arith.constant 5 : index
    %c0_229 = arith.constant 0 : index
    %402 = vector.load %arg8[%c0_226, %c1_227, %c5_228, %c0_229] : memref<2x7x22x16xf32, #tpu.memory_space<vmem>>, vector<1x1x16x16xf32>
    %403 = vector.shape_cast %402 : vector<1x1x16x16xf32> to vector<16x16xf32>
    %404 = vector.broadcast %401 : f32 to vector<16x16xf32>
    %405 = arith.mulf %404, %403 : vector<16x16xf32>
    %406 = arith.addf %400, %405 : vector<16x16xf32>
    %c37 = arith.constant 37 : index
    %407 = memref.load %arg5[%c37] : memref<98xf32, #tpu.memory_space<smem>>
    %c0_230 = arith.constant 0 : index
    %c2_231 = arith.constant 2 : index
    %c5_232 = arith.constant 5 : index
    %c0_233 = arith.constant 0 : index
    %408 = vector.load %arg8[%c0_230, %c2_231, %c5_232, %c0_233] : memref<2x7x22x16xf32, #tpu.memory_space<vmem>>, vector<1x1x16x16xf32>
    %409 = vector.shape_cast %408 : vector<1x1x16x16xf32> to vector<16x16xf32>
    %410 = vector.broadcast %407 : f32 to vector<16x16xf32>
    %411 = arith.mulf %410, %409 : vector<16x16xf32>
    %412 = arith.addf %406, %411 : vector<16x16xf32>
    %c38 = arith.constant 38 : index
    %413 = memref.load %arg5[%c38] : memref<98xf32, #tpu.memory_space<smem>>
    %c0_234 = arith.constant 0 : index
    %c3_235 = arith.constant 3 : index
    %c5_236 = arith.constant 5 : index
    %c0_237 = arith.constant 0 : index
    %414 = vector.load %arg8[%c0_234, %c3_235, %c5_236, %c0_237] : memref<2x7x22x16xf32, #tpu.memory_space<vmem>>, vector<1x1x16x16xf32>
    %415 = vector.shape_cast %414 : vector<1x1x16x16xf32> to vector<16x16xf32>
    %416 = vector.broadcast %413 : f32 to vector<16x16xf32>
    %417 = arith.mulf %416, %415 : vector<16x16xf32>
    %418 = arith.addf %412, %417 : vector<16x16xf32>
    %c39 = arith.constant 39 : index
    %419 = memref.load %arg5[%c39] : memref<98xf32, #tpu.memory_space<smem>>
    %c0_238 = arith.constant 0 : index
    %c4_239 = arith.constant 4 : index
    %c5_240 = arith.constant 5 : index
    %c0_241 = arith.constant 0 : index
    %420 = vector.load %arg8[%c0_238, %c4_239, %c5_240, %c0_241] : memref<2x7x22x16xf32, #tpu.memory_space<vmem>>, vector<1x1x16x16xf32>
    %421 = vector.shape_cast %420 : vector<1x1x16x16xf32> to vector<16x16xf32>
    %422 = vector.broadcast %419 : f32 to vector<16x16xf32>
    %423 = arith.mulf %422, %421 : vector<16x16xf32>
    %424 = arith.addf %418, %423 : vector<16x16xf32>
    %c40 = arith.constant 40 : index
    %425 = memref.load %arg5[%c40] : memref<98xf32, #tpu.memory_space<smem>>
    %c0_242 = arith.constant 0 : index
    %c5_243 = arith.constant 5 : index
    %c5_244 = arith.constant 5 : index
    %c0_245 = arith.constant 0 : index
    %426 = vector.load %arg8[%c0_242, %c5_243, %c5_244, %c0_245] : memref<2x7x22x16xf32, #tpu.memory_space<vmem>>, vector<1x1x16x16xf32>
    %427 = vector.shape_cast %426 : vector<1x1x16x16xf32> to vector<16x16xf32>
    %428 = vector.broadcast %425 : f32 to vector<16x16xf32>
    %429 = arith.mulf %428, %427 : vector<16x16xf32>
    %430 = arith.addf %424, %429 : vector<16x16xf32>
    %c41 = arith.constant 41 : index
    %431 = memref.load %arg5[%c41] : memref<98xf32, #tpu.memory_space<smem>>
    %c0_246 = arith.constant 0 : index
    %c6_247 = arith.constant 6 : index
    %c5_248 = arith.constant 5 : index
    %c0_249 = arith.constant 0 : index
    %432 = vector.load %arg8[%c0_246, %c6_247, %c5_248, %c0_249] : memref<2x7x22x16xf32, #tpu.memory_space<vmem>>, vector<1x1x16x16xf32>
    %433 = vector.shape_cast %432 : vector<1x1x16x16xf32> to vector<16x16xf32>
    %434 = vector.broadcast %431 : f32 to vector<16x16xf32>
    %435 = arith.mulf %434, %433 : vector<16x16xf32>
    %436 = arith.addf %430, %435 : vector<16x16xf32>
    %c42 = arith.constant 42 : index
    %437 = memref.load %arg5[%c42] : memref<98xf32, #tpu.memory_space<smem>>
    %c0_250 = arith.constant 0 : index
    %c0_251 = arith.constant 0 : index
    %c6_252 = arith.constant 6 : index
    %c0_253 = arith.constant 0 : index
    %438 = vector.load %arg8[%c0_250, %c0_251, %c6_252, %c0_253] : memref<2x7x22x16xf32, #tpu.memory_space<vmem>>, vector<1x1x16x16xf32>
    %439 = vector.shape_cast %438 : vector<1x1x16x16xf32> to vector<16x16xf32>
    %440 = vector.broadcast %437 : f32 to vector<16x16xf32>
    %441 = arith.mulf %440, %439 : vector<16x16xf32>
    %442 = arith.addf %436, %441 : vector<16x16xf32>
    %c43 = arith.constant 43 : index
    %443 = memref.load %arg5[%c43] : memref<98xf32, #tpu.memory_space<smem>>
    %c0_254 = arith.constant 0 : index
    %c1_255 = arith.constant 1 : index
    %c6_256 = arith.constant 6 : index
    %c0_257 = arith.constant 0 : index
    %444 = vector.load %arg8[%c0_254, %c1_255, %c6_256, %c0_257] : memref<2x7x22x16xf32, #tpu.memory_space<vmem>>, vector<1x1x16x16xf32>
    %445 = vector.shape_cast %444 : vector<1x1x16x16xf32> to vector<16x16xf32>
    %446 = vector.broadcast %443 : f32 to vector<16x16xf32>
    %447 = arith.mulf %446, %445 : vector<16x16xf32>
    %448 = arith.addf %442, %447 : vector<16x16xf32>
    %c44 = arith.constant 44 : index
    %449 = memref.load %arg5[%c44] : memref<98xf32, #tpu.memory_space<smem>>
    %c0_258 = arith.constant 0 : index
    %c2_259 = arith.constant 2 : index
    %c6_260 = arith.constant 6 : index
    %c0_261 = arith.constant 0 : index
    %450 = vector.load %arg8[%c0_258, %c2_259, %c6_260, %c0_261] : memref<2x7x22x16xf32, #tpu.memory_space<vmem>>, vector<1x1x16x16xf32>
    %451 = vector.shape_cast %450 : vector<1x1x16x16xf32> to vector<16x16xf32>
    %452 = vector.broadcast %449 : f32 to vector<16x16xf32>
    %453 = arith.mulf %452, %451 : vector<16x16xf32>
    %454 = arith.addf %448, %453 : vector<16x16xf32>
    %c45 = arith.constant 45 : index
    %455 = memref.load %arg5[%c45] : memref<98xf32, #tpu.memory_space<smem>>
    %c0_262 = arith.constant 0 : index
    %c3_263 = arith.constant 3 : index
    %c6_264 = arith.constant 6 : index
    %c0_265 = arith.constant 0 : index
    %456 = vector.load %arg8[%c0_262, %c3_263, %c6_264, %c0_265] : memref<2x7x22x16xf32, #tpu.memory_space<vmem>>, vector<1x1x16x16xf32>
    %457 = vector.shape_cast %456 : vector<1x1x16x16xf32> to vector<16x16xf32>
    %458 = vector.broadcast %455 : f32 to vector<16x16xf32>
    %459 = arith.mulf %458, %457 : vector<16x16xf32>
    %460 = arith.addf %454, %459 : vector<16x16xf32>
    %c46 = arith.constant 46 : index
    %461 = memref.load %arg5[%c46] : memref<98xf32, #tpu.memory_space<smem>>
    %c0_266 = arith.constant 0 : index
    %c4_267 = arith.constant 4 : index
    %c6_268 = arith.constant 6 : index
    %c0_269 = arith.constant 0 : index
    %462 = vector.load %arg8[%c0_266, %c4_267, %c6_268, %c0_269] : memref<2x7x22x16xf32, #tpu.memory_space<vmem>>, vector<1x1x16x16xf32>
    %463 = vector.shape_cast %462 : vector<1x1x16x16xf32> to vector<16x16xf32>
    %464 = vector.broadcast %461 : f32 to vector<16x16xf32>
    %465 = arith.mulf %464, %463 : vector<16x16xf32>
    %466 = arith.addf %460, %465 : vector<16x16xf32>
    %c47 = arith.constant 47 : index
    %467 = memref.load %arg5[%c47] : memref<98xf32, #tpu.memory_space<smem>>
    %c0_270 = arith.constant 0 : index
    %c5_271 = arith.constant 5 : index
    %c6_272 = arith.constant 6 : index
    %c0_273 = arith.constant 0 : index
    %468 = vector.load %arg8[%c0_270, %c5_271, %c6_272, %c0_273] : memref<2x7x22x16xf32, #tpu.memory_space<vmem>>, vector<1x1x16x16xf32>
    %469 = vector.shape_cast %468 : vector<1x1x16x16xf32> to vector<16x16xf32>
    %470 = vector.broadcast %467 : f32 to vector<16x16xf32>
    %471 = arith.mulf %470, %469 : vector<16x16xf32>
    %472 = arith.addf %466, %471 : vector<16x16xf32>
    %c48 = arith.constant 48 : index
    %473 = memref.load %arg5[%c48] : memref<98xf32, #tpu.memory_space<smem>>
    %c0_274 = arith.constant 0 : index
    %c6_275 = arith.constant 6 : index
    %c6_276 = arith.constant 6 : index
    %c0_277 = arith.constant 0 : index
    %474 = vector.load %arg8[%c0_274, %c6_275, %c6_276, %c0_277] : memref<2x7x22x16xf32, #tpu.memory_space<vmem>>, vector<1x1x16x16xf32>
    %475 = vector.shape_cast %474 : vector<1x1x16x16xf32> to vector<16x16xf32>
    %476 = vector.broadcast %473 : f32 to vector<16x16xf32>
    %477 = arith.mulf %476, %475 : vector<16x16xf32>
    %478 = arith.addf %472, %477 : vector<16x16xf32>
    %c49 = arith.constant 49 : index
    %479 = memref.load %arg5[%c49] : memref<98xf32, #tpu.memory_space<smem>>
    %c1_278 = arith.constant 1 : index
    %c0_279 = arith.constant 0 : index
    %c0_280 = arith.constant 0 : index
    %c0_281 = arith.constant 0 : index
    %480 = vector.load %arg8[%c1_278, %c0_279, %c0_280, %c0_281] : memref<2x7x22x16xf32, #tpu.memory_space<vmem>>, vector<1x1x16x16xf32>
    %481 = vector.shape_cast %480 : vector<1x1x16x16xf32> to vector<16x16xf32>
    %482 = vector.broadcast %479 : f32 to vector<16x16xf32>
    %483 = arith.mulf %482, %481 : vector<16x16xf32>
    %484 = arith.addf %478, %483 : vector<16x16xf32>
    %c50 = arith.constant 50 : index
    %485 = memref.load %arg5[%c50] : memref<98xf32, #tpu.memory_space<smem>>
    %c1_282 = arith.constant 1 : index
    %c1_283 = arith.constant 1 : index
    %c0_284 = arith.constant 0 : index
    %c0_285 = arith.constant 0 : index
    %486 = vector.load %arg8[%c1_282, %c1_283, %c0_284, %c0_285] : memref<2x7x22x16xf32, #tpu.memory_space<vmem>>, vector<1x1x16x16xf32>
    %487 = vector.shape_cast %486 : vector<1x1x16x16xf32> to vector<16x16xf32>
    %488 = vector.broadcast %485 : f32 to vector<16x16xf32>
    %489 = arith.mulf %488, %487 : vector<16x16xf32>
    %490 = arith.addf %484, %489 : vector<16x16xf32>
    %c51 = arith.constant 51 : index
    %491 = memref.load %arg5[%c51] : memref<98xf32, #tpu.memory_space<smem>>
    %c1_286 = arith.constant 1 : index
    %c2_287 = arith.constant 2 : index
    %c0_288 = arith.constant 0 : index
    %c0_289 = arith.constant 0 : index
    %492 = vector.load %arg8[%c1_286, %c2_287, %c0_288, %c0_289] : memref<2x7x22x16xf32, #tpu.memory_space<vmem>>, vector<1x1x16x16xf32>
    %493 = vector.shape_cast %492 : vector<1x1x16x16xf32> to vector<16x16xf32>
    %494 = vector.broadcast %491 : f32 to vector<16x16xf32>
    %495 = arith.mulf %494, %493 : vector<16x16xf32>
    %496 = arith.addf %490, %495 : vector<16x16xf32>
    %c52 = arith.constant 52 : index
    %497 = memref.load %arg5[%c52] : memref<98xf32, #tpu.memory_space<smem>>
    %c1_290 = arith.constant 1 : index
    %c3_291 = arith.constant 3 : index
    %c0_292 = arith.constant 0 : index
    %c0_293 = arith.constant 0 : index
    %498 = vector.load %arg8[%c1_290, %c3_291, %c0_292, %c0_293] : memref<2x7x22x16xf32, #tpu.memory_space<vmem>>, vector<1x1x16x16xf32>
    %499 = vector.shape_cast %498 : vector<1x1x16x16xf32> to vector<16x16xf32>
    %500 = vector.broadcast %497 : f32 to vector<16x16xf32>
    %501 = arith.mulf %500, %499 : vector<16x16xf32>
    %502 = arith.addf %496, %501 : vector<16x16xf32>
    %c53 = arith.constant 53 : index
    %503 = memref.load %arg5[%c53] : memref<98xf32, #tpu.memory_space<smem>>
    %c1_294 = arith.constant 1 : index
    %c4_295 = arith.constant 4 : index
    %c0_296 = arith.constant 0 : index
    %c0_297 = arith.constant 0 : index
    %504 = vector.load %arg8[%c1_294, %c4_295, %c0_296, %c0_297] : memref<2x7x22x16xf32, #tpu.memory_space<vmem>>, vector<1x1x16x16xf32>
    %505 = vector.shape_cast %504 : vector<1x1x16x16xf32> to vector<16x16xf32>
    %506 = vector.broadcast %503 : f32 to vector<16x16xf32>
    %507 = arith.mulf %506, %505 : vector<16x16xf32>
    %508 = arith.addf %502, %507 : vector<16x16xf32>
    %c54 = arith.constant 54 : index
    %509 = memref.load %arg5[%c54] : memref<98xf32, #tpu.memory_space<smem>>
    %c1_298 = arith.constant 1 : index
    %c5_299 = arith.constant 5 : index
    %c0_300 = arith.constant 0 : index
    %c0_301 = arith.constant 0 : index
    %510 = vector.load %arg8[%c1_298, %c5_299, %c0_300, %c0_301] : memref<2x7x22x16xf32, #tpu.memory_space<vmem>>, vector<1x1x16x16xf32>
    %511 = vector.shape_cast %510 : vector<1x1x16x16xf32> to vector<16x16xf32>
    %512 = vector.broadcast %509 : f32 to vector<16x16xf32>
    %513 = arith.mulf %512, %511 : vector<16x16xf32>
    %514 = arith.addf %508, %513 : vector<16x16xf32>
    %c55 = arith.constant 55 : index
    %515 = memref.load %arg5[%c55] : memref<98xf32, #tpu.memory_space<smem>>
    %c1_302 = arith.constant 1 : index
    %c6_303 = arith.constant 6 : index
    %c0_304 = arith.constant 0 : index
    %c0_305 = arith.constant 0 : index
    %516 = vector.load %arg8[%c1_302, %c6_303, %c0_304, %c0_305] : memref<2x7x22x16xf32, #tpu.memory_space<vmem>>, vector<1x1x16x16xf32>
    %517 = vector.shape_cast %516 : vector<1x1x16x16xf32> to vector<16x16xf32>
    %518 = vector.broadcast %515 : f32 to vector<16x16xf32>
    %519 = arith.mulf %518, %517 : vector<16x16xf32>
    %520 = arith.addf %514, %519 : vector<16x16xf32>
    %c56 = arith.constant 56 : index
    %521 = memref.load %arg5[%c56] : memref<98xf32, #tpu.memory_space<smem>>
    %c1_306 = arith.constant 1 : index
    %c0_307 = arith.constant 0 : index
    %c1_308 = arith.constant 1 : index
    %c0_309 = arith.constant 0 : index
    %522 = vector.load %arg8[%c1_306, %c0_307, %c1_308, %c0_309] : memref<2x7x22x16xf32, #tpu.memory_space<vmem>>, vector<1x1x16x16xf32>
    %523 = vector.shape_cast %522 : vector<1x1x16x16xf32> to vector<16x16xf32>
    %524 = vector.broadcast %521 : f32 to vector<16x16xf32>
    %525 = arith.mulf %524, %523 : vector<16x16xf32>
    %526 = arith.addf %520, %525 : vector<16x16xf32>
    %c57 = arith.constant 57 : index
    %527 = memref.load %arg5[%c57] : memref<98xf32, #tpu.memory_space<smem>>
    %c1_310 = arith.constant 1 : index
    %c1_311 = arith.constant 1 : index
    %c1_312 = arith.constant 1 : index
    %c0_313 = arith.constant 0 : index
    %528 = vector.load %arg8[%c1_310, %c1_311, %c1_312, %c0_313] : memref<2x7x22x16xf32, #tpu.memory_space<vmem>>, vector<1x1x16x16xf32>
    %529 = vector.shape_cast %528 : vector<1x1x16x16xf32> to vector<16x16xf32>
    %530 = vector.broadcast %527 : f32 to vector<16x16xf32>
    %531 = arith.mulf %530, %529 : vector<16x16xf32>
    %532 = arith.addf %526, %531 : vector<16x16xf32>
    %c58 = arith.constant 58 : index
    %533 = memref.load %arg5[%c58] : memref<98xf32, #tpu.memory_space<smem>>
    %c1_314 = arith.constant 1 : index
    %c2_315 = arith.constant 2 : index
    %c1_316 = arith.constant 1 : index
    %c0_317 = arith.constant 0 : index
    %534 = vector.load %arg8[%c1_314, %c2_315, %c1_316, %c0_317] : memref<2x7x22x16xf32, #tpu.memory_space<vmem>>, vector<1x1x16x16xf32>
    %535 = vector.shape_cast %534 : vector<1x1x16x16xf32> to vector<16x16xf32>
    %536 = vector.broadcast %533 : f32 to vector<16x16xf32>
    %537 = arith.mulf %536, %535 : vector<16x16xf32>
    %538 = arith.addf %532, %537 : vector<16x16xf32>
    %c59 = arith.constant 59 : index
    %539 = memref.load %arg5[%c59] : memref<98xf32, #tpu.memory_space<smem>>
    %c1_318 = arith.constant 1 : index
    %c3_319 = arith.constant 3 : index
    %c1_320 = arith.constant 1 : index
    %c0_321 = arith.constant 0 : index
    %540 = vector.load %arg8[%c1_318, %c3_319, %c1_320, %c0_321] : memref<2x7x22x16xf32, #tpu.memory_space<vmem>>, vector<1x1x16x16xf32>
    %541 = vector.shape_cast %540 : vector<1x1x16x16xf32> to vector<16x16xf32>
    %542 = vector.broadcast %539 : f32 to vector<16x16xf32>
    %543 = arith.mulf %542, %541 : vector<16x16xf32>
    %544 = arith.addf %538, %543 : vector<16x16xf32>
    %c60 = arith.constant 60 : index
    %545 = memref.load %arg5[%c60] : memref<98xf32, #tpu.memory_space<smem>>
    %c1_322 = arith.constant 1 : index
    %c4_323 = arith.constant 4 : index
    %c1_324 = arith.constant 1 : index
    %c0_325 = arith.constant 0 : index
    %546 = vector.load %arg8[%c1_322, %c4_323, %c1_324, %c0_325] : memref<2x7x22x16xf32, #tpu.memory_space<vmem>>, vector<1x1x16x16xf32>
    %547 = vector.shape_cast %546 : vector<1x1x16x16xf32> to vector<16x16xf32>
    %548 = vector.broadcast %545 : f32 to vector<16x16xf32>
    %549 = arith.mulf %548, %547 : vector<16x16xf32>
    %550 = arith.addf %544, %549 : vector<16x16xf32>
    %c61 = arith.constant 61 : index
    %551 = memref.load %arg5[%c61] : memref<98xf32, #tpu.memory_space<smem>>
    %c1_326 = arith.constant 1 : index
    %c5_327 = arith.constant 5 : index
    %c1_328 = arith.constant 1 : index
    %c0_329 = arith.constant 0 : index
    %552 = vector.load %arg8[%c1_326, %c5_327, %c1_328, %c0_329] : memref<2x7x22x16xf32, #tpu.memory_space<vmem>>, vector<1x1x16x16xf32>
    %553 = vector.shape_cast %552 : vector<1x1x16x16xf32> to vector<16x16xf32>
    %554 = vector.broadcast %551 : f32 to vector<16x16xf32>
    %555 = arith.mulf %554, %553 : vector<16x16xf32>
    %556 = arith.addf %550, %555 : vector<16x16xf32>
    %c62 = arith.constant 62 : index
    %557 = memref.load %arg5[%c62] : memref<98xf32, #tpu.memory_space<smem>>
    %c1_330 = arith.constant 1 : index
    %c6_331 = arith.constant 6 : index
    %c1_332 = arith.constant 1 : index
    %c0_333 = arith.constant 0 : index
    %558 = vector.load %arg8[%c1_330, %c6_331, %c1_332, %c0_333] : memref<2x7x22x16xf32, #tpu.memory_space<vmem>>, vector<1x1x16x16xf32>
    %559 = vector.shape_cast %558 : vector<1x1x16x16xf32> to vector<16x16xf32>
    %560 = vector.broadcast %557 : f32 to vector<16x16xf32>
    %561 = arith.mulf %560, %559 : vector<16x16xf32>
    %562 = arith.addf %556, %561 : vector<16x16xf32>
    %c63 = arith.constant 63 : index
    %563 = memref.load %arg5[%c63] : memref<98xf32, #tpu.memory_space<smem>>
    %c1_334 = arith.constant 1 : index
    %c0_335 = arith.constant 0 : index
    %c2_336 = arith.constant 2 : index
    %c0_337 = arith.constant 0 : index
    %564 = vector.load %arg8[%c1_334, %c0_335, %c2_336, %c0_337] : memref<2x7x22x16xf32, #tpu.memory_space<vmem>>, vector<1x1x16x16xf32>
    %565 = vector.shape_cast %564 : vector<1x1x16x16xf32> to vector<16x16xf32>
    %566 = vector.broadcast %563 : f32 to vector<16x16xf32>
    %567 = arith.mulf %566, %565 : vector<16x16xf32>
    %568 = arith.addf %562, %567 : vector<16x16xf32>
    %c64 = arith.constant 64 : index
    %569 = memref.load %arg5[%c64] : memref<98xf32, #tpu.memory_space<smem>>
    %c1_338 = arith.constant 1 : index
    %c1_339 = arith.constant 1 : index
    %c2_340 = arith.constant 2 : index
    %c0_341 = arith.constant 0 : index
    %570 = vector.load %arg8[%c1_338, %c1_339, %c2_340, %c0_341] : memref<2x7x22x16xf32, #tpu.memory_space<vmem>>, vector<1x1x16x16xf32>
    %571 = vector.shape_cast %570 : vector<1x1x16x16xf32> to vector<16x16xf32>
    %572 = vector.broadcast %569 : f32 to vector<16x16xf32>
    %573 = arith.mulf %572, %571 : vector<16x16xf32>
    %574 = arith.addf %568, %573 : vector<16x16xf32>
    %c65 = arith.constant 65 : index
    %575 = memref.load %arg5[%c65] : memref<98xf32, #tpu.memory_space<smem>>
    %c1_342 = arith.constant 1 : index
    %c2_343 = arith.constant 2 : index
    %c2_344 = arith.constant 2 : index
    %c0_345 = arith.constant 0 : index
    %576 = vector.load %arg8[%c1_342, %c2_343, %c2_344, %c0_345] : memref<2x7x22x16xf32, #tpu.memory_space<vmem>>, vector<1x1x16x16xf32>
    %577 = vector.shape_cast %576 : vector<1x1x16x16xf32> to vector<16x16xf32>
    %578 = vector.broadcast %575 : f32 to vector<16x16xf32>
    %579 = arith.mulf %578, %577 : vector<16x16xf32>
    %580 = arith.addf %574, %579 : vector<16x16xf32>
    %c66 = arith.constant 66 : index
    %581 = memref.load %arg5[%c66] : memref<98xf32, #tpu.memory_space<smem>>
    %c1_346 = arith.constant 1 : index
    %c3_347 = arith.constant 3 : index
    %c2_348 = arith.constant 2 : index
    %c0_349 = arith.constant 0 : index
    %582 = vector.load %arg8[%c1_346, %c3_347, %c2_348, %c0_349] : memref<2x7x22x16xf32, #tpu.memory_space<vmem>>, vector<1x1x16x16xf32>
    %583 = vector.shape_cast %582 : vector<1x1x16x16xf32> to vector<16x16xf32>
    %584 = vector.broadcast %581 : f32 to vector<16x16xf32>
    %585 = arith.mulf %584, %583 : vector<16x16xf32>
    %586 = arith.addf %580, %585 : vector<16x16xf32>
    %c67 = arith.constant 67 : index
    %587 = memref.load %arg5[%c67] : memref<98xf32, #tpu.memory_space<smem>>
    %c1_350 = arith.constant 1 : index
    %c4_351 = arith.constant 4 : index
    %c2_352 = arith.constant 2 : index
    %c0_353 = arith.constant 0 : index
    %588 = vector.load %arg8[%c1_350, %c4_351, %c2_352, %c0_353] : memref<2x7x22x16xf32, #tpu.memory_space<vmem>>, vector<1x1x16x16xf32>
    %589 = vector.shape_cast %588 : vector<1x1x16x16xf32> to vector<16x16xf32>
    %590 = vector.broadcast %587 : f32 to vector<16x16xf32>
    %591 = arith.mulf %590, %589 : vector<16x16xf32>
    %592 = arith.addf %586, %591 : vector<16x16xf32>
    %c68 = arith.constant 68 : index
    %593 = memref.load %arg5[%c68] : memref<98xf32, #tpu.memory_space<smem>>
    %c1_354 = arith.constant 1 : index
    %c5_355 = arith.constant 5 : index
    %c2_356 = arith.constant 2 : index
    %c0_357 = arith.constant 0 : index
    %594 = vector.load %arg8[%c1_354, %c5_355, %c2_356, %c0_357] : memref<2x7x22x16xf32, #tpu.memory_space<vmem>>, vector<1x1x16x16xf32>
    %595 = vector.shape_cast %594 : vector<1x1x16x16xf32> to vector<16x16xf32>
    %596 = vector.broadcast %593 : f32 to vector<16x16xf32>
    %597 = arith.mulf %596, %595 : vector<16x16xf32>
    %598 = arith.addf %592, %597 : vector<16x16xf32>
    %c69 = arith.constant 69 : index
    %599 = memref.load %arg5[%c69] : memref<98xf32, #tpu.memory_space<smem>>
    %c1_358 = arith.constant 1 : index
    %c6_359 = arith.constant 6 : index
    %c2_360 = arith.constant 2 : index
    %c0_361 = arith.constant 0 : index
    %600 = vector.load %arg8[%c1_358, %c6_359, %c2_360, %c0_361] : memref<2x7x22x16xf32, #tpu.memory_space<vmem>>, vector<1x1x16x16xf32>
    %601 = vector.shape_cast %600 : vector<1x1x16x16xf32> to vector<16x16xf32>
    %602 = vector.broadcast %599 : f32 to vector<16x16xf32>
    %603 = arith.mulf %602, %601 : vector<16x16xf32>
    %604 = arith.addf %598, %603 : vector<16x16xf32>
    %c70 = arith.constant 70 : index
    %605 = memref.load %arg5[%c70] : memref<98xf32, #tpu.memory_space<smem>>
    %c1_362 = arith.constant 1 : index
    %c0_363 = arith.constant 0 : index
    %c3_364 = arith.constant 3 : index
    %c0_365 = arith.constant 0 : index
    %606 = vector.load %arg8[%c1_362, %c0_363, %c3_364, %c0_365] : memref<2x7x22x16xf32, #tpu.memory_space<vmem>>, vector<1x1x16x16xf32>
    %607 = vector.shape_cast %606 : vector<1x1x16x16xf32> to vector<16x16xf32>
    %608 = vector.broadcast %605 : f32 to vector<16x16xf32>
    %609 = arith.mulf %608, %607 : vector<16x16xf32>
    %610 = arith.addf %604, %609 : vector<16x16xf32>
    %c71 = arith.constant 71 : index
    %611 = memref.load %arg5[%c71] : memref<98xf32, #tpu.memory_space<smem>>
    %c1_366 = arith.constant 1 : index
    %c1_367 = arith.constant 1 : index
    %c3_368 = arith.constant 3 : index
    %c0_369 = arith.constant 0 : index
    %612 = vector.load %arg8[%c1_366, %c1_367, %c3_368, %c0_369] : memref<2x7x22x16xf32, #tpu.memory_space<vmem>>, vector<1x1x16x16xf32>
    %613 = vector.shape_cast %612 : vector<1x1x16x16xf32> to vector<16x16xf32>
    %614 = vector.broadcast %611 : f32 to vector<16x16xf32>
    %615 = arith.mulf %614, %613 : vector<16x16xf32>
    %616 = arith.addf %610, %615 : vector<16x16xf32>
    %c72 = arith.constant 72 : index
    %617 = memref.load %arg5[%c72] : memref<98xf32, #tpu.memory_space<smem>>
    %c1_370 = arith.constant 1 : index
    %c2_371 = arith.constant 2 : index
    %c3_372 = arith.constant 3 : index
    %c0_373 = arith.constant 0 : index
    %618 = vector.load %arg8[%c1_370, %c2_371, %c3_372, %c0_373] : memref<2x7x22x16xf32, #tpu.memory_space<vmem>>, vector<1x1x16x16xf32>
    %619 = vector.shape_cast %618 : vector<1x1x16x16xf32> to vector<16x16xf32>
    %620 = vector.broadcast %617 : f32 to vector<16x16xf32>
    %621 = arith.mulf %620, %619 : vector<16x16xf32>
    %622 = arith.addf %616, %621 : vector<16x16xf32>
    %c73 = arith.constant 73 : index
    %623 = memref.load %arg5[%c73] : memref<98xf32, #tpu.memory_space<smem>>
    %c1_374 = arith.constant 1 : index
    %c3_375 = arith.constant 3 : index
    %c3_376 = arith.constant 3 : index
    %c0_377 = arith.constant 0 : index
    %624 = vector.load %arg8[%c1_374, %c3_375, %c3_376, %c0_377] : memref<2x7x22x16xf32, #tpu.memory_space<vmem>>, vector<1x1x16x16xf32>
    %625 = vector.shape_cast %624 : vector<1x1x16x16xf32> to vector<16x16xf32>
    %626 = vector.broadcast %623 : f32 to vector<16x16xf32>
    %627 = arith.mulf %626, %625 : vector<16x16xf32>
    %628 = arith.addf %622, %627 : vector<16x16xf32>
    %c74 = arith.constant 74 : index
    %629 = memref.load %arg5[%c74] : memref<98xf32, #tpu.memory_space<smem>>
    %c1_378 = arith.constant 1 : index
    %c4_379 = arith.constant 4 : index
    %c3_380 = arith.constant 3 : index
    %c0_381 = arith.constant 0 : index
    %630 = vector.load %arg8[%c1_378, %c4_379, %c3_380, %c0_381] : memref<2x7x22x16xf32, #tpu.memory_space<vmem>>, vector<1x1x16x16xf32>
    %631 = vector.shape_cast %630 : vector<1x1x16x16xf32> to vector<16x16xf32>
    %632 = vector.broadcast %629 : f32 to vector<16x16xf32>
    %633 = arith.mulf %632, %631 : vector<16x16xf32>
    %634 = arith.addf %628, %633 : vector<16x16xf32>
    %c75 = arith.constant 75 : index
    %635 = memref.load %arg5[%c75] : memref<98xf32, #tpu.memory_space<smem>>
    %c1_382 = arith.constant 1 : index
    %c5_383 = arith.constant 5 : index
    %c3_384 = arith.constant 3 : index
    %c0_385 = arith.constant 0 : index
    %636 = vector.load %arg8[%c1_382, %c5_383, %c3_384, %c0_385] : memref<2x7x22x16xf32, #tpu.memory_space<vmem>>, vector<1x1x16x16xf32>
    %637 = vector.shape_cast %636 : vector<1x1x16x16xf32> to vector<16x16xf32>
    %638 = vector.broadcast %635 : f32 to vector<16x16xf32>
    %639 = arith.mulf %638, %637 : vector<16x16xf32>
    %640 = arith.addf %634, %639 : vector<16x16xf32>
    %c76 = arith.constant 76 : index
    %641 = memref.load %arg5[%c76] : memref<98xf32, #tpu.memory_space<smem>>
    %c1_386 = arith.constant 1 : index
    %c6_387 = arith.constant 6 : index
    %c3_388 = arith.constant 3 : index
    %c0_389 = arith.constant 0 : index
    %642 = vector.load %arg8[%c1_386, %c6_387, %c3_388, %c0_389] : memref<2x7x22x16xf32, #tpu.memory_space<vmem>>, vector<1x1x16x16xf32>
    %643 = vector.shape_cast %642 : vector<1x1x16x16xf32> to vector<16x16xf32>
    %644 = vector.broadcast %641 : f32 to vector<16x16xf32>
    %645 = arith.mulf %644, %643 : vector<16x16xf32>
    %646 = arith.addf %640, %645 : vector<16x16xf32>
    %c77 = arith.constant 77 : index
    %647 = memref.load %arg5[%c77] : memref<98xf32, #tpu.memory_space<smem>>
    %c1_390 = arith.constant 1 : index
    %c0_391 = arith.constant 0 : index
    %c4_392 = arith.constant 4 : index
    %c0_393 = arith.constant 0 : index
    %648 = vector.load %arg8[%c1_390, %c0_391, %c4_392, %c0_393] : memref<2x7x22x16xf32, #tpu.memory_space<vmem>>, vector<1x1x16x16xf32>
    %649 = vector.shape_cast %648 : vector<1x1x16x16xf32> to vector<16x16xf32>
    %650 = vector.broadcast %647 : f32 to vector<16x16xf32>
    %651 = arith.mulf %650, %649 : vector<16x16xf32>
    %652 = arith.addf %646, %651 : vector<16x16xf32>
    %c78 = arith.constant 78 : index
    %653 = memref.load %arg5[%c78] : memref<98xf32, #tpu.memory_space<smem>>
    %c1_394 = arith.constant 1 : index
    %c1_395 = arith.constant 1 : index
    %c4_396 = arith.constant 4 : index
    %c0_397 = arith.constant 0 : index
    %654 = vector.load %arg8[%c1_394, %c1_395, %c4_396, %c0_397] : memref<2x7x22x16xf32, #tpu.memory_space<vmem>>, vector<1x1x16x16xf32>
    %655 = vector.shape_cast %654 : vector<1x1x16x16xf32> to vector<16x16xf32>
    %656 = vector.broadcast %653 : f32 to vector<16x16xf32>
    %657 = arith.mulf %656, %655 : vector<16x16xf32>
    %658 = arith.addf %652, %657 : vector<16x16xf32>
    %c79 = arith.constant 79 : index
    %659 = memref.load %arg5[%c79] : memref<98xf32, #tpu.memory_space<smem>>
    %c1_398 = arith.constant 1 : index
    %c2_399 = arith.constant 2 : index
    %c4_400 = arith.constant 4 : index
    %c0_401 = arith.constant 0 : index
    %660 = vector.load %arg8[%c1_398, %c2_399, %c4_400, %c0_401] : memref<2x7x22x16xf32, #tpu.memory_space<vmem>>, vector<1x1x16x16xf32>
    %661 = vector.shape_cast %660 : vector<1x1x16x16xf32> to vector<16x16xf32>
    %662 = vector.broadcast %659 : f32 to vector<16x16xf32>
    %663 = arith.mulf %662, %661 : vector<16x16xf32>
    %664 = arith.addf %658, %663 : vector<16x16xf32>
    %c80 = arith.constant 80 : index
    %665 = memref.load %arg5[%c80] : memref<98xf32, #tpu.memory_space<smem>>
    %c1_402 = arith.constant 1 : index
    %c3_403 = arith.constant 3 : index
    %c4_404 = arith.constant 4 : index
    %c0_405 = arith.constant 0 : index
    %666 = vector.load %arg8[%c1_402, %c3_403, %c4_404, %c0_405] : memref<2x7x22x16xf32, #tpu.memory_space<vmem>>, vector<1x1x16x16xf32>
    %667 = vector.shape_cast %666 : vector<1x1x16x16xf32> to vector<16x16xf32>
    %668 = vector.broadcast %665 : f32 to vector<16x16xf32>
    %669 = arith.mulf %668, %667 : vector<16x16xf32>
    %670 = arith.addf %664, %669 : vector<16x16xf32>
    %c81 = arith.constant 81 : index
    %671 = memref.load %arg5[%c81] : memref<98xf32, #tpu.memory_space<smem>>
    %c1_406 = arith.constant 1 : index
    %c4_407 = arith.constant 4 : index
    %c4_408 = arith.constant 4 : index
    %c0_409 = arith.constant 0 : index
    %672 = vector.load %arg8[%c1_406, %c4_407, %c4_408, %c0_409] : memref<2x7x22x16xf32, #tpu.memory_space<vmem>>, vector<1x1x16x16xf32>
    %673 = vector.shape_cast %672 : vector<1x1x16x16xf32> to vector<16x16xf32>
    %674 = vector.broadcast %671 : f32 to vector<16x16xf32>
    %675 = arith.mulf %674, %673 : vector<16x16xf32>
    %676 = arith.addf %670, %675 : vector<16x16xf32>
    %c82 = arith.constant 82 : index
    %677 = memref.load %arg5[%c82] : memref<98xf32, #tpu.memory_space<smem>>
    %c1_410 = arith.constant 1 : index
    %c5_411 = arith.constant 5 : index
    %c4_412 = arith.constant 4 : index
    %c0_413 = arith.constant 0 : index
    %678 = vector.load %arg8[%c1_410, %c5_411, %c4_412, %c0_413] : memref<2x7x22x16xf32, #tpu.memory_space<vmem>>, vector<1x1x16x16xf32>
    %679 = vector.shape_cast %678 : vector<1x1x16x16xf32> to vector<16x16xf32>
    %680 = vector.broadcast %677 : f32 to vector<16x16xf32>
    %681 = arith.mulf %680, %679 : vector<16x16xf32>
    %682 = arith.addf %676, %681 : vector<16x16xf32>
    %c83 = arith.constant 83 : index
    %683 = memref.load %arg5[%c83] : memref<98xf32, #tpu.memory_space<smem>>
    %c1_414 = arith.constant 1 : index
    %c6_415 = arith.constant 6 : index
    %c4_416 = arith.constant 4 : index
    %c0_417 = arith.constant 0 : index
    %684 = vector.load %arg8[%c1_414, %c6_415, %c4_416, %c0_417] : memref<2x7x22x16xf32, #tpu.memory_space<vmem>>, vector<1x1x16x16xf32>
    %685 = vector.shape_cast %684 : vector<1x1x16x16xf32> to vector<16x16xf32>
    %686 = vector.broadcast %683 : f32 to vector<16x16xf32>
    %687 = arith.mulf %686, %685 : vector<16x16xf32>
    %688 = arith.addf %682, %687 : vector<16x16xf32>
    %c84 = arith.constant 84 : index
    %689 = memref.load %arg5[%c84] : memref<98xf32, #tpu.memory_space<smem>>
    %c1_418 = arith.constant 1 : index
    %c0_419 = arith.constant 0 : index
    %c5_420 = arith.constant 5 : index
    %c0_421 = arith.constant 0 : index
    %690 = vector.load %arg8[%c1_418, %c0_419, %c5_420, %c0_421] : memref<2x7x22x16xf32, #tpu.memory_space<vmem>>, vector<1x1x16x16xf32>
    %691 = vector.shape_cast %690 : vector<1x1x16x16xf32> to vector<16x16xf32>
    %692 = vector.broadcast %689 : f32 to vector<16x16xf32>
    %693 = arith.mulf %692, %691 : vector<16x16xf32>
    %694 = arith.addf %688, %693 : vector<16x16xf32>
    %c85 = arith.constant 85 : index
    %695 = memref.load %arg5[%c85] : memref<98xf32, #tpu.memory_space<smem>>
    %c1_422 = arith.constant 1 : index
    %c1_423 = arith.constant 1 : index
    %c5_424 = arith.constant 5 : index
    %c0_425 = arith.constant 0 : index
    %696 = vector.load %arg8[%c1_422, %c1_423, %c5_424, %c0_425] : memref<2x7x22x16xf32, #tpu.memory_space<vmem>>, vector<1x1x16x16xf32>
    %697 = vector.shape_cast %696 : vector<1x1x16x16xf32> to vector<16x16xf32>
    %698 = vector.broadcast %695 : f32 to vector<16x16xf32>
    %699 = arith.mulf %698, %697 : vector<16x16xf32>
    %700 = arith.addf %694, %699 : vector<16x16xf32>
    %c86 = arith.constant 86 : index
    %701 = memref.load %arg5[%c86] : memref<98xf32, #tpu.memory_space<smem>>
    %c1_426 = arith.constant 1 : index
    %c2_427 = arith.constant 2 : index
    %c5_428 = arith.constant 5 : index
    %c0_429 = arith.constant 0 : index
    %702 = vector.load %arg8[%c1_426, %c2_427, %c5_428, %c0_429] : memref<2x7x22x16xf32, #tpu.memory_space<vmem>>, vector<1x1x16x16xf32>
    %703 = vector.shape_cast %702 : vector<1x1x16x16xf32> to vector<16x16xf32>
    %704 = vector.broadcast %701 : f32 to vector<16x16xf32>
    %705 = arith.mulf %704, %703 : vector<16x16xf32>
    %706 = arith.addf %700, %705 : vector<16x16xf32>
    %c87 = arith.constant 87 : index
    %707 = memref.load %arg5[%c87] : memref<98xf32, #tpu.memory_space<smem>>
    %c1_430 = arith.constant 1 : index
    %c3_431 = arith.constant 3 : index
    %c5_432 = arith.constant 5 : index
    %c0_433 = arith.constant 0 : index
    %708 = vector.load %arg8[%c1_430, %c3_431, %c5_432, %c0_433] : memref<2x7x22x16xf32, #tpu.memory_space<vmem>>, vector<1x1x16x16xf32>
    %709 = vector.shape_cast %708 : vector<1x1x16x16xf32> to vector<16x16xf32>
    %710 = vector.broadcast %707 : f32 to vector<16x16xf32>
    %711 = arith.mulf %710, %709 : vector<16x16xf32>
    %712 = arith.addf %706, %711 : vector<16x16xf32>
    %c88 = arith.constant 88 : index
    %713 = memref.load %arg5[%c88] : memref<98xf32, #tpu.memory_space<smem>>
    %c1_434 = arith.constant 1 : index
    %c4_435 = arith.constant 4 : index
    %c5_436 = arith.constant 5 : index
    %c0_437 = arith.constant 0 : index
    %714 = vector.load %arg8[%c1_434, %c4_435, %c5_436, %c0_437] : memref<2x7x22x16xf32, #tpu.memory_space<vmem>>, vector<1x1x16x16xf32>
    %715 = vector.shape_cast %714 : vector<1x1x16x16xf32> to vector<16x16xf32>
    %716 = vector.broadcast %713 : f32 to vector<16x16xf32>
    %717 = arith.mulf %716, %715 : vector<16x16xf32>
    %718 = arith.addf %712, %717 : vector<16x16xf32>
    %c89 = arith.constant 89 : index
    %719 = memref.load %arg5[%c89] : memref<98xf32, #tpu.memory_space<smem>>
    %c1_438 = arith.constant 1 : index
    %c5_439 = arith.constant 5 : index
    %c5_440 = arith.constant 5 : index
    %c0_441 = arith.constant 0 : index
    %720 = vector.load %arg8[%c1_438, %c5_439, %c5_440, %c0_441] : memref<2x7x22x16xf32, #tpu.memory_space<vmem>>, vector<1x1x16x16xf32>
    %721 = vector.shape_cast %720 : vector<1x1x16x16xf32> to vector<16x16xf32>
    %722 = vector.broadcast %719 : f32 to vector<16x16xf32>
    %723 = arith.mulf %722, %721 : vector<16x16xf32>
    %724 = arith.addf %718, %723 : vector<16x16xf32>
    %c90 = arith.constant 90 : index
    %725 = memref.load %arg5[%c90] : memref<98xf32, #tpu.memory_space<smem>>
    %c1_442 = arith.constant 1 : index
    %c6_443 = arith.constant 6 : index
    %c5_444 = arith.constant 5 : index
    %c0_445 = arith.constant 0 : index
    %726 = vector.load %arg8[%c1_442, %c6_443, %c5_444, %c0_445] : memref<2x7x22x16xf32, #tpu.memory_space<vmem>>, vector<1x1x16x16xf32>
    %727 = vector.shape_cast %726 : vector<1x1x16x16xf32> to vector<16x16xf32>
    %728 = vector.broadcast %725 : f32 to vector<16x16xf32>
    %729 = arith.mulf %728, %727 : vector<16x16xf32>
    %730 = arith.addf %724, %729 : vector<16x16xf32>
    %c91 = arith.constant 91 : index
    %731 = memref.load %arg5[%c91] : memref<98xf32, #tpu.memory_space<smem>>
    %c1_446 = arith.constant 1 : index
    %c0_447 = arith.constant 0 : index
    %c6_448 = arith.constant 6 : index
    %c0_449 = arith.constant 0 : index
    %732 = vector.load %arg8[%c1_446, %c0_447, %c6_448, %c0_449] : memref<2x7x22x16xf32, #tpu.memory_space<vmem>>, vector<1x1x16x16xf32>
    %733 = vector.shape_cast %732 : vector<1x1x16x16xf32> to vector<16x16xf32>
    %734 = vector.broadcast %731 : f32 to vector<16x16xf32>
    %735 = arith.mulf %734, %733 : vector<16x16xf32>
    %736 = arith.addf %730, %735 : vector<16x16xf32>
    %c92 = arith.constant 92 : index
    %737 = memref.load %arg5[%c92] : memref<98xf32, #tpu.memory_space<smem>>
    %c1_450 = arith.constant 1 : index
    %c1_451 = arith.constant 1 : index
    %c6_452 = arith.constant 6 : index
    %c0_453 = arith.constant 0 : index
    %738 = vector.load %arg8[%c1_450, %c1_451, %c6_452, %c0_453] : memref<2x7x22x16xf32, #tpu.memory_space<vmem>>, vector<1x1x16x16xf32>
    %739 = vector.shape_cast %738 : vector<1x1x16x16xf32> to vector<16x16xf32>
    %740 = vector.broadcast %737 : f32 to vector<16x16xf32>
    %741 = arith.mulf %740, %739 : vector<16x16xf32>
    %742 = arith.addf %736, %741 : vector<16x16xf32>
    %c93 = arith.constant 93 : index
    %743 = memref.load %arg5[%c93] : memref<98xf32, #tpu.memory_space<smem>>
    %c1_454 = arith.constant 1 : index
    %c2_455 = arith.constant 2 : index
    %c6_456 = arith.constant 6 : index
    %c0_457 = arith.constant 0 : index
    %744 = vector.load %arg8[%c1_454, %c2_455, %c6_456, %c0_457] : memref<2x7x22x16xf32, #tpu.memory_space<vmem>>, vector<1x1x16x16xf32>
    %745 = vector.shape_cast %744 : vector<1x1x16x16xf32> to vector<16x16xf32>
    %746 = vector.broadcast %743 : f32 to vector<16x16xf32>
    %747 = arith.mulf %746, %745 : vector<16x16xf32>
    %748 = arith.addf %742, %747 : vector<16x16xf32>
    %c94 = arith.constant 94 : index
    %749 = memref.load %arg5[%c94] : memref<98xf32, #tpu.memory_space<smem>>
    %c1_458 = arith.constant 1 : index
    %c3_459 = arith.constant 3 : index
    %c6_460 = arith.constant 6 : index
    %c0_461 = arith.constant 0 : index
    %750 = vector.load %arg8[%c1_458, %c3_459, %c6_460, %c0_461] : memref<2x7x22x16xf32, #tpu.memory_space<vmem>>, vector<1x1x16x16xf32>
    %751 = vector.shape_cast %750 : vector<1x1x16x16xf32> to vector<16x16xf32>
    %752 = vector.broadcast %749 : f32 to vector<16x16xf32>
    %753 = arith.mulf %752, %751 : vector<16x16xf32>
    %754 = arith.addf %748, %753 : vector<16x16xf32>
    %c95 = arith.constant 95 : index
    %755 = memref.load %arg5[%c95] : memref<98xf32, #tpu.memory_space<smem>>
    %c1_462 = arith.constant 1 : index
    %c4_463 = arith.constant 4 : index
    %c6_464 = arith.constant 6 : index
    %c0_465 = arith.constant 0 : index
    %756 = vector.load %arg8[%c1_462, %c4_463, %c6_464, %c0_465] : memref<2x7x22x16xf32, #tpu.memory_space<vmem>>, vector<1x1x16x16xf32>
    %757 = vector.shape_cast %756 : vector<1x1x16x16xf32> to vector<16x16xf32>
    %758 = vector.broadcast %755 : f32 to vector<16x16xf32>
    %759 = arith.mulf %758, %757 : vector<16x16xf32>
    %760 = arith.addf %754, %759 : vector<16x16xf32>
    %c96 = arith.constant 96 : index
    %761 = memref.load %arg5[%c96] : memref<98xf32, #tpu.memory_space<smem>>
    %c1_466 = arith.constant 1 : index
    %c5_467 = arith.constant 5 : index
    %c6_468 = arith.constant 6 : index
    %c0_469 = arith.constant 0 : index
    %762 = vector.load %arg8[%c1_466, %c5_467, %c6_468, %c0_469] : memref<2x7x22x16xf32, #tpu.memory_space<vmem>>, vector<1x1x16x16xf32>
    %763 = vector.shape_cast %762 : vector<1x1x16x16xf32> to vector<16x16xf32>
    %764 = vector.broadcast %761 : f32 to vector<16x16xf32>
    %765 = arith.mulf %764, %763 : vector<16x16xf32>
    %766 = arith.addf %760, %765 : vector<16x16xf32>
    %c97 = arith.constant 97 : index
    %767 = memref.load %arg5[%c97] : memref<98xf32, #tpu.memory_space<smem>>
    %c1_470 = arith.constant 1 : index
    %c6_471 = arith.constant 6 : index
    %c6_472 = arith.constant 6 : index
    %c0_473 = arith.constant 0 : index
    %768 = vector.load %arg8[%c1_470, %c6_471, %c6_472, %c0_473] : memref<2x7x22x16xf32, #tpu.memory_space<vmem>>, vector<1x1x16x16xf32>
    %769 = vector.shape_cast %768 : vector<1x1x16x16xf32> to vector<16x16xf32>
    %770 = vector.broadcast %767 : f32 to vector<16x16xf32>
    %771 = arith.mulf %770, %769 : vector<16x16xf32>
    %772 = arith.addf %766, %771 : vector<16x16xf32>
    %773 = arith.negf %772 : vector<16x16xf32>
    %774 = math.exp %773 : vector<16x16xf32>
    %cst_474 = arith.constant 1.000000e+00 : f32
    %775 = vector.broadcast %cst_474 : f32 to vector<16x16xf32>
    %776 = arith.addf %775, %774 : vector<16x16xf32>
    %777 = arith.divf %775, %776 : vector<16x16xf32>
    %778 = vector.extract_strided_slice %777 {offsets = [0, 0], sizes = [1, 16], strides = [1, 1]} : vector<16x16xf32> to vector<1x16xf32>
    %779 = vector.extract_strided_slice %777 {offsets = [1, 0], sizes = [1, 16], strides = [1, 1]} : vector<16x16xf32> to vector<1x16xf32>
    %780 = vector.extract_strided_slice %777 {offsets = [2, 0], sizes = [1, 16], strides = [1, 1]} : vector<16x16xf32> to vector<1x16xf32>
    %781 = vector.extract_strided_slice %777 {offsets = [3, 0], sizes = [1, 16], strides = [1, 1]} : vector<16x16xf32> to vector<1x16xf32>
    %782 = vector.extract_strided_slice %777 {offsets = [4, 0], sizes = [1, 16], strides = [1, 1]} : vector<16x16xf32> to vector<1x16xf32>
    %783 = vector.extract_strided_slice %777 {offsets = [5, 0], sizes = [1, 16], strides = [1, 1]} : vector<16x16xf32> to vector<1x16xf32>
    %784 = vector.extract_strided_slice %777 {offsets = [6, 0], sizes = [1, 16], strides = [1, 1]} : vector<16x16xf32> to vector<1x16xf32>
    %785 = vector.extract_strided_slice %777 {offsets = [7, 0], sizes = [1, 16], strides = [1, 1]} : vector<16x16xf32> to vector<1x16xf32>
    %786 = vector.extract_strided_slice %777 {offsets = [8, 0], sizes = [1, 16], strides = [1, 1]} : vector<16x16xf32> to vector<1x16xf32>
    %787 = vector.extract_strided_slice %777 {offsets = [9, 0], sizes = [1, 16], strides = [1, 1]} : vector<16x16xf32> to vector<1x16xf32>
    %788 = vector.extract_strided_slice %777 {offsets = [10, 0], sizes = [1, 16], strides = [1, 1]} : vector<16x16xf32> to vector<1x16xf32>
    %789 = vector.extract_strided_slice %777 {offsets = [11, 0], sizes = [1, 16], strides = [1, 1]} : vector<16x16xf32> to vector<1x16xf32>
    %790 = vector.extract_strided_slice %777 {offsets = [12, 0], sizes = [1, 16], strides = [1, 1]} : vector<16x16xf32> to vector<1x16xf32>
    %791 = vector.extract_strided_slice %777 {offsets = [13, 0], sizes = [1, 16], strides = [1, 1]} : vector<16x16xf32> to vector<1x16xf32>
    %792 = vector.extract_strided_slice %777 {offsets = [14, 0], sizes = [1, 16], strides = [1, 1]} : vector<16x16xf32> to vector<1x16xf32>
    %793 = vector.extract_strided_slice %777 {offsets = [15, 0], sizes = [1, 16], strides = [1, 1]} : vector<16x16xf32> to vector<1x16xf32>
    %794 = tpu.concatenate %778, %779, %780, %781, %782, %783, %784, %785, %786, %787, %788, %789, %790, %791, %792, %793 in 1 : vector<1x16xf32>, vector<1x16xf32>, vector<1x16xf32>, vector<1x16xf32>, vector<1x16xf32>, vector<1x16xf32>, vector<1x16xf32>, vector<1x16xf32>, vector<1x16xf32>, vector<1x16xf32>, vector<1x16xf32>, vector<1x16xf32>, vector<1x16xf32>, vector<1x16xf32>, vector<1x16xf32>, vector<1x16xf32> -> vector<1x256xf32>
    %795 = vector.broadcast %794 : vector<1x256xf32> to vector<16x256xf32>
    %796 = arith.mulf %50, %795 : vector<16x256xf32>
    %c0_475 = arith.constant 0 : index
    %c0_476 = arith.constant 0 : index
    %c0_477 = arith.constant 0 : index
    %797 = vector.load %arg7[%c0_475, %c0_476, %c0_477] : memref<1x16x256xf32, #tpu.memory_space<vmem>>, vector<1x16x256xf32>
    %798 = vector.shape_cast %797 : vector<1x16x256xf32> to vector<16x256xf32>
    %799 = vector.shape_cast %796 : vector<16x256xf32> to vector<1x16x256xf32>
    tpu.vector_store %arg7[%c0_475, %c0_476, %c0_477], %799 {strides = array<i32>} : memref<1x16x256xf32, #tpu.memory_space<vmem>>, vector<1x16x256xf32>,
    return
  }
  func.func @transform_0(%arg0: i32) -> (i32, i32, i32) {
    %c0_i32 = arith.constant 0 : i32
    %c0_i32_0 = arith.constant 0 : i32
    %c0_i32_1 = arith.constant 0 : i32
    return %arg0, %c0_i32, %c0_i32_0 : i32, i32, i32
  }
  func.func @transform_1(%arg0: i32) -> (i32, i32) {
    %c0_i32 = arith.constant 0 : i32
    %c0_i32_0 = arith.constant 0 : i32
    %c0_i32_1 = arith.constant 0 : i32
    return %c0_i32, %c0_i32_0 : i32, i32
  }
  func.func @transform_2(%arg0: i32) -> (i32, i32) {
    %c0_i32 = arith.constant 0 : i32
    %c0_i32_0 = arith.constant 0 : i32
    %c0_i32_1 = arith.constant 0 : i32
    return %c0_i32, %c0_i32_0 : i32, i32
  }
  func.func @transform_3(%arg0: i32) -> i32 {
    %c0_i32 = arith.constant 0 : i32
    %c0_i32_0 = arith.constant 0 : i32
    return %c0_i32 : i32
  }
  func.func @transform_4(%arg0: i32) -> i32 {
    %c0_i32 = arith.constant 0 : i32
    %c0_i32_0 = arith.constant 0 : i32
    return %c0_i32 : i32
  }
  func.func @transform_5(%arg0: i32) -> i32 {
    %c0_i32 = arith.constant 0 : i32
    %c0_i32_0 = arith.constant 0 : i32
    return %c0_i32 : i32
  }
  func.func @transform_6(%arg0: i32) -> (i32, i32, i32) {
    %c0_i32 = arith.constant 0 : i32
    %c0_i32_0 = arith.constant 0 : i32
    %c0_i32_1 = arith.constant 0 : i32
    return %arg0, %c0_i32, %c0_i32_0 : i32, i32, i32
  }
}

</mosaic_0001>

<llo_original>
// kernel: tpu_custom_call.1
$region0: #{tpu_custom_call.1}
  #allocation0 [shape = 'u32[]', space=smem, size = 0x4, offset = 0x4, fixed_abs, tag = 'smem constant byte address 0x4 - core index']
  #allocation1 [shape = 'u32[144,128]{1,0:T(1,128)}', space=vmem, size = 0x12000, scoped, tag = 'internal scratch']
  #allocation2 [shape = 'f32[2,7,22,16]{3,2,1,0:T(8,128)}', space=vmem, size = 0x2a000, scoped, tag = 'scratch operand']
  #allocation3 [shape = 'f32[1]{0:T(128)S(6)}', space=smem, size = 0x200, scoped, tag = 'scoped memory for tpu_custom_call.1']
  %s0 = inlined_call_operand.hbm [shape: f32[2,16,256], index: 0, kind: input, shape index: {}]
  %s1 = inlined_call_operand.vmem [shape: f32[16,2], index: 1, kind: input, shape index: {}]
  %s2 = inlined_call_operand.vmem [shape: f32[16,3], index: 2, kind: input, shape index: {}]
  %s3 = inlined_call_operand.vmem [shape: f32[2], index: 3, kind: input, shape index: {}]
  %s4 = inlined_call_operand.vmem [shape: f32[98], index: 4, kind: input, shape index: {}]
  %s5 = inlined_call_operand.<no memory space> [shape: f32[1], index: 5, kind: input, shape index: {}]
  %s6 = inlined_call_operand.hbm [shape: f32[2,16,256], index: 6, kind: output, shape index: {}]
  %s7 = sld [smem:[#allocation0]]
  $region69: #{tpu_custom_call.1} parent=0
    _
  %s9 = ssub.s32 1, %s7
  %s10 = scalar_select 0, %s9, %s7
  %11 = sst [smem:[#allocation3]] %s5
  $region1: #{tpu_custom_call.1} parent=0
    #allocation4 [shape = 'u8[32768]{0}', space=vmem, size = 0x8000, scoped, tag = 'input window, operand 0']
    #allocation5 [shape = 's32[2]{0}', space=sflag, size = 0x8, scoped, tag = 'scoped memory for tpu_custom_call.1']
    #allocation6 [shape = 's32[2]{0}', space=sflag, size = 0x8, scoped, tag = 'scoped memory for tpu_custom_call.1']
    #allocation7 [shape = 's32[2]{0}', space=sflag, size = 0x8, scoped, tag = 'scoped memory for tpu_custom_call.1']
    #allocation8 [shape = 'u8[512]{0}', space=smem, size = 0x200, scoped, tag = 'input window, operand 3, single buffered']
    #allocation9 [shape = 'u8[512]{0}', space=smem, size = 0x200, scoped, tag = 'input window, operand 4, single buffered']
    #allocation10 [shape = 's32[1]{0}', space=sflag, size = 0x4, scoped, tag = 'scoped memory for tpu_custom_call.1']
    #allocation11 [shape = 'u8[32768]{0}', space=vmem, size = 0x8000, scoped, tag = 'output window, operand 0']
    %12 = vsyncpa [#allocation5], 0
    %s13 = scalar_lea.sflag [#allocation5], 1
    %14 = vsyncpa %s13, 0
    %15 = vsyncpa [#allocation7], 0
    %16 = vsyncpa [#allocation10], 0
    %17 = vsyncpa [#allocation6], 0
    %s18 = scalar_lea.sflag [#allocation6], 1
    %19 = vsyncpa %s18, 0
    loop: start=0, step=1, limit=4
    $region2: #{tpu_custom_call.1} parent=1 // loop_pre_header
      _
    $region3: #{tpu_custom_call.1} parent=1 // loop_header
      %s21 = sphi 0, %s25
      %p22 = scmp.ge.s32.totalorder %s21, 4
      %s31 = sphi 0, %s33
      %s34 = sphi 0, %s31
      %s35 = sphi 0, %s34
      %s51 = sphi 0, %s35
      %s55 = sphi 0, %s55
      %s57 = sphi 0, %s55
      %s58 = sphi 0, %s57
      %s72 = sphi 0, %s58
      %s76 = sphi 0, %s76
      %s78 = sphi 0, %s76
      %s79 = sphi 0, %s78
      %s93 = sphi 0, %s79
      %s97 = sphi 0, %s97
      %s99 = sphi 0, %s97
      %s100 = sphi 0, %s99
      %s114 = sphi 0, %s100
      %s118 = sphi 0, %s118
      %s120 = sphi 0, %s118
      %s121 = sphi 0, %s120
      %s135 = sphi 0, %s121
      %s139 = sphi 0, %s139
      %s141 = sphi 0, %s139
      %s142 = sphi 0, %s141
      %s156 = sphi 0, %s142
      %s162 = sphi 0, %s164
      %s165 = sphi 0, %s162
      %s166 = sphi 0, %s165
      %s182 = sphi 0, %s166
    $region4: #{tpu_custom_call.1} parent=1 // loop_header_branch
      %24 = sbr.rel (%p22) target = $region8
    $region5: #{tpu_custom_call.1} parent=1 // loop_body
      %s26 = ssub.s32 %s21, 1
      %s27 = ssub.s32 %s21, 2
      %s28 = sadd.s32 %s21, 1
      %s29 = ssub.s32 %s21, %s28
      %p30 = scmp.eq.s32.totalorder %s29, 0
      %s32 = sadd.s32 %s31, 1
      %s33 = scalar_select %p30, %s31, %s32
      %p36 = pneg %p30
      %p37 = scmp.eq.s32.totalorder %s21, 1
      %p38 = por %p36, %p37
      %p39 = scmp.ne.s32.totalorder %s31, %s34
      %p40 = scmp.eq.s32.totalorder %s21, 0
      %p41 = por %p39, %p40
      %p42 = scmp.ne.s32.totalorder %s31, %s34
      %p43 = scmp.eq.s32.totalorder %s26, 1
      %p44 = por %p42, %p43
      %p45 = scmp.ne.s32.totalorder %s34, %s35
      %p46 = scmp.eq.s32.totalorder %s26, 0
      %p47 = por %p45, %p46
      %p48 = scmp.ne.s32.totalorder %s34, %s35
      %p49 = scmp.eq.s32.totalorder %s27, 1
      %p50 = por %p48, %p49
      %p52 = scmp.ne.s32.totalorder %s35, %s51
      %p53 = scmp.eq.s32.totalorder %s27, 0
      %p54 = por %p52, %p53
      %s56 = sadd.s32 %s55, 1
      %p59 = scmp.eq.s32.totalorder %s21, 1
      %p60 = scmp.ne.s32.totalorder %s55, %s57
      %p61 = scmp.eq.s32.totalorder %s21, 0
      %p62 = por %p60, %p61
      %p63 = scmp.ne.s32.totalorder %s55, %s57
      %p64 = scmp.eq.s32.totalorder %s26, 1
      %p65 = por %p63, %p64
      %p66 = scmp.ne.s32.totalorder %s57, %s58
      %p67 = scmp.eq.s32.totalorder %s26, 0
      %p68 = por %p66, %p67
      %p69 = scmp.ne.s32.totalorder %s57, %s58
      %p70 = scmp.eq.s32.totalorder %s27, 1
      %p71 = por %p69, %p70
      %p73 = scmp.ne.s32.totalorder %s58, %s72
      %p74 = scmp.eq.s32.totalorder %s27, 0
      %p75 = por %p73, %p74
      %s77 = sadd.s32 %s76, 1
      %p80 = scmp.eq.s32.totalorder %s21, 1
      %p81 = scmp.ne.s32.totalorder %s76, %s78
      %p82 = scmp.eq.s32.totalorder %s21, 0
      %p83 = por %p81, %p82
      %p84 = scmp.ne.s32.totalorder %s76, %s78
      %p85 = scmp.eq.s32.totalorder %s26, 1
      %p86 = por %p84, %p85
      %p87 = scmp.ne.s32.totalorder %s78, %s79
      %p88 = scmp.eq.s32.totalorder %s26, 0
      %p89 = por %p87, %p88
      %p90 = scmp.ne.s32.totalorder %s78, %s79
      %p91 = scmp.eq.s32.totalorder %s27, 1
      %p92 = por %p90, %p91
      %p94 = scmp.ne.s32.totalorder %s79, %s93
      %p95 = scmp.eq.s32.totalorder %s27, 0
      %p96 = por %p94, %p95
      %s98 = sadd.s32 %s97, 1
      %p101 = scmp.eq.s32.totalorder %s21, 1
      %p102 = scmp.ne.s32.totalorder %s97, %s99
      %p103 = scmp.eq.s32.totalorder %s21, 0
      %p104 = por %p102, %p103
      %p105 = scmp.ne.s32.totalorder %s97, %s99
      %p106 = scmp.eq.s32.totalorder %s26, 1
      %p107 = por %p105, %p106
      %p108 = scmp.ne.s32.totalorder %s99, %s100
      %p109 = scmp.eq.s32.totalorder %s26, 0
      %p110 = por %p108, %p109
      %p111 = scmp.ne.s32.totalorder %s99, %s100
      %p112 = scmp.eq.s32.totalorder %s27, 1
      %p113 = por %p111, %p112
      %p115 = scmp.ne.s32.totalorder %s100, %s114
      %p116 = scmp.eq.s32.totalorder %s27, 0
      %p117 = por %p115, %p116
      %s119 = sadd.s32 %s118, 1
      %p122 = scmp.eq.s32.totalorder %s21, 1
      %p123 = scmp.ne.s32.totalorder %s118, %s120
      %p124 = scmp.eq.s32.totalorder %s21, 0
      %p125 = por %p123, %p124
      %p126 = scmp.ne.s32.totalorder %s118, %s120
      %p127 = scmp.eq.s32.totalorder %s26, 1
      %p128 = por %p126, %p127
      %p129 = scmp.ne.s32.totalorder %s120, %s121
      %p130 = scmp.eq.s32.totalorder %s26, 0
      %p131 = por %p129, %p130
      %p132 = scmp.ne.s32.totalorder %s120, %s121
      %p133 = scmp.eq.s32.totalorder %s27, 1
      %p134 = por %p132, %p133
      %p136 = scmp.ne.s32.totalorder %s121, %s135
      %p137 = scmp.eq.s32.totalorder %s27, 0
      %p138 = por %p136, %p137
      %s140 = sadd.s32 %s139, 1
      %p143 = scmp.eq.s32.totalorder %s21, 1
      %p144 = scmp.ne.s32.totalorder %s139, %s141
      %p145 = scmp.eq.s32.totalorder %s21, 0
      %p146 = por %p144, %p145
      %p147 = scmp.ne.s32.totalorder %s139, %s141
      %p148 = scmp.eq.s32.totalorder %s26, 1
      %p149 = por %p147, %p148
      %p150 = scmp.ne.s32.totalorder %s141, %s142
      %p151 = scmp.eq.s32.totalorder %s26, 0
      %p152 = por %p150, %p151
      %p153 = scmp.ne.s32.totalorder %s141, %s142
      %p154 = scmp.eq.s32.totalorder %s27, 1
      %p155 = por %p153, %p154
      %p157 = scmp.ne.s32.totalorder %s142, %s156
      %p158 = scmp.eq.s32.totalorder %s27, 0
      %p159 = por %p157, %p158
      %s160 = ssub.s32 %s21, %s28
      %p161 = scmp.eq.s32.totalorder %s160, 0
      %s163 = sadd.s32 %s162, 1
      %s164 = scalar_select %p161, %s162, %s163
      %p167 = pneg %p161
      %p168 = scmp.eq.s32.totalorder %s21, 1
      %p169 = por %p167, %p168
      %p170 = scmp.ne.s32.totalorder %s162, %s165
      %p171 = scmp.eq.s32.totalorder %s21, 0
      %p172 = por %p170, %p171
      %p173 = scmp.ne.s32.totalorder %s162, %s165
      %p174 = scmp.eq.s32.totalorder %s26, 1
      %p175 = por %p173, %p174
      %p176 = scmp.ne.s32.totalorder %s165, %s166
      %p177 = scmp.eq.s32.totalorder %s26, 0
      %p178 = por %p176, %p177
      %p179 = scmp.ne.s32.totalorder %s165, %s166
      %p180 = scmp.eq.s32.totalorder %s27, 1
      %p181 = por %p179, %p180
      %p183 = scmp.ne.s32.totalorder %s166, %s182
      %p184 = scmp.eq.s32.totalorder %s27, 0
      %p185 = por %p183, %p184
      %p186 = scmp.le.s32.totalorder 1, %s21
      %p187 = scmp.lt.s32.totalorder %s21, 3
      %p188 = pnand %p186, %p187
      %p189 = pneg %p188
      // Predicated region
      $region9: #{tpu_custom_call.1} parent=5 // pred_check
        _
      $region10: #{tpu_custom_call.1} parent=5 // pred_check_branch
        %191 = sbr.rel (%p188) target = $region12
      $region11: #{tpu_custom_call.1} parent=5 // pred_region
        %s192 = ssub.s32 %s21, 1
        // Predicated region
        $region13: #{tpu_custom_call.1} parent=11 // pred_check
          %p193 = pneg %p68
        $region14: #{tpu_custom_call.1} parent=11 // pred_check_branch
          %195 = sbr.rel (%p193) target = $region16
        $region15: #{tpu_custom_call.1} parent=11 // pred_region
          _
        $region16: #{tpu_custom_call.1} parent=11 // pred_fallthru
          _
        // Predicated region
        $region17: #{tpu_custom_call.1} parent=11 // pred_check
          %p196 = pneg %p89
        $region18: #{tpu_custom_call.1} parent=11 // pred_check_branch
          %198 = sbr.rel (%p196) target = $region20
        $region19: #{tpu_custom_call.1} parent=11 // pred_region
          _
        $region20: #{tpu_custom_call.1} parent=11 // pred_fallthru
          _
        // Predicated region
        $region21: #{tpu_custom_call.1} parent=11 // pred_check
          %p199 = pneg %p110
        $region22: #{tpu_custom_call.1} parent=11 // pred_check_branch
          %201 = sbr.rel (%p199) target = $region24
        $region23: #{tpu_custom_call.1} parent=11 // pred_region
          %s203 = ssub.s32 16, 16
          %204 = vsyncadd [#allocation7], %s203
          %s206 = sshll.u32 %s3, 4
          %s207 = int_to_ptr.vmem [resolvable:$true] %s206
          %209 = dma.vmem_to_smem %s207, 16, [#allocation8], [#allocation7]
        $region24: #{tpu_custom_call.1} parent=11 // pred_fallthru
          _
        // Predicated region
        $region25: #{tpu_custom_call.1} parent=11 // pred_check
          %p210 = pneg %p131
        $region26: #{tpu_custom_call.1} parent=11 // pred_check_branch
          %212 = sbr.rel (%p210) target = $region28
        $region27: #{tpu_custom_call.1} parent=11 // pred_region
          %s214 = ssub.s32 16, 16
          %215 = vsyncadd [#allocation10], %s214
          %s217 = sshll.u32 %s4, 4
          %s218 = int_to_ptr.vmem [resolvable:$true] %s217
          %220 = dma.vmem_to_smem %s218, 16, [#allocation9], [#allocation10]
        $region28: #{tpu_custom_call.1} parent=11 // pred_fallthru
          _
        // Predicated region
        $region29: #{tpu_custom_call.1} parent=11 // pred_check
          %p221 = pneg %p152
        $region30: #{tpu_custom_call.1} parent=11 // pred_check_branch
          %223 = sbr.rel (%p221) target = $region32
        $region31: #{tpu_custom_call.1} parent=11 // pred_region
          _
        $region32: #{tpu_custom_call.1} parent=11 // pred_fallthru
          _
      $region12: #{tpu_custom_call.1} parent=5 // pred_fallthru
        _
      %p224 = scmp.lt.s32.totalorder %s21, 2
      // Predicated region
      $region33: #{tpu_custom_call.1} parent=5 // pred_check
        %p225 = pneg %p224
      $region34: #{tpu_custom_call.1} parent=5 // pred_check_branch
        %227 = sbr.rel (%p225) target = $region36
      $region35: #{tpu_custom_call.1} parent=5 // pred_region
        // Predicated region
        $region37: #{tpu_custom_call.1} parent=35 // pred_check
          %p228 = pneg %p41
        $region38: #{tpu_custom_call.1} parent=35 // pred_check_branch
          %230 = sbr.rel (%p228) target = $region40
        $region39: #{tpu_custom_call.1} parent=35 // pred_region
          %s231 = sand.u32 %s31, 1
          %s232 = scalar_lea.sflag [#allocation5], %s231
          %s233 = sand.u32 %s31, 1
          %s234 = smul.addr %s233, 32
          %s235 = scalar_lea.vmem [#allocation4], %s234
          %s237 = ssub.s32 512, 512
          %238 = vsyncadd %s232, %s237
          %s239 = smul.addr %s21, 4
          %s240 = smul.addr %s239, 128
          %s241 = scalar_lea.hbm %s0, %s240
          %s242 = sshll.u32 %s235, 4
          %s243 = int_to_ptr.vmem [resolvable:$true] %s242
          %248 = dma.hbm_to_vmem [thread:$0]  %s241, 512, %s243, %s232, 256, 256, 16
        $region40: #{tpu_custom_call.1} parent=35 // pred_fallthru
          _
      $region36: #{tpu_custom_call.1} parent=5 // pred_fallthru
        _
      %p249 = scmp.le.s32.totalorder 1, %s21
      %p250 = scmp.lt.s32.totalorder %s21, 3
      %p251 = pnand %p249, %p250
      %p252 = pneg %p251
      // Predicated region
      $region41: #{tpu_custom_call.1} parent=5 // pred_check
        _
      $region42: #{tpu_custom_call.1} parent=5 // pred_check_branch
        %254 = sbr.rel (%p251) target = $region44
      $region43: #{tpu_custom_call.1} parent=5 // pred_region
        %s255 = ssub.s32 %s21, 1
        %s256 = sand.u32 %s34, 1
        %s257 = scalar_lea.sflag [#allocation5], %s256
        %s258 = sand.u32 %s34, 1
        %s259 = smul.addr %s258, 32
        %s260 = scalar_lea.vmem [#allocation4], %s259
        // Predicated region
        $region45: #{tpu_custom_call.1} parent=43 // pred_check
          %p261 = pneg %p47
        $region46: #{tpu_custom_call.1} parent=43 // pred_check_branch
          %263 = sbr.rel (%p261) target = $region48
        $region47: #{tpu_custom_call.1} parent=43 // pred_region
          %264 = dma.done %s257, 512
        $region48: #{tpu_custom_call.1} parent=43 // pred_fallthru
          _
        // Predicated region
        $region49: #{tpu_custom_call.1} parent=43 // pred_check
          %p265 = pneg %p110
        $region50: #{tpu_custom_call.1} parent=43 // pred_check_branch
          %267 = sbr.rel (%p265) target = $region52
        $region51: #{tpu_custom_call.1} parent=43 // pred_region
          %268 = dma.done [#allocation7], 16
        $region52: #{tpu_custom_call.1} parent=43 // pred_fallthru
          _
        // Predicated region
        $region53: #{tpu_custom_call.1} parent=43 // pred_check
          %p269 = pneg %p131
        $region54: #{tpu_custom_call.1} parent=43 // pred_check_branch
          %271 = sbr.rel (%p269) target = $region56
        $region55: #{tpu_custom_call.1} parent=43 // pred_region
          %272 = dma.done [#allocation10], 16
        $region56: #{tpu_custom_call.1} parent=43 // pred_fallthru
          _
        %273 = sfence
        %s274 = sand.u32 %s34, 1
        %s275 = scalar_lea.sflag [#allocation5], %s274
        %s276 = sand.u32 %s34, 1
        %s277 = smul.addr %s276, 32
        %s278 = scalar_lea.vmem [#allocation4], %s277
        %p279 = pneg %p47
        %p280 = pneg %p44
        %p281 = pneg %p68
        %p282 = pneg %p65
        %p283 = pneg %p89
        %p284 = pneg %p86
        %p285 = pneg %p110
        %p286 = pneg %p107
        %p287 = pneg %p131
        %p288 = pneg %p128
        %p289 = pneg %p152
        %p290 = pneg %p149
        %p291 = pneg %p178
        %p292 = pneg %p175
        %s293 = sand.u32 %s165, 1
        %s294 = scalar_lea.sflag [#allocation6], %s293
        %s295 = sand.u32 %s165, 1
        %s296 = smul.addr %s295, 32
        %s297 = scalar_lea.vmem [#allocation11], %s296
        %v298 = vld [vmem:[%s260] sm:$0xff]
        %v299 = vld [vmem:[%s260 + $0x8] sm:$0xff]
        %v300 = vld [vmem:[%s260 + $0x10] sm:$0xff]
        %v301 = vld [vmem:[%s260 + $0x18] sm:$0xff]
        %v302 = vadd.f32 %v298, %v299
        %303 = vadd.xlane.f32.xlu0 %v302
        %v304 = vpop.xlane.xlu0 %303
        %v305 = vadd.f32 %v300, %v301
        %306 = vadd.xlane.f32.xlu0 %v305
        %v307 = vpop.xlane.xlu0 %306
        %v308 = vrcp.pop 256.0
        %v309 = vmul.f32 %v304, %v308
        %v310 = vmul.f32 %v307, %v308
        %v311 = vmax.f32 %v298, %v299
        %312 = vmax.xlane.f32.xlu0 %v311
        %v313 = vpop.xlane.xlu0 %312
        %v314 = vmax.f32 %v300, %v301
        %315 = vmax.xlane.f32.xlu0 %v314
        %v316 = vpop.xlane.xlu0 %315
        %vm317 = vcmask 7168
        %v318 = vsel %vm317, %v309, %v313
        %v319 = vsel %vm317, %v310, %v316
        %v320 = vld [vmem:[%s1] sm:$0xff]
        %v321 = vld [vmem:[%s1 + $0x8] sm:$0xff]
        %323 = vset.pattern.permute.xlu0 0
        %324 = vperm.xlu0 %323, %v320
        %v325 = vpop.permute.xlu0 %324
        %328 = vset.pattern.permute.xlu0 0
        %329 = vperm.xlu0 %328, %v321
        %v330 = vpop.permute.xlu0 %329
        %v332 = vmul.f32 %v318, %v325
        %v333 = vmul.f32 %v319, %v330
        %vm334 = vcmask 15360
        %v335 = vsel %vm334, %v332, 0.0
        %v336 = vsel %vm334, %v333, 0.0
        %v337 = vadd.f32 %v335, %v336
        %v338 = vrot.slane %v337, 4
        %v339 = vadd.f32 %v337, %v338
        %v340 = vrot.slane %v339, 2
        %v341 = vadd.f32 %v339, %v340
        %v342 = vrot.slane %v341, 1
        %v343 = vadd.f32 %v341, %v342
        %s344 = sld [smem:[#allocation8]]
        %v345 = vstv %s344
        %v346 = vadd.f32 %v343, %v345
        %v347 = vmax.f32 %v346, 0.0
        %348 = vset.pattern.permute.xlu0 1
        %349 = vperm.xlu0 %348, %v320
        %v350 = vpop.permute.xlu0 %349
        %352 = vset.pattern.permute.xlu0 1
        %353 = vperm.xlu0 %352, %v321
        %v354 = vpop.permute.xlu0 %353
        %v356 = vmul.f32 %v318, %v350
        %v357 = vmul.f32 %v319, %v354
        %v358 = vsel %vm334, %v356, 0.0
        %v359 = vsel %vm334, %v357, 0.0
        %v360 = vadd.f32 %v358, %v359
        %v361 = vrot.slane %v360, 4
        %v362 = vadd.f32 %v360, %v361
        %v363 = vrot.slane %v362, 2
        %v364 = vadd.f32 %v362, %v363
        %v365 = vrot.slane %v364, 1
        %v366 = vadd.f32 %v364, %v365
        %s367 = sld [smem:[#allocation8 + $0x1]]
        %v368 = vstv %s367
        %v369 = vadd.f32 %v366, %v368
        %v370 = vmax.f32 %v369, 0.0
        %v371 = vld [vmem:[%s2] sm:$0xff]
        %v372 = vld [vmem:[%s2 + $0x8] sm:$0xff]
        %374 = vset.pattern.permute.xlu0 0
        %375 = vperm.xlu0 %374, %v371
        %v376 = vpop.permute.xlu0 %375
        %379 = vset.pattern.permute.xlu0 0
        %380 = vperm.xlu0 %379, %v372
        %v381 = vpop.permute.xlu0 %380
        %v383 = vmul.f32 %v347, %v376
        %v384 = vmul.f32 %v347, %v381
        %385 = vset.pattern.permute.xlu0 2
        %386 = vperm.xlu0 %385, %v371
        %v387 = vpop.permute.xlu0 %386
        %389 = vset.pattern.permute.xlu0 2
        %390 = vperm.xlu0 %389, %v372
        %v391 = vpop.permute.xlu0 %390
        %v393 = vadd.f32 %v387, %v383
        %v394 = vadd.f32 %v391, %v384
        %395 = vset.pattern.permute.xlu0 1
        %396 = vperm.xlu0 %395, %v371
        %v397 = vpop.permute.xlu0 %396
        %399 = vset.pattern.permute.xlu0 1
        %400 = vperm.xlu0 %399, %v372
        %v401 = vpop.permute.xlu0 %400
        %v403 = vmul.f32 %v370, %v397
        %v404 = vmul.f32 %v370, %v401
        %v405 = vadd.f32 %v393, %v403
        %v406 = vadd.f32 %v394, %v404
        %409 = vrot.lane.b32.xlu0 %v405, 127
        %v410 = vpop.permute.xlu0 %409
        %411 = vrot.lane.b32.xlu0 %v406, 127
        %v412 = vpop.permute.xlu0 %411
        %v415 = vadd.f32 %v405, %v410
        %v416 = vadd.f32 %v406, %v412
        %v417 = vxor.u32 %v415, 2147483648
        %v418 = vxor.u32 %v416, 2147483648
        %v419 = vmul.f32 %v417, 1.442695
        %v420 = vpow.pop %v419
        %v421 = vmul.f32 %v418, 1.442695
        %v422 = vpow.pop %v421
        %v423 = vadd.f32 %v420, 1.0
        %v424 = vadd.f32 %v422, 1.0
        %v425 = vrcp.pop %v423
        %v426 = vmul.f32 1.0, %v425
        %v427 = vrcp.pop %v424
        %v428 = vmul.f32 1.0, %v427
        %430 = vset.pattern.permute.xlu0 0
        %431 = vperm.xlu0 %430, %v426
        %v432 = vpop.permute.xlu0 %431
        %435 = vset.pattern.permute.xlu0 0
        %436 = vperm.xlu0 %435, %v428
        %v437 = vpop.permute.xlu0 %436
        %v439 = vmul.f32 %v298, %v432
        %v440 = vmul.f32 %v299, %v432
        %v441 = vmul.f32 %v300, %v437
        %v442 = vmul.f32 %v301, %v437
        %v443 = vadd.f32 %v439, %v441
        %v444 = vrot.slane %v443, 4
        %v445 = vadd.f32 %v443, %v444
        %v446 = vrot.slane %v445, 2
        %v447 = vadd.f32 %v445, %v446
        %v448 = vrot.slane %v447, 1
        %v449 = vadd.f32 %v447, %v448
        %v450 = vadd.f32 %v440, %v442
        %v451 = vrot.slane %v450, 4
        %v452 = vadd.f32 %v450, %v451
        %v453 = vrot.slane %v452, 2
        %v454 = vadd.f32 %v452, %v453
        %v455 = vrot.slane %v454, 1
        %v456 = vadd.f32 %v454, %v455
        %v457 = vrcp.pop 16.0
        %v458 = vmul.f32 %v449, %v457
        %v459 = vmul.f32 %v456, %v457
        %v460 = vmax.f32 %v439, %v441
        %v461 = vrot.slane %v460, 4
        %v462 = vmax.f32 %v460, %v461
        %v463 = vrot.slane %v462, 2
        %v464 = vmax.f32 %v462, %v463
        %v465 = vrot.slane %v464, 1
        %v466 = vmax.f32 %v464, %v465
        %v467 = vmax.f32 %v440, %v442
        %v468 = vrot.slane %v467, 4
        %v469 = vmax.f32 %v467, %v468
        %v470 = vrot.slane %v469, 2
        %v471 = vmax.f32 %v469, %v470
        %v472 = vrot.slane %v471, 1
        %v473 = vmax.f32 %v471, %v472
        %475 = vrot.lane.b32.xlu0 %v458, 112
        %v476 = vpop.permute.xlu0 %475
        %478 = vrot.lane.b32.xlu0 %v458, 96
        %v479 = vpop.permute.xlu0 %478
        %481 = vrot.lane.b32.xlu0 %v458, 80
        %v482 = vpop.permute.xlu0 %481
        %484 = vrot.lane.b32.xlu0 %v458, 64
        %v485 = vpop.permute.xlu0 %484
        %487 = vrot.lane.b32.xlu0 %v458, 48
        %v488 = vpop.permute.xlu0 %487
        %490 = vrot.lane.b32.xlu0 %v458, 32
        %v491 = vpop.permute.xlu0 %490
        %493 = vrot.lane.b32.xlu0 %v458, 16
        %v494 = vpop.permute.xlu0 %493
        %497 = vrot.lane.b32.xlu0 %v459, 112
        %v498 = vpop.permute.xlu0 %497
        %500 = vrot.lane.b32.xlu0 %v459, 96
        %v501 = vpop.permute.xlu0 %500
        %503 = vrot.lane.b32.xlu0 %v459, 80
        %v504 = vpop.permute.xlu0 %503
        %506 = vrot.lane.b32.xlu0 %v459, 64
        %v507 = vpop.permute.xlu0 %506
        %509 = vrot.lane.b32.xlu0 %v459, 48
        %v510 = vpop.permute.xlu0 %509
        %512 = vrot.lane.b32.xlu0 %v459, 32
        %v513 = vpop.permute.xlu0 %512
        %515 = vrot.lane.b32.xlu0 %v459, 16
        %v516 = vpop.permute.xlu0 %515
        %vm518 = vcmask 1040384
        %v519 = vsel %vm518, %v458, %v476
        %vm520 = vcmask 1041408
        %v521 = vsel %vm520, %v519, %v479
        %vm522 = vcmask 1042432
        %v523 = vsel %vm522, %v521, %v482
        %vm524 = vcmask 1043456
        %v525 = vsel %vm524, %v523, %v485
        %vm526 = vcmask 1044480
        %v527 = vsel %vm526, %v525, %v488
        %vm528 = vcmask 1045504
        %v529 = vsel %vm528, %v527, %v491
        %vm530 = vcmask 1046528
        %v531 = vsel %vm530, %v529, %v494
        %v532 = vsel %vm518, %v459, %v498
        %v533 = vsel %vm520, %v532, %v501
        %v534 = vsel %vm522, %v533, %v504
        %v535 = vsel %vm524, %v534, %v507
        %v536 = vsel %vm526, %v535, %v510
        %v537 = vsel %vm528, %v536, %v513
        %v538 = vsel %vm530, %v537, %v516
        %541 = vrot.lane.b32.xlu0 %v531, 125
        %v542 = vpop.permute.xlu0 %541
        %543 = vrot.lane.b32.xlu0 %v538, 125
        %v544 = vpop.permute.xlu0 %543
        %547 = vrot.lane.b32.xlu0 %v531, 127
        %v548 = vpop.permute.xlu0 %547
        %549 = vrot.lane.b32.xlu0 %v538, 127
        %v550 = vpop.permute.xlu0 %549
        %553 = vrot.lane.b32.xlu0 %v531, 1
        %v554 = vpop.permute.xlu0 %553
        %555 = vrot.lane.b32.xlu0 %v538, 1
        %v556 = vpop.permute.xlu0 %555
        %v559 = vsel %vm317, %v542, %v548
        %v560 = vsel %vm317, %v544, %v550
        %v561 = vsel %vm334, %v559, %v554
        %v562 = vsel %vm334, %v560, %v556
        %563 = vrot.lane.b32.xlu0 %v531, 114
        %v564 = vpop.permute.xlu0 %563
        %565 = vrot.lane.b32.xlu0 %v538, 114
        %v566 = vpop.permute.xlu0 %565
        %569 = vrot.lane.b32.xlu0 %v531, 116
        %v570 = vpop.permute.xlu0 %569
        %571 = vrot.lane.b32.xlu0 %v538, 116
        %v572 = vpop.permute.xlu0 %571
        %575 = vrot.lane.b32.xlu0 %v531, 118
        %v576 = vpop.permute.xlu0 %575
        %577 = vrot.lane.b32.xlu0 %v538, 118
        %v578 = vpop.permute.xlu0 %577
        %v581 = vsel %vm317, %v564, %v570
        %v582 = vsel %vm317, %v566, %v572
        %v583 = vsel %vm334, %v581, %v576
        %v584 = vsel %vm334, %v582, %v578
        %585 = vrot.lane.b32.xlu0 %v531, 3
        %v586 = vpop.permute.xlu0 %585
        %587 = vrot.lane.b32.xlu0 %v538, 3
        %v588 = vpop.permute.xlu0 %587
        %593 = vrot.lane.b32.xlu0 %v583, 19
        %v594 = vpop.permute.xlu0 %593
        %595 = vrot.lane.b32.xlu0 %v584, 19
        %v596 = vpop.permute.xlu0 %595
        %vm599 = vcmask 23552
        %v600 = vsel %vm599, %v561, %v586
        %v601 = vsel %vm599, %v562, %v588
        %vm602 = vcmask 154624
        %v603 = vsel %vm602, %v600, %v594
        %v604 = vsel %vm602, %v601, %v596
        %v606 = vrot.slane %v603, 3
        %v608 = vrot.slane %v603, 1
        %v610 = vrot.slane %v603, 7
        %v612 = vsel %vm518, %v606, %v608
        %v613 = vsel %vm520, %v612, %v610
        %v615 = vrot.slane %v604, 6
        %v617 = vrot.slane %v604, 4
        %v619 = vrot.slane %v604, 2
        %v621 = vsel %vm518, %v615, %v617
        %v622 = vsel %vm520, %v621, %v619
        %v623 = vrot.slane %v603, 5
        %v624 = vrot.slane %v604, 5
        %v625 = vsel %vm522, %v623, %v624
        %v630 = vrot.slane %v622, 5
        %v632 = vsel %vm522, %v613, %v623
        %v633 = vsel %vm522, %v624, %v630
        %635 = vrot.lane.b32.xlu0 %v466, 112
        %v636 = vpop.permute.xlu0 %635
        %638 = vrot.lane.b32.xlu0 %v466, 96
        %v639 = vpop.permute.xlu0 %638
        %641 = vrot.lane.b32.xlu0 %v466, 80
        %v642 = vpop.permute.xlu0 %641
        %644 = vrot.lane.b32.xlu0 %v466, 64
        %v645 = vpop.permute.xlu0 %644
        %647 = vrot.lane.b32.xlu0 %v466, 48
        %v648 = vpop.permute.xlu0 %647
        %650 = vrot.lane.b32.xlu0 %v466, 32
        %v651 = vpop.permute.xlu0 %650
        %653 = vrot.lane.b32.xlu0 %v466, 16
        %v654 = vpop.permute.xlu0 %653
        %657 = vrot.lane.b32.xlu0 %v473, 112
        %v658 = vpop.permute.xlu0 %657
        %660 = vrot.lane.b32.xlu0 %v473, 96
        %v661 = vpop.permute.xlu0 %660
        %663 = vrot.lane.b32.xlu0 %v473, 80
        %v664 = vpop.permute.xlu0 %663
        %666 = vrot.lane.b32.xlu0 %v473, 64
        %v667 = vpop.permute.xlu0 %666
        %669 = vrot.lane.b32.xlu0 %v473, 48
        %v670 = vpop.permute.xlu0 %669
        %672 = vrot.lane.b32.xlu0 %v473, 32
        %v673 = vpop.permute.xlu0 %672
        %675 = vrot.lane.b32.xlu0 %v473, 16
        %v676 = vpop.permute.xlu0 %675
        %v678 = vsel %vm518, %v466, %v636
        %v679 = vsel %vm520, %v678, %v639
        %v680 = vsel %vm522, %v679, %v642
        %v681 = vsel %vm524, %v680, %v645
        %v682 = vsel %vm526, %v681, %v648
        %v683 = vsel %vm528, %v682, %v651
        %v684 = vsel %vm530, %v683, %v654
        %v685 = vsel %vm518, %v473, %v658
        %v686 = vsel %vm520, %v685, %v661
        %v687 = vsel %vm522, %v686, %v664
        %v688 = vsel %vm524, %v687, %v667
        %v689 = vsel %vm526, %v688, %v670
        %v690 = vsel %vm528, %v689, %v673
        %v691 = vsel %vm530, %v690, %v676
        %694 = vrot.lane.b32.xlu0 %v684, 125
        %v695 = vpop.permute.xlu0 %694
        %696 = vrot.lane.b32.xlu0 %v691, 125
        %v697 = vpop.permute.xlu0 %696
        %700 = vrot.lane.b32.xlu0 %v684, 127
        %v701 = vpop.permute.xlu0 %700
        %702 = vrot.lane.b32.xlu0 %v691, 127
        %v703 = vpop.permute.xlu0 %702
        %706 = vrot.lane.b32.xlu0 %v684, 1
        %v707 = vpop.permute.xlu0 %706
        %708 = vrot.lane.b32.xlu0 %v691, 1
        %v709 = vpop.permute.xlu0 %708
        %v712 = vsel %vm317, %v695, %v701
        %v713 = vsel %vm317, %v697, %v703
        %v714 = vsel %vm334, %v712, %v707
        %v715 = vsel %vm334, %v713, %v709
        %716 = vrot.lane.b32.xlu0 %v684, 114
        %v717 = vpop.permute.xlu0 %716
        %718 = vrot.lane.b32.xlu0 %v691, 114
        %v719 = vpop.permute.xlu0 %718
        %722 = vrot.lane.b32.xlu0 %v684, 116
        %v723 = vpop.permute.xlu0 %722
        %724 = vrot.lane.b32.xlu0 %v691, 116
        %v725 = vpop.permute.xlu0 %724
        %728 = vrot.lane.b32.xlu0 %v684, 118
        %v729 = vpop.permute.xlu0 %728
        %730 = vrot.lane.b32.xlu0 %v691, 118
        %v731 = vpop.permute.xlu0 %730
        %v734 = vsel %vm317, %v717, %v723
        %v735 = vsel %vm317, %v719, %v725
        %v736 = vsel %vm334, %v734, %v729
        %v737 = vsel %vm334, %v735, %v731
        %738 = vrot.lane.b32.xlu0 %v684, 3
        %v739 = vpop.permute.xlu0 %738
        %740 = vrot.lane.b32.xlu0 %v691, 3
        %v741 = vpop.permute.xlu0 %740
        %746 = vrot.lane.b32.xlu0 %v736, 19
        %v747 = vpop.permute.xlu0 %746
        %748 = vrot.lane.b32.xlu0 %v737, 19
        %v749 = vpop.permute.xlu0 %748
        %v752 = vsel %vm599, %v714, %v739
        %v753 = vsel %vm599, %v715, %v741
        %v754 = vsel %vm602, %v752, %v747
        %v755 = vsel %vm602, %v753, %v749
        %v757 = vrot.slane %v754, 3
        %v759 = vrot.slane %v754, 1
        %v761 = vrot.slane %v754, 7
        %v763 = vsel %vm518, %v757, %v759
        %v764 = vsel %vm520, %v763, %v761
        %v766 = vrot.slane %v755, 6
        %v768 = vrot.slane %v755, 4
        %v770 = vrot.slane %v755, 2
        %v772 = vsel %vm518, %v766, %v768
        %v773 = vsel %vm520, %v772, %v770
        %v774 = vrot.slane %v754, 5
        %v775 = vrot.slane %v755, 5
        %v776 = vsel %vm522, %v774, %v775
        %v781 = vrot.slane %v773, 5
        %v783 = vsel %vm522, %v764, %v774
        %v784 = vsel %vm522, %v775, %v781
        %vm785 = vcmask 130048
        %786 = vst.msk [vmem:[#allocation2] sm:$0xff] %vm785, %v632
        %787 = vst.msk [vmem:[#allocation2 + $0x8] sm:$0xff] %vm785, %v625
        %vm788 = vcmask 128000
        %789 = vst.msk [vmem:[#allocation2 + $0x10] sm:$0x3f] %vm788, %v633
        %792 = vrot.lane.b32.xlu0 %v632, 127
        %v793 = vpop.permute.xlu0 %792
        %794 = vrot.lane.b32.xlu0 %v625, 127
        %v795 = vpop.permute.xlu0 %794
        %796 = vrot.lane.b32.xlu0 %v633, 127
        %v797 = vpop.permute.xlu0 %796
        %s801 = scalar_lea.vmem [#allocation2], 24
        %802 = vst.msk [vmem:[%s801] sm:$0xff] %vm785, %v793
        %803 = vst.msk [vmem:[%s801 + $0x8] sm:$0xff] %vm785, %v795
        %804 = vst.msk [vmem:[%s801 + $0x10] sm:$0x3f] %vm788, %v797
        %805 = vrot.lane.b32.xlu0 %v632, 126
        %v806 = vpop.permute.xlu0 %805
        %807 = vrot.lane.b32.xlu0 %v625, 126
        %v808 = vpop.permute.xlu0 %807
        %809 = vrot.lane.b32.xlu0 %v633, 126
        %v810 = vpop.permute.xlu0 %809
        %s814 = scalar_lea.vmem [#allocation2], 48
        %815 = vst.msk [vmem:[%s814] sm:$0xff] %vm785, %v806
        %816 = vst.msk [vmem:[%s814 + $0x8] sm:$0xff] %vm785, %v808
        %817 = vst.msk [vmem:[%s814 + $0x10] sm:$0x3f] %vm788, %v810
        %818 = vrot.lane.b32.xlu0 %v632, 125
        %v819 = vpop.permute.xlu0 %818
        %820 = vrot.lane.b32.xlu0 %v625, 125
        %v821 = vpop.permute.xlu0 %820
        %822 = vrot.lane.b32.xlu0 %v633, 125
        %v823 = vpop.permute.xlu0 %822
        %s827 = scalar_lea.vmem [#allocation2], 72
        %828 = vst.msk [vmem:[%s827] sm:$0xff] %vm785, %v819
        %829 = vst.msk [vmem:[%s827 + $0x8] sm:$0xff] %vm785, %v821
        %830 = vst.msk [vmem:[%s827 + $0x10] sm:$0x3f] %vm788, %v823
        %831 = vrot.lane.b32.xlu0 %v632, 124
        %v832 = vpop.permute.xlu0 %831
        %833 = vrot.lane.b32.xlu0 %v625, 124
        %v834 = vpop.permute.xlu0 %833
        %835 = vrot.lane.b32.xlu0 %v633, 124
        %v836 = vpop.permute.xlu0 %835
        %s840 = scalar_lea.vmem [#allocation2], 96
        %841 = vst.msk [vmem:[%s840] sm:$0xff] %vm785, %v832
        %842 = vst.msk [vmem:[%s840 + $0x8] sm:$0xff] %vm785, %v834
        %843 = vst.msk [vmem:[%s840 + $0x10] sm:$0x3f] %vm788, %v836
        %844 = vrot.lane.b32.xlu0 %v632, 123
        %v845 = vpop.permute.xlu0 %844
        %846 = vrot.lane.b32.xlu0 %v625, 123
        %v847 = vpop.permute.xlu0 %846
        %848 = vrot.lane.b32.xlu0 %v633, 123
        %v849 = vpop.permute.xlu0 %848
        %s853 = scalar_lea.vmem [#allocation2], 120
        %854 = vst.msk [vmem:[%s853] sm:$0xff] %vm785, %v845
        %855 = vst.msk [vmem:[%s853 + $0x8] sm:$0xff] %vm785, %v847
        %856 = vst.msk [vmem:[%s853 + $0x10] sm:$0x3f] %vm788, %v849
        %857 = vrot.lane.b32.xlu0 %v632, 122
        %v858 = vpop.permute.xlu0 %857
        %859 = vrot.lane.b32.xlu0 %v625, 122
        %v860 = vpop.permute.xlu0 %859
        %861 = vrot.lane.b32.xlu0 %v633, 122
        %v862 = vpop.permute.xlu0 %861
        %s866 = scalar_lea.vmem [#allocation2], 144
        %867 = vst.msk [vmem:[%s866] sm:$0xff] %vm785, %v858
        %868 = vst.msk [vmem:[%s866 + $0x8] sm:$0xff] %vm785, %v860
        %869 = vst.msk [vmem:[%s866 + $0x10] sm:$0x3f] %vm788, %v862
        %s870 = scalar_lea.vmem [#allocation2], 168
        %871 = vst.msk [vmem:[%s870] sm:$0xff] %vm785, %v783
        %872 = vst.msk [vmem:[%s870 + $0x8] sm:$0xff] %vm785, %v776
        %873 = vst.msk [vmem:[%s870 + $0x10] sm:$0x3f] %vm788, %v784
        %876 = vrot.lane.b32.xlu0 %v783, 127
        %v877 = vpop.permute.xlu0 %876
        %878 = vrot.lane.b32.xlu0 %v776, 127
        %v879 = vpop.permute.xlu0 %878
        %880 = vrot.lane.b32.xlu0 %v784, 127
        %v881 = vpop.permute.xlu0 %880
        %s885 = scalar_lea.vmem [#allocation2], 192
        %886 = vst.msk [vmem:[%s885] sm:$0xff] %vm785, %v877
        %887 = vst.msk [vmem:[%s885 + $0x8] sm:$0xff] %vm785, %v879
        %888 = vst.msk [vmem:[%s885 + $0x10] sm:$0x3f] %vm788, %v881
        %889 = vrot.lane.b32.xlu0 %v783, 126
        %v890 = vpop.permute.xlu0 %889
        %891 = vrot.lane.b32.xlu0 %v776, 126
        %v892 = vpop.permute.xlu0 %891
        %893 = vrot.lane.b32.xlu0 %v784, 126
        %v894 = vpop.permute.xlu0 %893
        %s898 = scalar_lea.vmem [#allocation2], 216
        %899 = vst.msk [vmem:[%s898] sm:$0xff] %vm785, %v890
        %900 = vst.msk [vmem:[%s898 + $0x8] sm:$0xff] %vm785, %v892
        %901 = vst.msk [vmem:[%s898 + $0x10] sm:$0x3f] %vm788, %v894
        %902 = vrot.lane.b32.xlu0 %v783, 125
        %v903 = vpop.permute.xlu0 %902
        %904 = vrot.lane.b32.xlu0 %v776, 125
        %v905 = vpop.permute.xlu0 %904
        %906 = vrot.lane.b32.xlu0 %v784, 125
        %v907 = vpop.permute.xlu0 %906
        %s911 = scalar_lea.vmem [#allocation2], 240
        %912 = vst.msk [vmem:[%s911] sm:$0xff] %vm785, %v903
        %913 = vst.msk [vmem:[%s911 + $0x8] sm:$0xff] %vm785, %v905
        %914 = vst.msk [vmem:[%s911 + $0x10] sm:$0x3f] %vm788, %v907
        %915 = vrot.lane.b32.xlu0 %v783, 124
        %v916 = vpop.permute.xlu0 %915
        %917 = vrot.lane.b32.xlu0 %v776, 124
        %v918 = vpop.permute.xlu0 %917
        %919 = vrot.lane.b32.xlu0 %v784, 124
        %v920 = vpop.permute.xlu0 %919
        %s924 = scalar_lea.vmem [#allocation2], 264
        %925 = vst.msk [vmem:[%s924] sm:$0xff] %vm785, %v916
        %926 = vst.msk [vmem:[%s924 + $0x8] sm:$0xff] %vm785, %v918
        %927 = vst.msk [vmem:[%s924 + $0x10] sm:$0x3f] %vm788, %v920
        %928 = vrot.lane.b32.xlu0 %v783, 123
        %v929 = vpop.permute.xlu0 %928
        %930 = vrot.lane.b32.xlu0 %v776, 123
        %v931 = vpop.permute.xlu0 %930
        %932 = vrot.lane.b32.xlu0 %v784, 123
        %v933 = vpop.permute.xlu0 %932
        %s937 = scalar_lea.vmem [#allocation2], 288
        %938 = vst.msk [vmem:[%s937] sm:$0xff] %vm785, %v929
        %939 = vst.msk [vmem:[%s937 + $0x8] sm:$0xff] %vm785, %v931
        %940 = vst.msk [vmem:[%s937 + $0x10] sm:$0x3f] %vm788, %v933
        %941 = vrot.lane.b32.xlu0 %v783, 122
        %v942 = vpop.permute.xlu0 %941
        %943 = vrot.lane.b32.xlu0 %v776, 122
        %v944 = vpop.permute.xlu0 %943
        %945 = vrot.lane.b32.xlu0 %v784, 122
        %v946 = vpop.permute.xlu0 %945
        %s950 = scalar_lea.vmem [#allocation2], 312
        %951 = vst.msk [vmem:[%s950] sm:$0xff] %vm785, %v942
        %952 = vst.msk [vmem:[%s950 + $0x8] sm:$0xff] %vm785, %v944
        %953 = vst.msk [vmem:[%s950 + $0x10] sm:$0x3f] %vm788, %v946
        %s954 = sld [smem:[#allocation3]]
        %v955 = vstv %s954
        %s956 = sld [smem:[#allocation9]]
        %v957 = vld [vmem:[#allocation2] sm:$0xff]
        %v958 = vld [vmem:[#allocation2 + $0x8] sm:$0xff]
        %v959 = vstv %s956
        %v960 = vmul.f32 %v959, %v957
        %v961 = vmul.f32 %v959, %v958
        %v962 = vadd.f32 %v955, %v960
        %v963 = vadd.f32 %v955, %v961
        %s964 = sld [smem:[#allocation9 + $0x1]]
        %v965 = vld [vmem:[%s801] sm:$0xff]
        %v966 = vld [vmem:[%s801 + $0x8] sm:$0xff]
        %v967 = vstv %s964
        %v968 = vmul.f32 %v967, %v965
        %v969 = vmul.f32 %v967, %v966
        %v970 = vadd.f32 %v962, %v968
        %v971 = vadd.f32 %v963, %v969
        %s972 = sld [smem:[#allocation9 + $0x2]]
        %v973 = vld [vmem:[%s814] sm:$0xff]
        %v974 = vld [vmem:[%s814 + $0x8] sm:$0xff]
        %v975 = vstv %s972
        %v976 = vmul.f32 %v975, %v973
        %v977 = vmul.f32 %v975, %v974
        %v978 = vadd.f32 %v970, %v976
        %v979 = vadd.f32 %v971, %v977
        %s980 = sld [smem:[#allocation9 + $0x3]]
        %v981 = vld [vmem:[%s827] sm:$0xff]
        %v982 = vld [vmem:[%s827 + $0x8] sm:$0xff]
        %v983 = vstv %s980
        %v984 = vmul.f32 %v983, %v981
        %v985 = vmul.f32 %v983, %v982
        %v986 = vadd.f32 %v978, %v984
        %v987 = vadd.f32 %v979, %v985
        %s988 = sld [smem:[#allocation9 + $0x4]]
        %v989 = vld [vmem:[%s840] sm:$0xff]
        %v990 = vld [vmem:[%s840 + $0x8] sm:$0xff]
        %v991 = vstv %s988
        %v992 = vmul.f32 %v991, %v989
        %v993 = vmul.f32 %v991, %v990
        %v994 = vadd.f32 %v986, %v992
        %v995 = vadd.f32 %v987, %v993
        %s996 = sld [smem:[#allocation9 + $0x5]]
        %v997 = vld [vmem:[%s853] sm:$0xff]
        %v998 = vld [vmem:[%s853 + $0x8] sm:$0xff]
        %v999 = vstv %s996
        %v1000 = vmul.f32 %v999, %v997
        %v1001 = vmul.f32 %v999, %v998
        %v1002 = vadd.f32 %v994, %v1000
        %v1003 = vadd.f32 %v995, %v1001
        %s1004 = sld [smem:[#allocation9 + $0x6]]
        %v1005 = vld [vmem:[%s866] sm:$0xff]
        %v1006 = vld [vmem:[%s866 + $0x8] sm:$0xff]
        %v1007 = vstv %s1004
        %v1008 = vmul.f32 %v1007, %v1005
        %v1009 = vmul.f32 %v1007, %v1006
        %v1010 = vadd.f32 %v1002, %v1008
        %v1011 = vadd.f32 %v1003, %v1009
        %s1012 = sld [smem:[#allocation9 + $0x7]]
        %v1013 = vld [vmem:[#allocation2 + $0x1] sm:$0xff]
        %v1014 = vld [vmem:[#allocation2 + $0x9] sm:$0xff]
        %v1015 = vstv %s1012
        %v1016 = vmul.f32 %v1015, %v1013
        %v1017 = vmul.f32 %v1015, %v1014
        %v1018 = vadd.f32 %v1010, %v1016
        %v1019 = vadd.f32 %v1011, %v1017
        %s1020 = sld [smem:[#allocation9 + $0x8]]
        %v1021 = vld [vmem:[%s801 + $0x1] sm:$0xff]
        %v1022 = vld [vmem:[%s801 + $0x9] sm:$0xff]
        %v1023 = vstv %s1020
        %v1024 = vmul.f32 %v1023, %v1021
        %v1025 = vmul.f32 %v1023, %v1022
        %v1026 = vadd.f32 %v1018, %v1024
        %v1027 = vadd.f32 %v1019, %v1025
        %s1028 = sld [smem:[#allocation9 + $0x9]]
        %v1029 = vld [vmem:[%s814 + $0x1] sm:$0xff]
        %v1030 = vld [vmem:[%s814 + $0x9] sm:$0xff]
        %v1031 = vstv %s1028
        %v1032 = vmul.f32 %v1031, %v1029
        %v1033 = vmul.f32 %v1031, %v1030
        %v1034 = vadd.f32 %v1026, %v1032
        %v1035 = vadd.f32 %v1027, %v1033
        %s1036 = sld [smem:[#allocation9 + $0xa]]
        %v1037 = vld [vmem:[%s827 + $0x1] sm:$0xff]
        %v1038 = vld [vmem:[%s827 + $0x9] sm:$0xff]
        %v1039 = vstv %s1036
        %v1040 = vmul.f32 %v1039, %v1037
        %v1041 = vmul.f32 %v1039, %v1038
        %v1042 = vadd.f32 %v1034, %v1040
        %v1043 = vadd.f32 %v1035, %v1041
        %s1044 = sld [smem:[#allocation9 + $0xb]]
        %v1045 = vld [vmem:[%s840 + $0x1] sm:$0xff]
        %v1046 = vld [vmem:[%s840 + $0x9] sm:$0xff]
        %v1047 = vstv %s1044
        %v1048 = vmul.f32 %v1047, %v1045
        %v1049 = vmul.f32 %v1047, %v1046
        %v1050 = vadd.f32 %v1042, %v1048
        %v1051 = vadd.f32 %v1043, %v1049
        %s1052 = sld [smem:[#allocation9 + $0xc]]
        %v1053 = vld [vmem:[%s853 + $0x1] sm:$0xff]
        %v1054 = vld [vmem:[%s853 + $0x9] sm:$0xff]
        %v1055 = vstv %s1052
        %v1056 = vmul.f32 %v1055, %v1053
        %v1057 = vmul.f32 %v1055, %v1054
        %v1058 = vadd.f32 %v1050, %v1056
        %v1059 = vadd.f32 %v1051, %v1057
        %s1060 = sld [smem:[#allocation9 + $0xd]]
        %v1061 = vld [vmem:[%s866 + $0x1] sm:$0xff]
        %v1062 = vld [vmem:[%s866 + $0x9] sm:$0xff]
        %v1063 = vstv %s1060
        %v1064 = vmul.f32 %v1063, %v1061
        %v1065 = vmul.f32 %v1063, %v1062
        %v1066 = vadd.f32 %v1058, %v1064
        %v1067 = vadd.f32 %v1059, %v1065
        %s1068 = sld [smem:[#allocation9 + $0xe]]
        %v1069 = vld [vmem:[#allocation2 + $0x2] sm:$0xff]
        %v1070 = vld [vmem:[#allocation2 + $0xa] sm:$0xff]
        %v1071 = vstv %s1068
        %v1072 = vmul.f32 %v1071, %v1069
        %v1073 = vmul.f32 %v1071, %v1070
        %v1074 = vadd.f32 %v1066, %v1072
        %v1075 = vadd.f32 %v1067, %v1073
        %s1076 = sld [smem:[#allocation9 + $0xf]]
        %v1077 = vld [vmem:[%s801 + $0x2] sm:$0xff]
        %v1078 = vld [vmem:[%s801 + $0xa] sm:$0xff]
        %v1079 = vstv %s1076
        %v1080 = vmul.f32 %v1079, %v1077
        %v1081 = vmul.f32 %v1079, %v1078
        %v1082 = vadd.f32 %v1074, %v1080
        %v1083 = vadd.f32 %v1075, %v1081
        %s1084 = sld [smem:[#allocation9 + $0x10]]
        %v1085 = vld [vmem:[%s814 + $0x2] sm:$0xff]
        %v1086 = vld [vmem:[%s814 + $0xa] sm:$0xff]
        %v1087 = vstv %s1084
        %v1088 = vmul.f32 %v1087, %v1085
        %v1089 = vmul.f32 %v1087, %v1086
        %v1090 = vadd.f32 %v1082, %v1088
        %v1091 = vadd.f32 %v1083, %v1089
        %s1092 = sld [smem:[#allocation9 + $0x11]]
        %v1093 = vld [vmem:[%s827 + $0x2] sm:$0xff]
        %v1094 = vld [vmem:[%s827 + $0xa] sm:$0xff]
        %v1095 = vstv %s1092
        %v1096 = vmul.f32 %v1095, %v1093
        %v1097 = vmul.f32 %v1095, %v1094
        %v1098 = vadd.f32 %v1090, %v1096
        %v1099 = vadd.f32 %v1091, %v1097
        %s1100 = sld [smem:[#allocation9 + $0x12]]
        %v1101 = vld [vmem:[%s840 + $0x2] sm:$0xff]
        %v1102 = vld [vmem:[%s840 + $0xa] sm:$0xff]
        %v1103 = vstv %s1100
        %v1104 = vmul.f32 %v1103, %v1101
        %v1105 = vmul.f32 %v1103, %v1102
        %v1106 = vadd.f32 %v1098, %v1104
        %v1107 = vadd.f32 %v1099, %v1105
        %s1108 = sld [smem:[#allocation9 + $0x13]]
        %v1109 = vld [vmem:[%s853 + $0x2] sm:$0xff]
        %v1110 = vld [vmem:[%s853 + $0xa] sm:$0xff]
        %v1111 = vstv %s1108
        %v1112 = vmul.f32 %v1111, %v1109
        %v1113 = vmul.f32 %v1111, %v1110
        %v1114 = vadd.f32 %v1106, %v1112
        %v1115 = vadd.f32 %v1107, %v1113
        %s1116 = sld [smem:[#allocation9 + $0x14]]
        %v1117 = vld [vmem:[%s866 + $0x2] sm:$0xff]
        %v1118 = vld [vmem:[%s866 + $0xa] sm:$0xff]
        %v1119 = vstv %s1116
        %v1120 = vmul.f32 %v1119, %v1117
        %v1121 = vmul.f32 %v1119, %v1118
        %v1122 = vadd.f32 %v1114, %v1120
        %v1123 = vadd.f32 %v1115, %v1121
        %s1124 = sld [smem:[#allocation9 + $0x15]]
        %v1125 = vld [vmem:[#allocation2 + $0x3] sm:$0xff]
        %v1126 = vld [vmem:[#allocation2 + $0xb] sm:$0xff]
        %v1127 = vstv %s1124
        %v1128 = vmul.f32 %v1127, %v1125
        %v1129 = vmul.f32 %v1127, %v1126
        %v1130 = vadd.f32 %v1122, %v1128
        %v1131 = vadd.f32 %v1123, %v1129
        %s1132 = sld [smem:[#allocation9 + $0x16]]
        %v1133 = vld [vmem:[%s801 + $0x3] sm:$0xff]
        %v1134 = vld [vmem:[%s801 + $0xb] sm:$0xff]
        %v1135 = vstv %s1132
        %v1136 = vmul.f32 %v1135, %v1133
        %v1137 = vmul.f32 %v1135, %v1134
        %v1138 = vadd.f32 %v1130, %v1136
        %v1139 = vadd.f32 %v1131, %v1137
        %s1140 = sld [smem:[#allocation9 + $0x17]]
        %v1141 = vld [vmem:[%s814 + $0x3] sm:$0xff]
        %v1142 = vld [vmem:[%s814 + $0xb] sm:$0xff]
        %v1143 = vstv %s1140
        %v1144 = vmul.f32 %v1143, %v1141
        %v1145 = vmul.f32 %v1143, %v1142
        %v1146 = vadd.f32 %v1138, %v1144
        %v1147 = vadd.f32 %v1139, %v1145
        %s1148 = sld [smem:[#allocation9 + $0x18]]
        %v1149 = vld [vmem:[%s827 + $0x3] sm:$0xff]
        %v1150 = vld [vmem:[%s827 + $0xb] sm:$0xff]
        %v1151 = vstv %s1148
        %v1152 = vmul.f32 %v1151, %v1149
        %v1153 = vmul.f32 %v1151, %v1150
        %v1154 = vadd.f32 %v1146, %v1152
        %v1155 = vadd.f32 %v1147, %v1153
        %s1156 = sld [smem:[#allocation9 + $0x19]]
        %v1157 = vld [vmem:[%s840 + $0x3] sm:$0xff]
        %v1158 = vld [vmem:[%s840 + $0xb] sm:$0xff]
        %v1159 = vstv %s1156
        %v1160 = vmul.f32 %v1159, %v1157
        %v1161 = vmul.f32 %v1159, %v1158
        %v1162 = vadd.f32 %v1154, %v1160
        %v1163 = vadd.f32 %v1155, %v1161
        %s1164 = sld [smem:[#allocation9 + $0x1a]]
        %v1165 = vld [vmem:[%s853 + $0x3] sm:$0xff]
        %v1166 = vld [vmem:[%s853 + $0xb] sm:$0xff]
        %v1167 = vstv %s1164
        %v1168 = vmul.f32 %v1167, %v1165
        %v1169 = vmul.f32 %v1167, %v1166
        %v1170 = vadd.f32 %v1162, %v1168
        %v1171 = vadd.f32 %v1163, %v1169
        %s1172 = sld [smem:[#allocation9 + $0x1b]]
        %v1173 = vld [vmem:[%s866 + $0x3] sm:$0xff]
        %v1174 = vld [vmem:[%s866 + $0xb] sm:$0xff]
        %v1175 = vstv %s1172
        %v1176 = vmul.f32 %v1175, %v1173
        %v1177 = vmul.f32 %v1175, %v1174
        %v1178 = vadd.f32 %v1170, %v1176
        %v1179 = vadd.f32 %v1171, %v1177
        %s1180 = sld [smem:[#allocation9 + $0x1c]]
        %v1181 = vld [vmem:[#allocation2 + $0x4] sm:$0xff]
        %v1182 = vld [vmem:[#allocation2 + $0xc] sm:$0xff]
        %v1183 = vstv %s1180
        %v1184 = vmul.f32 %v1183, %v1181
        %v1185 = vmul.f32 %v1183, %v1182
        %v1186 = vadd.f32 %v1178, %v1184
        %v1187 = vadd.f32 %v1179, %v1185
        %s1188 = sld [smem:[#allocation9 + $0x1d]]
        %v1189 = vld [vmem:[%s801 + $0x4] sm:$0xff]
        %v1190 = vld [vmem:[%s801 + $0xc] sm:$0xff]
        %v1191 = vstv %s1188
        %v1192 = vmul.f32 %v1191, %v1189
        %v1193 = vmul.f32 %v1191, %v1190
        %v1194 = vadd.f32 %v1186, %v1192
        %v1195 = vadd.f32 %v1187, %v1193
        %s1196 = sld [smem:[#allocation9 + $0x1e]]
        %v1197 = vld [vmem:[%s814 + $0x4] sm:$0xff]
        %v1198 = vld [vmem:[%s814 + $0xc] sm:$0xff]
        %v1199 = vstv %s1196
        %v1200 = vmul.f32 %v1199, %v1197
        %v1201 = vmul.f32 %v1199, %v1198
        %v1202 = vadd.f32 %v1194, %v1200
        %v1203 = vadd.f32 %v1195, %v1201
        %s1204 = sld [smem:[#allocation9 + $0x1f]]
        %v1205 = vld [vmem:[%s827 + $0x4] sm:$0xff]
        %v1206 = vld [vmem:[%s827 + $0xc] sm:$0xff]
        %v1207 = vstv %s1204
        %v1208 = vmul.f32 %v1207, %v1205
        %v1209 = vmul.f32 %v1207, %v1206
        %v1210 = vadd.f32 %v1202, %v1208
        %v1211 = vadd.f32 %v1203, %v1209
        %s1212 = sld [smem:[#allocation9 + $0x20]]
        %v1213 = vld [vmem:[%s840 + $0x4] sm:$0xff]
        %v1214 = vld [vmem:[%s840 + $0xc] sm:$0xff]
        %v1215 = vstv %s1212
        %v1216 = vmul.f32 %v1215, %v1213
        %v1217 = vmul.f32 %v1215, %v1214
        %v1218 = vadd.f32 %v1210, %v1216
        %v1219 = vadd.f32 %v1211, %v1217
        %s1220 = sld [smem:[#allocation9 + $0x21]]
        %v1221 = vld [vmem:[%s853 + $0x4] sm:$0xff]
        %v1222 = vld [vmem:[%s853 + $0xc] sm:$0xff]
        %v1223 = vstv %s1220
        %v1224 = vmul.f32 %v1223, %v1221
        %v1225 = vmul.f32 %v1223, %v1222
        %v1226 = vadd.f32 %v1218, %v1224
        %v1227 = vadd.f32 %v1219, %v1225
        %s1228 = sld [smem:[#allocation9 + $0x22]]
        %v1229 = vld [vmem:[%s866 + $0x4] sm:$0xff]
        %v1230 = vld [vmem:[%s866 + $0xc] sm:$0xff]
        %v1231 = vstv %s1228
        %v1232 = vmul.f32 %v1231, %v1229
        %v1233 = vmul.f32 %v1231, %v1230
        %v1234 = vadd.f32 %v1226, %v1232
        %v1235 = vadd.f32 %v1227, %v1233
        %s1236 = sld [smem:[#allocation9 + $0x23]]
        %v1237 = vld [vmem:[#allocation2 + $0x5] sm:$0xff]
        %v1238 = vld [vmem:[#allocation2 + $0xd] sm:$0xff]
        %v1239 = vstv %s1236
        %v1240 = vmul.f32 %v1239, %v1237
        %v1241 = vmul.f32 %v1239, %v1238
        %v1242 = vadd.f32 %v1234, %v1240
        %v1243 = vadd.f32 %v1235, %v1241
        %s1244 = sld [smem:[#allocation9 + $0x24]]
        %v1245 = vld [vmem:[%s801 + $0x5] sm:$0xff]
        %v1246 = vld [vmem:[%s801 + $0xd] sm:$0xff]
        %v1247 = vstv %s1244
        %v1248 = vmul.f32 %v1247, %v1245
        %v1249 = vmul.f32 %v1247, %v1246
        %v1250 = vadd.f32 %v1242, %v1248
        %v1251 = vadd.f32 %v1243, %v1249
        %s1252 = sld [smem:[#allocation9 + $0x25]]
        %v1253 = vld [vmem:[%s814 + $0x5] sm:$0xff]
        %v1254 = vld [vmem:[%s814 + $0xd] sm:$0xff]
        %v1255 = vstv %s1252
        %v1256 = vmul.f32 %v1255, %v1253
        %v1257 = vmul.f32 %v1255, %v1254
        %v1258 = vadd.f32 %v1250, %v1256
        %v1259 = vadd.f32 %v1251, %v1257
        %s1260 = sld [smem:[#allocation9 + $0x26]]
        %v1261 = vld [vmem:[%s827 + $0x5] sm:$0xff]
        %v1262 = vld [vmem:[%s827 + $0xd] sm:$0xff]
        %v1263 = vstv %s1260
        %v1264 = vmul.f32 %v1263, %v1261
        %v1265 = vmul.f32 %v1263, %v1262
        %v1266 = vadd.f32 %v1258, %v1264
        %v1267 = vadd.f32 %v1259, %v1265
        %s1268 = sld [smem:[#allocation9 + $0x27]]
        %v1269 = vld [vmem:[%s840 + $0x5] sm:$0xff]
        %v1270 = vld [vmem:[%s840 + $0xd] sm:$0xff]
        %v1271 = vstv %s1268
        %v1272 = vmul.f32 %v1271, %v1269
        %v1273 = vmul.f32 %v1271, %v1270
        %v1274 = vadd.f32 %v1266, %v1272
        %v1275 = vadd.f32 %v1267, %v1273
        %s1276 = sld [smem:[#allocation9 + $0x28]]
        %v1277 = vld [vmem:[%s853 + $0x5] sm:$0xff]
        %v1278 = vld [vmem:[%s853 + $0xd] sm:$0xff]
        %v1279 = vstv %s1276
        %v1280 = vmul.f32 %v1279, %v1277
        %v1281 = vmul.f32 %v1279, %v1278
        %v1282 = vadd.f32 %v1274, %v1280
        %v1283 = vadd.f32 %v1275, %v1281
        %s1284 = sld [smem:[#allocation9 + $0x29]]
        %v1285 = vld [vmem:[%s866 + $0x5] sm:$0xff]
        %v1286 = vld [vmem:[%s866 + $0xd] sm:$0xff]
        %v1287 = vstv %s1284
        %v1288 = vmul.f32 %v1287, %v1285
        %v1289 = vmul.f32 %v1287, %v1286
        %v1290 = vadd.f32 %v1282, %v1288
        %v1291 = vadd.f32 %v1283, %v1289
        %s1292 = sld [smem:[#allocation9 + $0x2a]]
        %v1293 = vld [vmem:[#allocation2 + $0x6] sm:$0xff]
        %v1294 = vld [vmem:[#allocation2 + $0xe] sm:$0xff]
        %v1295 = vstv %s1292
        %v1296 = vmul.f32 %v1295, %v1293
        %v1297 = vmul.f32 %v1295, %v1294
        %v1298 = vadd.f32 %v1290, %v1296
        %v1299 = vadd.f32 %v1291, %v1297
        %s1300 = sld [smem:[#allocation9 + $0x2b]]
        %v1301 = vld [vmem:[%s801 + $0x6] sm:$0xff]
        %v1302 = vld [vmem:[%s801 + $0xe] sm:$0xff]
        %v1303 = vstv %s1300
        %v1304 = vmul.f32 %v1303, %v1301
        %v1305 = vmul.f32 %v1303, %v1302
        %v1306 = vadd.f32 %v1298, %v1304
        %v1307 = vadd.f32 %v1299, %v1305
        %s1308 = sld [smem:[#allocation9 + $0x2c]]
        %v1309 = vld [vmem:[%s814 + $0x6] sm:$0xff]
        %v1310 = vld [vmem:[%s814 + $0xe] sm:$0xff]
        %v1311 = vstv %s1308
        %v1312 = vmul.f32 %v1311, %v1309
        %v1313 = vmul.f32 %v1311, %v1310
        %v1314 = vadd.f32 %v1306, %v1312
        %v1315 = vadd.f32 %v1307, %v1313
        %s1316 = sld [smem:[#allocation9 + $0x2d]]
        %v1317 = vld [vmem:[%s827 + $0x6] sm:$0xff]
        %v1318 = vld [vmem:[%s827 + $0xe] sm:$0xff]
        %v1319 = vstv %s1316
        %v1320 = vmul.f32 %v1319, %v1317
        %v1321 = vmul.f32 %v1319, %v1318
        %v1322 = vadd.f32 %v1314, %v1320
        %v1323 = vadd.f32 %v1315, %v1321
        %s1324 = sld [smem:[#allocation9 + $0x2e]]
        %v1325 = vld [vmem:[%s840 + $0x6] sm:$0xff]
        %v1326 = vld [vmem:[%s840 + $0xe] sm:$0xff]
        %v1327 = vstv %s1324
        %v1328 = vmul.f32 %v1327, %v1325
        %v1329 = vmul.f32 %v1327, %v1326
        %v1330 = vadd.f32 %v1322, %v1328
        %v1331 = vadd.f32 %v1323, %v1329
        %s1332 = sld [smem:[#allocation9 + $0x2f]]
        %v1333 = vld [vmem:[%s853 + $0x6] sm:$0xff]
        %v1334 = vld [vmem:[%s853 + $0xe] sm:$0xff]
        %v1335 = vstv %s1332
        %v1336 = vmul.f32 %v1335, %v1333
        %v1337 = vmul.f32 %v1335, %v1334
        %v1338 = vadd.f32 %v1330, %v1336
        %v1339 = vadd.f32 %v1331, %v1337
        %s1340 = sld [smem:[#allocation9 + $0x30]]
        %v1341 = vld [vmem:[%s866 + $0x6] sm:$0xff]
        %v1342 = vld [vmem:[%s866 + $0xe] sm:$0xff]
        %v1343 = vstv %s1340
        %v1344 = vmul.f32 %v1343, %v1341
        %v1345 = vmul.f32 %v1343, %v1342
        %v1346 = vadd.f32 %v1338, %v1344
        %v1347 = vadd.f32 %v1339, %v1345
        %s1348 = sld [smem:[#allocation9 + $0x31]]
        %v1349 = vld [vmem:[%s870] sm:$0xff]
        %v1350 = vld [vmem:[%s870 + $0x8] sm:$0xff]
        %v1351 = vstv %s1348
        %v1352 = vmul.f32 %v1351, %v1349
        %v1353 = vmul.f32 %v1351, %v1350
        %v1354 = vadd.f32 %v1346, %v1352
        %v1355 = vadd.f32 %v1347, %v1353
        %s1356 = sld [smem:[#allocation9 + $0x32]]
        %v1357 = vld [vmem:[%s885] sm:$0xff]
        %v1358 = vld [vmem:[%s885 + $0x8] sm:$0xff]
        %v1359 = vstv %s1356
        %v1360 = vmul.f32 %v1359, %v1357
        %v1361 = vmul.f32 %v1359, %v1358
        %v1362 = vadd.f32 %v1354, %v1360
        %v1363 = vadd.f32 %v1355, %v1361
        %s1364 = sld [smem:[#allocation9 + $0x33]]
        %v1365 = vld [vmem:[%s898] sm:$0xff]
        %v1366 = vld [vmem:[%s898 + $0x8] sm:$0xff]
        %v1367 = vstv %s1364
        %v1368 = vmul.f32 %v1367, %v1365
        %v1369 = vmul.f32 %v1367, %v1366
        %v1370 = vadd.f32 %v1362, %v1368
        %v1371 = vadd.f32 %v1363, %v1369
        %s1372 = sld [smem:[#allocation9 + $0x34]]
        %v1373 = vld [vmem:[%s911] sm:$0xff]
        %v1374 = vld [vmem:[%s911 + $0x8] sm:$0xff]
        %v1375 = vstv %s1372
        %v1376 = vmul.f32 %v1375, %v1373
        %v1377 = vmul.f32 %v1375, %v1374
        %v1378 = vadd.f32 %v1370, %v1376
        %v1379 = vadd.f32 %v1371, %v1377
        %s1380 = sld [smem:[#allocation9 + $0x35]]
        %v1381 = vld [vmem:[%s924] sm:$0xff]
        %v1382 = vld [vmem:[%s924 + $0x8] sm:$0xff]
        %v1383 = vstv %s1380
        %v1384 = vmul.f32 %v1383, %v1381
        %v1385 = vmul.f32 %v1383, %v1382
        %v1386 = vadd.f32 %v1378, %v1384
        %v1387 = vadd.f32 %v1379, %v1385
        %s1388 = sld [smem:[#allocation9 + $0x36]]
        %v1389 = vld [vmem:[%s937] sm:$0xff]
        %v1390 = vld [vmem:[%s937 + $0x8] sm:$0xff]
        %v1391 = vstv %s1388
        %v1392 = vmul.f32 %v1391, %v1389
        %v1393 = vmul.f32 %v1391, %v1390
        %v1394 = vadd.f32 %v1386, %v1392
        %v1395 = vadd.f32 %v1387, %v1393
        %s1396 = sld [smem:[#allocation9 + $0x37]]
        %v1397 = vld [vmem:[%s950] sm:$0xff]
        %v1398 = vld [vmem:[%s950 + $0x8] sm:$0xff]
        %v1399 = vstv %s1396
        %v1400 = vmul.f32 %v1399, %v1397
        %v1401 = vmul.f32 %v1399, %v1398
        %v1402 = vadd.f32 %v1394, %v1400
        %v1403 = vadd.f32 %v1395, %v1401
        %s1404 = sld [smem:[#allocation9 + $0x38]]
        %v1405 = vld [vmem:[%s870 + $0x1] sm:$0xff]
        %v1406 = vld [vmem:[%s870 + $0x9] sm:$0xff]
        %v1407 = vstv %s1404
        %v1408 = vmul.f32 %v1407, %v1405
        %v1409 = vmul.f32 %v1407, %v1406
        %v1410 = vadd.f32 %v1402, %v1408
        %v1411 = vadd.f32 %v1403, %v1409
        %s1412 = sld [smem:[#allocation9 + $0x39]]
        %v1413 = vld [vmem:[%s885 + $0x1] sm:$0xff]
        %v1414 = vld [vmem:[%s885 + $0x9] sm:$0xff]
        %v1415 = vstv %s1412
        %v1416 = vmul.f32 %v1415, %v1413
        %v1417 = vmul.f32 %v1415, %v1414
        %v1418 = vadd.f32 %v1410, %v1416
        %v1419 = vadd.f32 %v1411, %v1417
        %s1420 = sld [smem:[#allocation9 + $0x3a]]
        %v1421 = vld [vmem:[%s898 + $0x1] sm:$0xff]
        %v1422 = vld [vmem:[%s898 + $0x9] sm:$0xff]
        %v1423 = vstv %s1420
        %v1424 = vmul.f32 %v1423, %v1421
        %v1425 = vmul.f32 %v1423, %v1422
        %v1426 = vadd.f32 %v1418, %v1424
        %v1427 = vadd.f32 %v1419, %v1425
        %s1428 = sld [smem:[#allocation9 + $0x3b]]
        %v1429 = vld [vmem:[%s911 + $0x1] sm:$0xff]
        %v1430 = vld [vmem:[%s911 + $0x9] sm:$0xff]
        %v1431 = vstv %s1428
        %v1432 = vmul.f32 %v1431, %v1429
        %v1433 = vmul.f32 %v1431, %v1430
        %v1434 = vadd.f32 %v1426, %v1432
        %v1435 = vadd.f32 %v1427, %v1433
        %s1436 = sld [smem:[#allocation9 + $0x3c]]
        %v1437 = vld [vmem:[%s924 + $0x1] sm:$0xff]
        %v1438 = vld [vmem:[%s924 + $0x9] sm:$0xff]
        %v1439 = vstv %s1436
        %v1440 = vmul.f32 %v1439, %v1437
        %v1441 = vmul.f32 %v1439, %v1438
        %v1442 = vadd.f32 %v1434, %v1440
        %v1443 = vadd.f32 %v1435, %v1441
        %s1444 = sld [smem:[#allocation9 + $0x3d]]
        %v1445 = vld [vmem:[%s937 + $0x1] sm:$0xff]
        %v1446 = vld [vmem:[%s937 + $0x9] sm:$0xff]
        %v1447 = vstv %s1444
        %v1448 = vmul.f32 %v1447, %v1445
        %v1449 = vmul.f32 %v1447, %v1446
        %v1450 = vadd.f32 %v1442, %v1448
        %v1451 = vadd.f32 %v1443, %v1449
        %s1452 = sld [smem:[#allocation9 + $0x3e]]
        %v1453 = vld [vmem:[%s950 + $0x1] sm:$0xff]
        %v1454 = vld [vmem:[%s950 + $0x9] sm:$0xff]
        %v1455 = vstv %s1452
        %v1456 = vmul.f32 %v1455, %v1453
        %v1457 = vmul.f32 %v1455, %v1454
        %v1458 = vadd.f32 %v1450, %v1456
        %v1459 = vadd.f32 %v1451, %v1457
        %s1460 = sld [smem:[#allocation9 + $0x3f]]
        %v1461 = vld [vmem:[%s870 + $0x2] sm:$0xff]
        %v1462 = vld [vmem:[%s870 + $0xa] sm:$0xff]
        %v1463 = vstv %s1460
        %v1464 = vmul.f32 %v1463, %v1461
        %v1465 = vmul.f32 %v1463, %v1462
        %v1466 = vadd.f32 %v1458, %v1464
        %v1467 = vadd.f32 %v1459, %v1465
        %s1468 = sld [smem:[#allocation9 + $0x40]]
        %v1469 = vld [vmem:[%s885 + $0x2] sm:$0xff]
        %v1470 = vld [vmem:[%s885 + $0xa] sm:$0xff]
        %v1471 = vstv %s1468
        %v1472 = vmul.f32 %v1471, %v1469
        %v1473 = vmul.f32 %v1471, %v1470
        %v1474 = vadd.f32 %v1466, %v1472
        %v1475 = vadd.f32 %v1467, %v1473
        %s1476 = sld [smem:[#allocation9 + $0x41]]
        %v1477 = vld [vmem:[%s898 + $0x2] sm:$0xff]
        %v1478 = vld [vmem:[%s898 + $0xa] sm:$0xff]
        %v1479 = vstv %s1476
        %v1480 = vmul.f32 %v1479, %v1477
        %v1481 = vmul.f32 %v1479, %v1478
        %v1482 = vadd.f32 %v1474, %v1480
        %v1483 = vadd.f32 %v1475, %v1481
        %s1484 = sld [smem:[#allocation9 + $0x42]]
        %v1485 = vld [vmem:[%s911 + $0x2] sm:$0xff]
        %v1486 = vld [vmem:[%s911 + $0xa] sm:$0xff]
        %v1487 = vstv %s1484
        %v1488 = vmul.f32 %v1487, %v1485
        %v1489 = vmul.f32 %v1487, %v1486
        %v1490 = vadd.f32 %v1482, %v1488
        %v1491 = vadd.f32 %v1483, %v1489
        %s1492 = sld [smem:[#allocation9 + $0x43]]
        %v1493 = vld [vmem:[%s924 + $0x2] sm:$0xff]
        %v1494 = vld [vmem:[%s924 + $0xa] sm:$0xff]
        %v1495 = vstv %s1492
        %v1496 = vmul.f32 %v1495, %v1493
        %v1497 = vmul.f32 %v1495, %v1494
        %v1498 = vadd.f32 %v1490, %v1496
        %v1499 = vadd.f32 %v1491, %v1497
        %s1500 = sld [smem:[#allocation9 + $0x44]]
        %v1501 = vld [vmem:[%s937 + $0x2] sm:$0xff]
        %v1502 = vld [vmem:[%s937 + $0xa] sm:$0xff]
        %v1503 = vstv %s1500
        %v1504 = vmul.f32 %v1503, %v1501
        %v1505 = vmul.f32 %v1503, %v1502
        %v1506 = vadd.f32 %v1498, %v1504
        %v1507 = vadd.f32 %v1499, %v1505
        %s1508 = sld [smem:[#allocation9 + $0x45]]
        %v1509 = vld [vmem:[%s950 + $0x2] sm:$0xff]
        %v1510 = vld [vmem:[%s950 + $0xa] sm:$0xff]
        %v1511 = vstv %s1508
        %v1512 = vmul.f32 %v1511, %v1509
        %v1513 = vmul.f32 %v1511, %v1510
        %v1514 = vadd.f32 %v1506, %v1512
        %v1515 = vadd.f32 %v1507, %v1513
        %s1516 = sld [smem:[#allocation9 + $0x46]]
        %v1517 = vld [vmem:[%s870 + $0x3] sm:$0xff]
        %v1518 = vld [vmem:[%s870 + $0xb] sm:$0xff]
        %v1519 = vstv %s1516
        %v1520 = vmul.f32 %v1519, %v1517
        %v1521 = vmul.f32 %v1519, %v1518
        %v1522 = vadd.f32 %v1514, %v1520
        %v1523 = vadd.f32 %v1515, %v1521
        %s1524 = sld [smem:[#allocation9 + $0x47]]
        %v1525 = vld [vmem:[%s885 + $0x3] sm:$0xff]
        %v1526 = vld [vmem:[%s885 + $0xb] sm:$0xff]
        %v1527 = vstv %s1524
        %v1528 = vmul.f32 %v1527, %v1525
        %v1529 = vmul.f32 %v1527, %v1526
        %v1530 = vadd.f32 %v1522, %v1528
        %v1531 = vadd.f32 %v1523, %v1529
        %s1532 = sld [smem:[#allocation9 + $0x48]]
        %v1533 = vld [vmem:[%s898 + $0x3] sm:$0xff]
        %v1534 = vld [vmem:[%s898 + $0xb] sm:$0xff]
        %v1535 = vstv %s1532
        %v1536 = vmul.f32 %v1535, %v1533
        %v1537 = vmul.f32 %v1535, %v1534
        %v1538 = vadd.f32 %v1530, %v1536
        %v1539 = vadd.f32 %v1531, %v1537
        %s1540 = sld [smem:[#allocation9 + $0x49]]
        %v1541 = vld [vmem:[%s911 + $0x3] sm:$0xff]
        %v1542 = vld [vmem:[%s911 + $0xb] sm:$0xff]
        %v1543 = vstv %s1540
        %v1544 = vmul.f32 %v1543, %v1541
        %v1545 = vmul.f32 %v1543, %v1542
        %v1546 = vadd.f32 %v1538, %v1544
        %v1547 = vadd.f32 %v1539, %v1545
        %s1548 = sld [smem:[#allocation9 + $0x4a]]
        %v1549 = vld [vmem:[%s924 + $0x3] sm:$0xff]
        %v1550 = vld [vmem:[%s924 + $0xb] sm:$0xff]
        %v1551 = vstv %s1548
        %v1552 = vmul.f32 %v1551, %v1549
        %v1553 = vmul.f32 %v1551, %v1550
        %v1554 = vadd.f32 %v1546, %v1552
        %v1555 = vadd.f32 %v1547, %v1553
        %s1556 = sld [smem:[#allocation9 + $0x4b]]
        %v1557 = vld [vmem:[%s937 + $0x3] sm:$0xff]
        %v1558 = vld [vmem:[%s937 + $0xb] sm:$0xff]
        %v1559 = vstv %s1556
        %v1560 = vmul.f32 %v1559, %v1557
        %v1561 = vmul.f32 %v1559, %v1558
        %v1562 = vadd.f32 %v1554, %v1560
        %v1563 = vadd.f32 %v1555, %v1561
        %s1564 = sld [smem:[#allocation9 + $0x4c]]
        %v1565 = vld [vmem:[%s950 + $0x3] sm:$0xff]
        %v1566 = vld [vmem:[%s950 + $0xb] sm:$0xff]
        %v1567 = vstv %s1564
        %v1568 = vmul.f32 %v1567, %v1565
        %v1569 = vmul.f32 %v1567, %v1566
        %v1570 = vadd.f32 %v1562, %v1568
        %v1571 = vadd.f32 %v1563, %v1569
        %s1572 = sld [smem:[#allocation9 + $0x4d]]
        %v1573 = vld [vmem:[%s870 + $0x4] sm:$0xff]
        %v1574 = vld [vmem:[%s870 + $0xc] sm:$0xff]
        %v1575 = vstv %s1572
        %v1576 = vmul.f32 %v1575, %v1573
        %v1577 = vmul.f32 %v1575, %v1574
        %v1578 = vadd.f32 %v1570, %v1576
        %v1579 = vadd.f32 %v1571, %v1577
        %s1580 = sld [smem:[#allocation9 + $0x4e]]
        %v1581 = vld [vmem:[%s885 + $0x4] sm:$0xff]
        %v1582 = vld [vmem:[%s885 + $0xc] sm:$0xff]
        %v1583 = vstv %s1580
        %v1584 = vmul.f32 %v1583, %v1581
        %v1585 = vmul.f32 %v1583, %v1582
        %v1586 = vadd.f32 %v1578, %v1584
        %v1587 = vadd.f32 %v1579, %v1585
        %s1588 = sld [smem:[#allocation9 + $0x4f]]
        %v1589 = vld [vmem:[%s898 + $0x4] sm:$0xff]
        %v1590 = vld [vmem:[%s898 + $0xc] sm:$0xff]
        %v1591 = vstv %s1588
        %v1592 = vmul.f32 %v1591, %v1589
        %v1593 = vmul.f32 %v1591, %v1590
        %v1594 = vadd.f32 %v1586, %v1592
        %v1595 = vadd.f32 %v1587, %v1593
        %s1596 = sld [smem:[#allocation9 + $0x50]]
        %v1597 = vld [vmem:[%s911 + $0x4] sm:$0xff]
        %v1598 = vld [vmem:[%s911 + $0xc] sm:$0xff]
        %v1599 = vstv %s1596
        %v1600 = vmul.f32 %v1599, %v1597
        %v1601 = vmul.f32 %v1599, %v1598
        %v1602 = vadd.f32 %v1594, %v1600
        %v1603 = vadd.f32 %v1595, %v1601
        %s1604 = sld [smem:[#allocation9 + $0x51]]
        %v1605 = vld [vmem:[%s924 + $0x4] sm:$0xff]
        %v1606 = vld [vmem:[%s924 + $0xc] sm:$0xff]
        %v1607 = vstv %s1604
        %v1608 = vmul.f32 %v1607, %v1605
        %v1609 = vmul.f32 %v1607, %v1606
        %v1610 = vadd.f32 %v1602, %v1608
        %v1611 = vadd.f32 %v1603, %v1609
        %s1612 = sld [smem:[#allocation9 + $0x52]]
        %v1613 = vld [vmem:[%s937 + $0x4] sm:$0xff]
        %v1614 = vld [vmem:[%s937 + $0xc] sm:$0xff]
        %v1615 = vstv %s1612
        %v1616 = vmul.f32 %v1615, %v1613
        %v1617 = vmul.f32 %v1615, %v1614
        %v1618 = vadd.f32 %v1610, %v1616
        %v1619 = vadd.f32 %v1611, %v1617
        %s1620 = sld [smem:[#allocation9 + $0x53]]
        %v1621 = vld [vmem:[%s950 + $0x4] sm:$0xff]
        %v1622 = vld [vmem:[%s950 + $0xc] sm:$0xff]
        %v1623 = vstv %s1620
        %v1624 = vmul.f32 %v1623, %v1621
        %v1625 = vmul.f32 %v1623, %v1622
        %v1626 = vadd.f32 %v1618, %v1624
        %v1627 = vadd.f32 %v1619, %v1625
        %s1628 = sld [smem:[#allocation9 + $0x54]]
        %v1629 = vld [vmem:[%s870 + $0x5] sm:$0xff]
        %v1630 = vld [vmem:[%s870 + $0xd] sm:$0xff]
        %v1631 = vstv %s1628
        %v1632 = vmul.f32 %v1631, %v1629
        %v1633 = vmul.f32 %v1631, %v1630
        %v1634 = vadd.f32 %v1626, %v1632
        %v1635 = vadd.f32 %v1627, %v1633
        %s1636 = sld [smem:[#allocation9 + $0x55]]
        %v1637 = vld [vmem:[%s885 + $0x5] sm:$0xff]
        %v1638 = vld [vmem:[%s885 + $0xd] sm:$0xff]
        %v1639 = vstv %s1636
        %v1640 = vmul.f32 %v1639, %v1637
        %v1641 = vmul.f32 %v1639, %v1638
        %v1642 = vadd.f32 %v1634, %v1640
        %v1643 = vadd.f32 %v1635, %v1641
        %s1644 = sld [smem:[#allocation9 + $0x56]]
        %v1645 = vld [vmem:[%s898 + $0x5] sm:$0xff]
        %v1646 = vld [vmem:[%s898 + $0xd] sm:$0xff]
        %v1647 = vstv %s1644
        %v1648 = vmul.f32 %v1647, %v1645
        %v1649 = vmul.f32 %v1647, %v1646
        %v1650 = vadd.f32 %v1642, %v1648
        %v1651 = vadd.f32 %v1643, %v1649
        %s1652 = sld [smem:[#allocation9 + $0x57]]
        %v1653 = vld [vmem:[%s911 + $0x5] sm:$0xff]
        %v1654 = vld [vmem:[%s911 + $0xd] sm:$0xff]
        %v1655 = vstv %s1652
        %v1656 = vmul.f32 %v1655, %v1653
        %v1657 = vmul.f32 %v1655, %v1654
        %v1658 = vadd.f32 %v1650, %v1656
        %v1659 = vadd.f32 %v1651, %v1657
        %s1660 = sld [smem:[#allocation9 + $0x58]]
        %v1661 = vld [vmem:[%s924 + $0x5] sm:$0xff]
        %v1662 = vld [vmem:[%s924 + $0xd] sm:$0xff]
        %v1663 = vstv %s1660
        %v1664 = vmul.f32 %v1663, %v1661
        %v1665 = vmul.f32 %v1663, %v1662
        %v1666 = vadd.f32 %v1658, %v1664
        %v1667 = vadd.f32 %v1659, %v1665
        %s1668 = sld [smem:[#allocation9 + $0x59]]
        %v1669 = vld [vmem:[%s937 + $0x5] sm:$0xff]
        %v1670 = vld [vmem:[%s937 + $0xd] sm:$0xff]
        %v1671 = vstv %s1668
        %v1672 = vmul.f32 %v1671, %v1669
        %v1673 = vmul.f32 %v1671, %v1670
        %v1674 = vadd.f32 %v1666, %v1672
        %v1675 = vadd.f32 %v1667, %v1673
        %s1676 = sld [smem:[#allocation9 + $0x5a]]
        %v1677 = vld [vmem:[%s950 + $0x5] sm:$0xff]
        %v1678 = vld [vmem:[%s950 + $0xd] sm:$0xff]
        %v1679 = vstv %s1676
        %v1680 = vmul.f32 %v1679, %v1677
        %v1681 = vmul.f32 %v1679, %v1678
        %v1682 = vadd.f32 %v1674, %v1680
        %v1683 = vadd.f32 %v1675, %v1681
        %s1684 = sld [smem:[#allocation9 + $0x5b]]
        %v1685 = vld [vmem:[%s870 + $0x6] sm:$0xff]
        %v1686 = vld [vmem:[%s870 + $0xe] sm:$0xff]
        %v1687 = vstv %s1684
        %v1688 = vmul.f32 %v1687, %v1685
        %v1689 = vmul.f32 %v1687, %v1686
        %v1690 = vadd.f32 %v1682, %v1688
        %v1691 = vadd.f32 %v1683, %v1689
        %s1692 = sld [smem:[#allocation9 + $0x5c]]
        %v1693 = vld [vmem:[%s885 + $0x6] sm:$0xff]
        %v1694 = vld [vmem:[%s885 + $0xe] sm:$0xff]
        %v1695 = vstv %s1692
        %v1696 = vmul.f32 %v1695, %v1693
        %v1697 = vmul.f32 %v1695, %v1694
        %v1698 = vadd.f32 %v1690, %v1696
        %v1699 = vadd.f32 %v1691, %v1697
        %s1700 = sld [smem:[#allocation9 + $0x5d]]
        %v1701 = vld [vmem:[%s898 + $0x6] sm:$0xff]
        %v1702 = vld [vmem:[%s898 + $0xe] sm:$0xff]
        %v1703 = vstv %s1700
        %v1704 = vmul.f32 %v1703, %v1701
        %v1705 = vmul.f32 %v1703, %v1702
        %v1706 = vadd.f32 %v1698, %v1704
        %v1707 = vadd.f32 %v1699, %v1705
        %s1708 = sld [smem:[#allocation9 + $0x5e]]
        %v1709 = vld [vmem:[%s911 + $0x6] sm:$0xff]
        %v1710 = vld [vmem:[%s911 + $0xe] sm:$0xff]
        %v1711 = vstv %s1708
        %v1712 = vmul.f32 %v1711, %v1709
        %v1713 = vmul.f32 %v1711, %v1710
        %v1714 = vadd.f32 %v1706, %v1712
        %v1715 = vadd.f32 %v1707, %v1713
        %s1716 = sld [smem:[#allocation9 + $0x5f]]
        %v1717 = vld [vmem:[%s924 + $0x6] sm:$0xff]
        %v1718 = vld [vmem:[%s924 + $0xe] sm:$0xff]
        %v1719 = vstv %s1716
        %v1720 = vmul.f32 %v1719, %v1717
        %v1721 = vmul.f32 %v1719, %v1718
        %v1722 = vadd.f32 %v1714, %v1720
        %v1723 = vadd.f32 %v1715, %v1721
        %s1724 = sld [smem:[#allocation9 + $0x60]]
        %v1725 = vld [vmem:[%s937 + $0x6] sm:$0xff]
        %v1726 = vld [vmem:[%s937 + $0xe] sm:$0xff]
        %v1727 = vstv %s1724
        %v1728 = vmul.f32 %v1727, %v1725
        %v1729 = vmul.f32 %v1727, %v1726
        %v1730 = vadd.f32 %v1722, %v1728
        %v1731 = vadd.f32 %v1723, %v1729
        %s1732 = sld [smem:[#allocation9 + $0x61]]
        %v1733 = vld [vmem:[%s950 + $0x6] sm:$0xff]
        %v1734 = vld [vmem:[%s950 + $0xe] sm:$0xff]
        %v1735 = vstv %s1732
        %v1736 = vmul.f32 %v1735, %v1733
        %v1737 = vmul.f32 %v1735, %v1734
        %v1738 = vadd.f32 %v1730, %v1736
        %v1739 = vadd.f32 %v1731, %v1737
        %v1740 = vxor.u32 %v1738, 2147483648
        %v1741 = vxor.u32 %v1739, 2147483648
        %v1742 = vmul.f32 %v1740, 1.442695
        %v1743 = vpow.pop %v1742
        %v1744 = vmul.f32 %v1741, 1.442695
        %v1745 = vpow.pop %v1744
        %v1746 = vadd.f32 %v1743, 1.0
        %v1747 = vadd.f32 %v1745, 1.0
        %v1748 = vrcp.pop %v1746
        %v1749 = vmul.f32 1.0, %v1748
        %v1750 = vrcp.pop %v1747
        %v1751 = vmul.f32 1.0, %v1750
        %v1753 = vrot.slane %v1749, 1
        %1754 = vrot.lane.b32.xlu0 %v1753, 16
        %v1755 = vpop.permute.xlu0 %1754
        %v1757 = vrot.slane %v1749, 2
        %1758 = vrot.lane.b32.xlu0 %v1757, 32
        %v1759 = vpop.permute.xlu0 %1758
        %v1761 = vrot.slane %v1749, 3
        %1762 = vrot.lane.b32.xlu0 %v1761, 48
        %v1763 = vpop.permute.xlu0 %1762
        %v1765 = vrot.slane %v1749, 4
        %1766 = vrot.lane.b32.xlu0 %v1765, 64
        %v1767 = vpop.permute.xlu0 %1766
        %v1769 = vrot.slane %v1749, 5
        %1770 = vrot.lane.b32.xlu0 %v1769, 80
        %v1771 = vpop.permute.xlu0 %1770
        %v1773 = vrot.slane %v1749, 6
        %1774 = vrot.lane.b32.xlu0 %v1773, 96
        %v1775 = vpop.permute.xlu0 %1774
        %v1777 = vrot.slane %v1749, 7
        %1778 = vrot.lane.b32.xlu0 %v1777, 112
        %v1779 = vpop.permute.xlu0 %1778
        %v1782 = vrot.slane %v1751, 1
        %1783 = vrot.lane.b32.xlu0 %v1782, 16
        %v1784 = vpop.permute.xlu0 %1783
        %v1786 = vrot.slane %v1751, 2
        %1787 = vrot.lane.b32.xlu0 %v1786, 32
        %v1788 = vpop.permute.xlu0 %1787
        %v1790 = vrot.slane %v1751, 3
        %1791 = vrot.lane.b32.xlu0 %v1790, 48
        %v1792 = vpop.permute.xlu0 %1791
        %v1794 = vrot.slane %v1751, 4
        %1795 = vrot.lane.b32.xlu0 %v1794, 64
        %v1796 = vpop.permute.xlu0 %1795
        %v1798 = vrot.slane %v1751, 5
        %1799 = vrot.lane.b32.xlu0 %v1798, 80
        %v1800 = vpop.permute.xlu0 %1799
        %v1802 = vrot.slane %v1751, 6
        %1803 = vrot.lane.b32.xlu0 %v1802, 96
        %v1804 = vpop.permute.xlu0 %1803
        %v1806 = vrot.slane %v1751, 7
        %1807 = vrot.lane.b32.xlu0 %v1806, 112
        %v1808 = vpop.permute.xlu0 %1807
        %v1810 = vsel %vm785, %v1749, %v1755
        %vm1811 = vcmask 261120
        %v1812 = vsel %vm1811, %v1810, %v1759
        %vm1813 = vcmask 392192
        %v1814 = vsel %vm1813, %v1812, %v1763
        %vm1815 = vcmask 523264
        %v1816 = vsel %vm1815, %v1814, %v1767
        %vm1817 = vcmask 654336
        %v1818 = vsel %vm1817, %v1816, %v1771
        %vm1819 = vcmask 785408
        %v1820 = vsel %vm1819, %v1818, %v1775
        %vm1821 = vcmask 916480
        %v1822 = vsel %vm1821, %v1820, %v1779
        %v1823 = vsel %vm785, %v1751, %v1784
        %v1824 = vsel %vm1811, %v1823, %v1788
        %v1825 = vsel %vm1813, %v1824, %v1792
        %v1826 = vsel %vm1815, %v1825, %v1796
        %v1827 = vsel %vm1817, %v1826, %v1800
        %v1828 = vsel %vm1819, %v1827, %v1804
        %v1829 = vsel %vm1821, %v1828, %v1808
        %v1830 = vlaneseq
        %v1831 = vshrl.u32 %v1830, 7
        %v1832 = vsub.s32 0, %v1831
        %v1833 = vrot.slane %v1822, %v1832
        %v1834 = vlaneseq
        %v1835 = vshrl.u32 %v1834, 7
        %v1836 = vsub.s32 0, %v1835
        %v1837 = vrot.slane %v1829, %v1836
        %v1838 = vmul.f32 %v439, %v1833
        %v1839 = vmul.f32 %v440, %v1837
        %v1840 = vmul.f32 %v441, %v1833
        %v1841 = vmul.f32 %v442, %v1837
        %1842 = vst [vmem:[%s297] sm:$0xff] %v1838
        %1843 = vst [vmem:[%s297 + $0x8] sm:$0xff] %v1839
        %1844 = vst [vmem:[%s297 + $0x10] sm:$0xff] %v1840
        %1845 = vst [vmem:[%s297 + $0x18] sm:$0xff] %v1841
        %s1846 = sand.u32 %s165, 1
        %s1847 = scalar_lea.sflag [#allocation6], %s1846
        %s1848 = sand.u32 %s165, 1
        %s1849 = smul.addr %s1848, 32
        %s1850 = scalar_lea.vmem [#allocation11], %s1849
        // Predicated region
        $region57: #{tpu_custom_call.1} parent=43 // pred_check
          %p1851 = pneg %p175
        $region58: #{tpu_custom_call.1} parent=43 // pred_check_branch
          %1853 = sbr.rel (%p1851) target = $region60
        $region59: #{tpu_custom_call.1} parent=43 // pred_region
          %s1855 = ssub.s32 512, 512
          %1856 = vsyncadd %s1847, %s1855
          %s1857 = smul.addr %s26, 4
          %s1858 = smul.addr %s1857, 128
          %s1859 = scalar_lea.hbm %s6, %s1858
          %s1860 = sshll.u32 %s1850, 4
          %s1861 = int_to_ptr.vmem [resolvable:$true] %s1860
          %1866 = dma.vmem_to_hbm [thread:$0]  %s1861, 512, %s1859, %s1847, 256, 256, 16
        $region60: #{tpu_custom_call.1} parent=43 // pred_fallthru
          _
      $region44: #{tpu_custom_call.1} parent=5 // pred_fallthru
        _
      %p1867 = scmp.le.s32.totalorder 2, %s21
      // Predicated region
      $region61: #{tpu_custom_call.1} parent=5 // pred_check
        %p1868 = pneg %p1867
      $region62: #{tpu_custom_call.1} parent=5 // pred_check_branch
        %1870 = sbr.rel (%p1868) target = $region64
      $region63: #{tpu_custom_call.1} parent=5 // pred_region
        %s1871 = ssub.s32 %s21, 2
        // Predicated region
        $region65: #{tpu_custom_call.1} parent=63 // pred_check
          %p1872 = pneg %p181
        $region66: #{tpu_custom_call.1} parent=63 // pred_check_branch
          %1874 = sbr.rel (%p1872) target = $region68
        $region67: #{tpu_custom_call.1} parent=63 // pred_region
          %s1875 = sand.u32 %s166, 1
          %s1876 = scalar_lea.sflag [#allocation6], %s1875
          %s1877 = sand.u32 %s166, 1
          %s1878 = smul.addr %s1877, 32
          %s1879 = scalar_lea.vmem [#allocation11], %s1878
          %1880 = dma.done %s1876, 512
        $region68: #{tpu_custom_call.1} parent=63 // pred_fallthru
          _
      $region64: #{tpu_custom_call.1} parent=5 // pred_fallthru
        _
    $region6: #{tpu_custom_call.1} parent=1 // loop_footer
      %s25 = sadd.s32 1, %s21
    $region7: #{tpu_custom_call.1} parent=1 // loop_footer_branch
      %20 = sbr.rel target = $region3
    $region8: #{tpu_custom_call.1} parent=1 // loop_exit
      _
    %1881 = vsyncpa [#allocation5], 1
    %s1882 = scalar_lea.sflag [#allocation5], 1
    %1883 = vsyncpa %s1882, 1
    %1884 = vsyncpa [#allocation6], 1
    %s1885 = scalar_lea.sflag [#allocation6], 1
    %1886 = vsyncpa %s1885, 1
    %1887 = vsyncpa [#allocation7], 1
    %s1888 = scalar_lea.sflag [#allocation7], 1
    %1889 = vsyncpa %s1888, 1
    %1890 = vsyncpa [#allocation10], 1

</llo_original>
